<compile_context>
chip_gen: v7x
topology: tpu7x:2x2x1
jax: 0.10.0
libtpu: 0.0.40
codegen_flags: <defaults>
</compile_context>

<pallas_src>
import jax
import jax.numpy as jnp
from jax import lax
from jax.experimental import pallas as pl
from jax.experimental.pallas import tpu as pltpu


def basic_block_kernel(x_ref, w1_ref, b1_ref, w2_ref, b2_ref, o_ref):
    """Fused ReLU -> Conv3x3 -> ReLU -> Conv3x3 for a block of B images.

    x_ref:  (B, H, W*C)    f32 input slab (lane-dense NHWC), VMEM
    w*_ref: (3, W*C, W*C)  bf16 block-tridiagonal per-kh weight matrices
    b*_ref: (1, W*C)       f32 bias, tiled over w
    o_ref:  (B, H, W*C)    f32 output slab
    """
    B, H, WC = x_ref.shape
    M = B * H

    # Per-image row index h for every row of the flattened (B*H, W*C) slab.
    h_idx = lax.broadcasted_iota(jnp.int32, (M, 1), 0) % H
    not_top = h_idx != 0          # rows whose h-1 neighbour is inside the image
    not_bot = h_idx != (H - 1)    # rows whose h+1 neighbour is inside the image

    def conv3x3(a, w_ref, b_ref):
        # a: (M, W*C) bf16 activation (ReLU + cast already applied, once).
        zrow = jnp.zeros((1, WC), dtype=a.dtype)
        # Row shifts for the kh = 0 / kh = 2 taps; mask zeroes rows whose
        # source would cross an image's top/bottom border (also handles the
        # block boundary between batched images).
        a_dn = jnp.where(not_top, jnp.concatenate([zrow, a[:-1, :]], axis=0), 0)
        a_up = jnp.where(not_bot, jnp.concatenate([a[1:, :], zrow], axis=0), 0)

        # 3 wide MXU matmuls (K = N = W*C); f32 accumulation.
        acc = jnp.dot(a_dn, w_ref[0], preferred_element_type=jnp.float32)
        acc = acc + jnp.dot(a, w_ref[1], preferred_element_type=jnp.float32)
        acc = acc + jnp.dot(a_up, w_ref[2], preferred_element_type=jnp.float32)
        return acc + b_ref[...]                     # (M, W*C) f32

    x = x_ref[...].reshape(M, WC)                   # free reshape (H % 8 == 0)
    a1 = jnp.maximum(x, 0.0).astype(jnp.bfloat16)   # relu1 + single bf16 cast
    y1 = conv3x3(a1, w1_ref, b1_ref)                # conv1
    a2 = jnp.maximum(y1, 0.0).astype(jnp.bfloat16)  # relu2 + single bf16 cast
    y2 = conv3x3(a2, w2_ref, b2_ref)                # conv2
    o_ref[...] = y2.reshape(B, H, WC)


def basic_block_lane_dense(x, w1, b1, w2, b2):
    """x: (N, H, W*C) f32. Runs the fused block in a single pallas_call."""
    N, H, WC = x.shape
    # Batch images per step to amortize per-step overhead, but keep >= 2 grid
    # steps when N >= 2 so "parallel" can shard across v7x's two TensorCores.
    B = max(1, min(8, pl.cdiv(N, 2)))
    G = pl.cdiv(N, B)
    Np = G * B
    if Np != N:
        x = jnp.concatenate([x, jnp.zeros((Np - N, H, WC), x.dtype)], axis=0)

    out = pl.pallas_call(
        basic_block_kernel,
        out_shape=jax.ShapeDtypeStruct((Np, H, WC), jnp.float32),
        grid_spec=pltpu.PrefetchScalarGridSpec(
            num_scalar_prefetch=0,
            grid=(G,),
            in_specs=[
                pl.BlockSpec((B, H, WC), lambda g: (g, 0, 0)),      # x
                pl.BlockSpec((3, WC, WC), lambda g: (0, 0, 0)),     # w1 (banded)
                pl.BlockSpec((1, WC), lambda g: (0, 0)),            # b1 (tiled)
                pl.BlockSpec((3, WC, WC), lambda g: (0, 0, 0)),     # w2 (banded)
                pl.BlockSpec((1, WC), lambda g: (0, 0)),            # b2 (tiled)
            ],
            out_specs=pl.BlockSpec((B, H, WC), lambda g: (g, 0, 0)),
        ),
        compiler_params=pltpu.CompilerParams(
            dimension_semantics=("parallel",)),       # batch axis -> 2 TCs on v7x
    )(x, w1, b1, w2, b2)
    return out[:N] if Np != N else out


def pack_params(params, W):
    """One-time weight prep: HWIO conv weights -> block-tridiagonal matrices.

    For each kh, big[kh] is a (W*C, W*C) matrix such that
        out_row(h) += act_row(h + kh - 1) @ big[kh]
    performs all three kw taps (including W-direction zero padding) in one
    matmul.  Biases are tiled over w to match the (.., W*C) output layout.
    """
    C = params["b1"].shape[0]

    def banded(w_hwio):                               # (3, 3, C, C) HWIO
        big = jnp.zeros((3, W, C, W, C), jnp.float32)
        for kw in range(3):
            for wo in range(W):
                wi = wo + kw - 1
                if 0 <= wi < W:
                    big = big.at[:, wi, :, wo, :].set(w_hwio[:, kw])
        return big.reshape(3, W * C, W * C).astype(jnp.bfloat16)

    def tiled_bias(b):
        return jnp.tile(b, W).reshape(1, W * C).astype(jnp.float32)

    return dict(w1=banded(params["w1"]), b1=tiled_bias(params["b1"]),
                w2=banded(params["w2"]), b2=tiled_bias(params["b2"]))


def init_params(key, cin=64, cout=64, k=3):
    """Synthetic init mimicking PyTorch Conv2d default, stored in HWIO."""
    k1, k2, k3, k4 = jax.random.split(key, 4)
    fan_in = cin * k * k
    bound = 1.0 / jnp.sqrt(fan_in)
    w1 = jax.random.uniform(k1, (k, k, cin, cout), jnp.float32, -bound, bound)
    b1 = jax.random.uniform(k2, (cout,), jnp.float32, -bound, bound)
    w2 = jax.random.uniform(k3, (k, k, cin, cout), jnp.float32, -bound, bound)
    b2 = jax.random.uniform(k4, (cout,), jnp.float32, -bound, bound)
    return dict(w1=w1, b1=b1, w2=w2, b2=b2)


@jax.jit
def basic_block_forward(x_nchw, packed):
    """Matches BasicBlock.forward: relu -> conv1 -> relu -> conv2 (NCHW in/out)."""
    N, C, H, W = x_nchw.shape
    x = jnp.transpose(x_nchw, (0, 2, 3, 1)).reshape(N, H, W * C)  # lane-dense
    y = basic_block_lane_dense(x, packed["w1"], packed["b1"],
                               packed["w2"], packed["b2"])
    return jnp.transpose(y.reshape(N, H, W, C), (0, 3, 1, 2))


def reference_forward(x_nchw, params):
    """Pure-JAX f32 reference (lax.conv) for correctness checking."""
    x = jnp.transpose(x_nchw, (0, 2, 3, 1))
    dn = lax.conv_dimension_numbers(x.shape, params["w1"].shape,
                                    ("NHWC", "HWIO", "NHWC"))
    y = jnp.maximum(x, 0.0)
    y = lax.conv_general_dilated(y, params["w1"], (1, 1), "SAME",
                                 dimension_numbers=dn) + params["b1"]
    y = jnp.maximum(y, 0.0)
    y = lax.conv_general_dilated(y, params["w2"], (1, 1), "SAME",
                                 dimension_numbers=dn) + params["b2"]
    return jnp.transpose(y, (0, 3, 1, 2))


if __name__ == "__main__":
    key = jax.random.PRNGKey(0)
    kx, kp = jax.random.split(key)

    # Small shapes consistent with the module: Conv2d(64, 64) forces C=64.
    # N=4 exercises both multi-image-per-step batching and a 2-step grid.
    N, C, H, W = 4, 64, 8, 8
    x = jax.random.normal(kx, (N, C, H, W), jnp.float32)
    params = init_params(kp)
    packed = pack_params(params, W)          # one-time weight restructuring

    out = jax.block_until_ready(basic_block_forward(x, packed))

    ref = reference_forward(x, params)
    assert out.shape == (N, C, H, W)
    # Tolerance covers bf16 MXU operands (f32 accumulation) vs the f32 reference.
    assert jnp.allclose(out, ref, atol=2e-2, rtol=2e-2), "mismatch vs JAX reference"

    print("KERNEL_OK")
</pallas_src>

<mosaic_0001>
module attributes {stable_mosaic.version = 11 : i64} {
  func.func @basic_block_kernel(%arg0: i32, %arg1: memref<2x8x512xf32, #tpu.memory_space<vmem>>, %arg2: memref<3x512x512xbf16, #tpu.memory_space<vmem>>, %arg3: memref<1x512xf32, #tpu.memory_space<vmem>>, %arg4: memref<3x512x512xbf16, #tpu.memory_space<vmem>>, %arg5: memref<1x512xf32, #tpu.memory_space<vmem>>, %arg6: memref<2x8x512xf32, #tpu.memory_space<vmem>>) attributes {dimension_semantics = [#tpu.dimension_semantics<parallel>], iteration_bounds = array<i64: 2>, scalar_prefetch = 0 : i64, scratch_operands = 0 : i64, tpu.core_type = #tpu.core_type<tc>, window_params = [{transform_indices = @transform_0, window_bounds = array<i64: 2, 8, 512>}, {pipeline_mode = #tpu.pipeline_mode<synchronous>, transform_indices = @transform_1, window_bounds = array<i64: 3, 512, 512>}, {pipeline_mode = #tpu.pipeline_mode<synchronous>, transform_indices = @transform_2, window_bounds = array<i64: 1, 512>}, {pipeline_mode = #tpu.pipeline_mode<synchronous>, transform_indices = @transform_3, window_bounds = array<i64: 3, 512, 512>}, {pipeline_mode = #tpu.pipeline_mode<synchronous>, transform_indices = @transform_4, window_bounds = array<i64: 1, 512>}, {transform_indices = @transform_5, window_bounds = array<i64: 2, 8, 512>}]} {
    %0 = tpu.iota {dimensions = array<i32: 0>} : vector<16x1xi32>
    %c8_i32 = arith.constant 8 : i32
    %c0_i32 = arith.constant 0 : i32
    %1 = arith.cmpi eq, %c8_i32, %c0_i32 : i32
    %c1_i32 = arith.constant 1 : i32
    %2 = arith.select %1, %c1_i32, %c8_i32 : i32
    %3 = vector.broadcast %2 : i32 to vector<16x1xi32>
    %4 = arith.remsi %0, %3 : vector<16x1xi32>
    %c0_i32_0 = arith.constant 0 : i32
    %5 = vector.broadcast %c0_i32_0 : i32 to vector<16x1xi32>
    %6 = arith.cmpi ne, %4, %5 : vector<16x1xi32>
    %c0_i32_1 = arith.constant 0 : i32
    %7 = vector.broadcast %c0_i32_1 : i32 to vector<16x1xi32>
    %8 = arith.cmpi slt, %4, %7 : vector<16x1xi32>
    %c0_i32_2 = arith.constant 0 : i32
    %9 = arith.cmpi slt, %2, %c0_i32_2 : i32
    %10 = vector.broadcast %9 : i1 to vector<16x1xi1>
    %11 = vector.broadcast %10 : vector<16x1xi1> to vector<16x1xi1>
    %12 = arith.xori %8, %11 : vector<16x1xi1>
    %13 = arith.andi %12, %6 : vector<16x1xi1>
    %14 = vector.broadcast %2 : i32 to vector<16x1xi32>
    %15 = arith.addi %4, %14 : vector<16x1xi32>
    %16 = arith.select %13, %15, %4 : vector<16x1xi1>, vector<16x1xi32>
    %c0_i32_3 = arith.constant 0 : i32
    %17 = vector.broadcast %c0_i32_3 : i32 to vector<16x1xi32>
    %18 = arith.cmpi ne, %16, %17 : vector<16x1xi32>
    %c7_i32 = arith.constant 7 : i32
    %19 = vector.broadcast %c7_i32 : i32 to vector<16x1xi32>
    %20 = arith.cmpi ne, %16, %19 : vector<16x1xi32>
    %c0 = arith.constant 0 : index
    %c0_4 = arith.constant 0 : index
    %c0_5 = arith.constant 0 : index
    %21 = vector.load %arg1[%c0, %c0_4, %c0_5] : memref<2x8x512xf32, #tpu.memory_space<vmem>>, vector<2x8x512xf32>
    %22 = vector.shape_cast %21 : vector<2x8x512xf32> to vector<16x512xf32>
    %cst = arith.constant 0.000000e+00 : f32
    %23 = vector.broadcast %cst : f32 to vector<16x512xf32>
    %24 = arith.maximumf %22, %23 : vector<16x512xf32>
    %25 = arith.truncf %24 : vector<16x512xf32> to vector<16x512xbf16>
    %cst_6 = arith.constant 0.000000e+00 : bf16
    %26 = vector.broadcast %cst_6 : bf16 to vector<1x512xbf16>
    %27 = vector.extract_strided_slice %25 {offsets = [0, 0], sizes = [15, 512], strides = [1, 1]} : vector<16x512xbf16> to vector<15x512xbf16>
    %28 = tpu.concatenate %26, %27 in 0 : vector<1x512xbf16>, vector<15x512xbf16> -> vector<16x512xbf16>
    %c0_i32_7 = arith.constant 0 : i32
    %29 = arith.sitofp %c0_i32_7 : i32 to bf16
    %30 = vector.shape_cast %18 : vector<16x1xi1> to vector<16x1xi1>
    %31 = vector.broadcast %30 : vector<16x1xi1> to vector<16x512xi1>
    %32 = vector.broadcast %29 : bf16 to vector<16x512xbf16>
    %33 = arith.select %31, %28, %32 : vector<16x512xi1>, vector<16x512xbf16>
    %34 = vector.extract_strided_slice %25 {offsets = [1, 0], sizes = [15, 512], strides = [1, 1]} : vector<16x512xbf16> to vector<15x512xbf16>
    %35 = tpu.concatenate %34, %26 in 0 : vector<15x512xbf16>, vector<1x512xbf16> -> vector<16x512xbf16>
    %c0_i32_8 = arith.constant 0 : i32
    %36 = arith.sitofp %c0_i32_8 : i32 to bf16
    %37 = vector.shape_cast %20 : vector<16x1xi1> to vector<16x1xi1>
    %38 = vector.broadcast %37 : vector<16x1xi1> to vector<16x512xi1>
    %39 = vector.broadcast %36 : bf16 to vector<16x512xbf16>
    %40 = arith.select %38, %35, %39 : vector<16x512xi1>, vector<16x512xbf16>
    %c0_9 = arith.constant 0 : index
    %c0_10 = arith.constant 0 : index
    %c0_11 = arith.constant 0 : index
    %41 = vector.load %arg2[%c0_9, %c0_10, %c0_11] : memref<3x512x512xbf16, #tpu.memory_space<vmem>>, vector<1x512x512xbf16>
    %42 = vector.shape_cast %41 : vector<1x512x512xbf16> to vector<512x512xbf16>
    %cst_12 = arith.constant dense<0.000000e+00> : vector<16x512xf32>
    %43 = tpu.matmul %33, %42, %cst_12 {dimension_numbers = #tpu.dot_dimension_numbers<[1], [0], [0], [1], [0, 0, 1, 1], [], []>} : vector<16x512xbf16>, vector<512x512xbf16>, vector<16x512xf32> -> vector<16x512xf32>
    %c1 = arith.constant 1 : index
    %c0_13 = arith.constant 0 : index
    %c0_14 = arith.constant 0 : index
    %44 = vector.load %arg2[%c1, %c0_13, %c0_14] : memref<3x512x512xbf16, #tpu.memory_space<vmem>>, vector<1x512x512xbf16>
    %45 = vector.shape_cast %44 : vector<1x512x512xbf16> to vector<512x512xbf16>
    %cst_15 = arith.constant dense<0.000000e+00> : vector<16x512xf32>
    %46 = tpu.matmul %25, %45, %cst_15 {dimension_numbers = #tpu.dot_dimension_numbers<[1], [0], [0], [1], [0, 0, 1, 1], [], []>} : vector<16x512xbf16>, vector<512x512xbf16>, vector<16x512xf32> -> vector<16x512xf32>
    %47 = arith.addf %43, %46 : vector<16x512xf32>
    %c2 = arith.constant 2 : index
    %c0_16 = arith.constant 0 : index
    %c0_17 = arith.constant 0 : index
    %48 = vector.load %arg2[%c2, %c0_16, %c0_17] : memref<3x512x512xbf16, #tpu.memory_space<vmem>>, vector<1x512x512xbf16>
    %49 = vector.shape_cast %48 : vector<1x512x512xbf16> to vector<512x512xbf16>
    %cst_18 = arith.constant dense<0.000000e+00> : vector<16x512xf32>
    %50 = tpu.matmul %40, %49, %cst_18 {dimension_numbers = #tpu.dot_dimension_numbers<[1], [0], [0], [1], [0, 0, 1, 1], [], []>} : vector<16x512xbf16>, vector<512x512xbf16>, vector<16x512xf32> -> vector<16x512xf32>
    %51 = arith.addf %47, %50 : vector<16x512xf32>
    %c0_19 = arith.constant 0 : index
    %c0_20 = arith.constant 0 : index
    %52 = vector.load %arg3[%c0_19, %c0_20] : memref<1x512xf32, #tpu.memory_space<vmem>>, vector<1x512xf32>
    %53 = vector.broadcast %52 : vector<1x512xf32> to vector<16x512xf32>
    %54 = arith.addf %51, %53 : vector<16x512xf32>
    %cst_21 = arith.constant 0.000000e+00 : f32
    %55 = vector.broadcast %cst_21 : f32 to vector<16x512xf32>
    %56 = arith.maximumf %54, %55 : vector<16x512xf32>
    %57 = arith.truncf %56 : vector<16x512xf32> to vector<16x512xbf16>
    %cst_22 = arith.constant 0.000000e+00 : bf16
    %58 = vector.broadcast %cst_22 : bf16 to vector<1x512xbf16>
    %59 = vector.extract_strided_slice %57 {offsets = [0, 0], sizes = [15, 512], strides = [1, 1]} : vector<16x512xbf16> to vector<15x512xbf16>
    %60 = tpu.concatenate %58, %59 in 0 : vector<1x512xbf16>, vector<15x512xbf16> -> vector<16x512xbf16>
    %c0_i32_23 = arith.constant 0 : i32
    %61 = arith.sitofp %c0_i32_23 : i32 to bf16
    %62 = vector.shape_cast %18 : vector<16x1xi1> to vector<16x1xi1>
    %63 = vector.broadcast %62 : vector<16x1xi1> to vector<16x512xi1>
    %64 = vector.broadcast %61 : bf16 to vector<16x512xbf16>
    %65 = arith.select %63, %60, %64 : vector<16x512xi1>, vector<16x512xbf16>
    %66 = vector.extract_strided_slice %57 {offsets = [1, 0], sizes = [15, 512], strides = [1, 1]} : vector<16x512xbf16> to vector<15x512xbf16>
    %67 = tpu.concatenate %66, %58 in 0 : vector<15x512xbf16>, vector<1x512xbf16> -> vector<16x512xbf16>
    %c0_i32_24 = arith.constant 0 : i32
    %68 = arith.sitofp %c0_i32_24 : i32 to bf16
    %69 = vector.shape_cast %20 : vector<16x1xi1> to vector<16x1xi1>
    %70 = vector.broadcast %69 : vector<16x1xi1> to vector<16x512xi1>
    %71 = vector.broadcast %68 : bf16 to vector<16x512xbf16>
    %72 = arith.select %70, %67, %71 : vector<16x512xi1>, vector<16x512xbf16>
    %c0_25 = arith.constant 0 : index
    %c0_26 = arith.constant 0 : index
    %c0_27 = arith.constant 0 : index
    %73 = vector.load %arg4[%c0_25, %c0_26, %c0_27] : memref<3x512x512xbf16, #tpu.memory_space<vmem>>, vector<1x512x512xbf16>
    %74 = vector.shape_cast %73 : vector<1x512x512xbf16> to vector<512x512xbf16>
    %cst_28 = arith.constant dense<0.000000e+00> : vector<16x512xf32>
    %75 = tpu.matmul %65, %74, %cst_28 {dimension_numbers = #tpu.dot_dimension_numbers<[1], [0], [0], [1], [0, 0, 1, 1], [], []>} : vector<16x512xbf16>, vector<512x512xbf16>, vector<16x512xf32> -> vector<16x512xf32>
    %c1_29 = arith.constant 1 : index
    %c0_30 = arith.constant 0 : index
    %c0_31 = arith.constant 0 : index
    %76 = vector.load %arg4[%c1_29, %c0_30, %c0_31] : memref<3x512x512xbf16, #tpu.memory_space<vmem>>, vector<1x512x512xbf16>
    %77 = vector.shape_cast %76 : vector<1x512x512xbf16> to vector<512x512xbf16>
    %cst_32 = arith.constant dense<0.000000e+00> : vector<16x512xf32>
    %78 = tpu.matmul %57, %77, %cst_32 {dimension_numbers = #tpu.dot_dimension_numbers<[1], [0], [0], [1], [0, 0, 1, 1], [], []>} : vector<16x512xbf16>, vector<512x512xbf16>, vector<16x512xf32> -> vector<16x512xf32>
    %79 = arith.addf %75, %78 : vector<16x512xf32>
    %c2_33 = arith.constant 2 : index
    %c0_34 = arith.constant 0 : index
    %c0_35 = arith.constant 0 : index
    %80 = vector.load %arg4[%c2_33, %c0_34, %c0_35] : memref<3x512x512xbf16, #tpu.memory_space<vmem>>, vector<1x512x512xbf16>
    %81 = vector.shape_cast %80 : vector<1x512x512xbf16> to vector<512x512xbf16>
    %cst_36 = arith.constant dense<0.000000e+00> : vector<16x512xf32>
    %82 = tpu.matmul %72, %81, %cst_36 {dimension_numbers = #tpu.dot_dimension_numbers<[1], [0], [0], [1], [0, 0, 1, 1], [], []>} : vector<16x512xbf16>, vector<512x512xbf16>, vector<16x512xf32> -> vector<16x512xf32>
    %83 = arith.addf %79, %82 : vector<16x512xf32>
    %c0_37 = arith.constant 0 : index
    %c0_38 = arith.constant 0 : index
    %84 = vector.load %arg5[%c0_37, %c0_38] : memref<1x512xf32, #tpu.memory_space<vmem>>, vector<1x512xf32>
    %85 = vector.broadcast %84 : vector<1x512xf32> to vector<16x512xf32>
    %86 = arith.addf %83, %85 : vector<16x512xf32>
    %87 = vector.shape_cast %86 : vector<16x512xf32> to vector<2x8x512xf32>
    %c0_39 = arith.constant 0 : index
    %c0_40 = arith.constant 0 : index
    %c0_41 = arith.constant 0 : index
    %88 = vector.load %arg6[%c0_39, %c0_40, %c0_41] : memref<2x8x512xf32, #tpu.memory_space<vmem>>, vector<2x8x512xf32>
    tpu.vector_store %arg6[%c0_39, %c0_40, %c0_41], %87 {strides = array<i32>} : memref<2x8x512xf32, #tpu.memory_space<vmem>>, vector<2x8x512xf32>,
    return
  }
  func.func @transform_0(%arg0: i32) -> (i32, i32, i32) {
    %c0_i32 = arith.constant 0 : i32
    %c0_i32_0 = arith.constant 0 : i32
    %c0_i32_1 = arith.constant 0 : i32
    return %arg0, %c0_i32, %c0_i32_0 : i32, i32, i32
  }
  func.func @transform_1(%arg0: i32) -> (i32, i32, i32) {
    %c0_i32 = arith.constant 0 : i32
    %c0_i32_0 = arith.constant 0 : i32
    %c0_i32_1 = arith.constant 0 : i32
    %c0_i32_2 = arith.constant 0 : i32
    return %c0_i32, %c0_i32_0, %c0_i32_1 : i32, i32, i32
  }
  func.func @transform_2(%arg0: i32) -> (i32, i32) {
    %c0_i32 = arith.constant 0 : i32
    %c0_i32_0 = arith.constant 0 : i32
    %c0_i32_1 = arith.constant 0 : i32
    return %c0_i32, %c0_i32_0 : i32, i32
  }
  func.func @transform_3(%arg0: i32) -> (i32, i32, i32) {
    %c0_i32 = arith.constant 0 : i32
    %c0_i32_0 = arith.constant 0 : i32
    %c0_i32_1 = arith.constant 0 : i32
    %c0_i32_2 = arith.constant 0 : i32
    return %c0_i32, %c0_i32_0, %c0_i32_1 : i32, i32, i32
  }
  func.func @transform_4(%arg0: i32) -> (i32, i32) {
    %c0_i32 = arith.constant 0 : i32
    %c0_i32_0 = arith.constant 0 : i32
    %c0_i32_1 = arith.constant 0 : i32
    return %c0_i32, %c0_i32_0 : i32, i32
  }
  func.func @transform_5(%arg0: i32) -> (i32, i32, i32) {
    %c0_i32 = arith.constant 0 : i32
    %c0_i32_0 = arith.constant 0 : i32
    %c0_i32_1 = arith.constant 0 : i32
    return %arg0, %c0_i32, %c0_i32_0 : i32, i32, i32
  }
}

</mosaic_0001>

<llo_original>
// kernel: basic_block_forward.1
$region0: #{basic_block_forward.1}
  #allocation0 [shape = 'u32[]', space=smem, size = 0x4, offset = 0x4, fixed_abs, tag = 'smem constant byte address 0x4 - core index']
  #allocation1 [shape = 'u32[144,128]{1,0:T(1,128)}', space=vmem, size = 0x12000, scoped, tag = 'internal scratch']
  %s0 = inlined_call_operand.vmem [shape: f32[4,8,512], index: 0, kind: input, shape index: {}]
  %s1 = inlined_call_operand.hbm [shape: bf16[3,512,512], index: 1, kind: input, shape index: {}]
  %s2 = inlined_call_operand.hbm [shape: f32[1,512], index: 2, kind: input, shape index: {}]
  %s3 = inlined_call_operand.hbm [shape: bf16[3,512,512], index: 3, kind: input, shape index: {}]
  %s4 = inlined_call_operand.hbm [shape: f32[1,512], index: 4, kind: input, shape index: {}]
  %s5 = inlined_call_operand.vmem [shape: f32[4,8,512], index: 5, kind: output, shape index: {}]
  %s6 = sld [smem:[#allocation0]]
  $region69: #{basic_block_forward.1} parent=0
    _
  %s8 = ssub.s32 1, %s6
  %s9 = scalar_select 0, %s8, %s6
  $region1: #{basic_block_forward.1} parent=0
    #allocation2 [shape = 'u8[1572864]{0}', space=vmem, size = 0x180000, scoped, tag = 'input window, operand 1, single buffered']
    #allocation3 [shape = 's32[2]{0}', space=sflag, size = 0x8, scoped, tag = 'scoped memory for basic_block_forward.1']
    #allocation4 [shape = 'u8[2048]{0}', space=vmem, size = 0x800, scoped, tag = 'input window, operand 2, single buffered']
    #allocation5 [shape = 's32[1]{0}', space=sflag, size = 0x4, scoped, tag = 'scoped memory for basic_block_forward.1']
    #allocation6 [shape = 'u8[1572864]{0}', space=vmem, size = 0x180000, scoped, tag = 'input window, operand 3, single buffered']
    #allocation7 [shape = 'u8[2048]{0}', space=vmem, size = 0x800, scoped, tag = 'input window, operand 4, single buffered']
    #allocation8 [shape = 's32[1]{0}', space=sflag, size = 0x4, scoped, tag = 'scoped memory for basic_block_forward.1']
    %10 = vsyncpa [#allocation3], 0
    %11 = vsyncpa [#allocation5], 0
    %12 = vsyncpa [#allocation8], 0
    loop: start=0, step=1, limit=4
    $region2: #{basic_block_forward.1} parent=1 // loop_pre_header
      _
    $region3: #{basic_block_forward.1} parent=1 // loop_header
      %s14 = sphi 0, %s18
      %p15 = scmp.ge.s32.totalorder %s14, 4
      %s24 = sphi 0, %s26
      %s27 = sphi 0, %s24
      %s28 = sphi 0, %s27
      %s44 = sphi 0, %s28
      %s48 = sphi 0, %s48
      %s50 = sphi 0, %s48
      %s51 = sphi 0, %s50
      %s65 = sphi 0, %s51
      %s69 = sphi 0, %s69
      %s71 = sphi 0, %s69
      %s72 = sphi 0, %s71
      %s86 = sphi 0, %s72
      %s90 = sphi 0, %s90
      %s92 = sphi 0, %s90
      %s93 = sphi 0, %s92
      %s107 = sphi 0, %s93
      %s111 = sphi 0, %s111
      %s113 = sphi 0, %s111
      %s114 = sphi 0, %s113
      %s128 = sphi 0, %s114
      %s134 = sphi 0, %s136
      %s137 = sphi 0, %s134
      %s138 = sphi 0, %s137
      %s154 = sphi 0, %s138
    $region4: #{basic_block_forward.1} parent=1 // loop_header_branch
      %17 = sbr.rel (%p15) target = $region8
    $region5: #{basic_block_forward.1} parent=1 // loop_body
      %s19 = ssub.s32 %s14, 1
      %s20 = ssub.s32 %s14, 2
      %s21 = sadd.s32 %s14, 1
      %s22 = ssub.s32 %s14, %s21
      %p23 = scmp.eq.s32.totalorder %s22, 0
      %s25 = sadd.s32 %s24, 1
      %s26 = scalar_select %p23, %s24, %s25
      %p29 = pneg %p23
      %p30 = scmp.eq.s32.totalorder %s14, 1
      %p31 = por %p29, %p30
      %p32 = scmp.ne.s32.totalorder %s24, %s27
      %p33 = scmp.eq.s32.totalorder %s14, 0
      %p34 = por %p32, %p33
      %p35 = scmp.ne.s32.totalorder %s24, %s27
      %p36 = scmp.eq.s32.totalorder %s19, 1
      %p37 = por %p35, %p36
      %p38 = scmp.ne.s32.totalorder %s27, %s28
      %p39 = scmp.eq.s32.totalorder %s19, 0
      %p40 = por %p38, %p39
      %p41 = scmp.ne.s32.totalorder %s27, %s28
      %p42 = scmp.eq.s32.totalorder %s20, 1
      %p43 = por %p41, %p42
      %p45 = scmp.ne.s32.totalorder %s28, %s44
      %p46 = scmp.eq.s32.totalorder %s20, 0
      %p47 = por %p45, %p46
      %s49 = sadd.s32 %s48, 1
      %p52 = scmp.eq.s32.totalorder %s14, 1
      %p53 = scmp.ne.s32.totalorder %s48, %s50
      %p54 = scmp.eq.s32.totalorder %s14, 0
      %p55 = por %p53, %p54
      %p56 = scmp.ne.s32.totalorder %s48, %s50
      %p57 = scmp.eq.s32.totalorder %s19, 1
      %p58 = por %p56, %p57
      %p59 = scmp.ne.s32.totalorder %s50, %s51
      %p60 = scmp.eq.s32.totalorder %s19, 0
      %p61 = por %p59, %p60
      %p62 = scmp.ne.s32.totalorder %s50, %s51
      %p63 = scmp.eq.s32.totalorder %s20, 1
      %p64 = por %p62, %p63
      %p66 = scmp.ne.s32.totalorder %s51, %s65
      %p67 = scmp.eq.s32.totalorder %s20, 0
      %p68 = por %p66, %p67
      %s70 = sadd.s32 %s69, 1
      %p73 = scmp.eq.s32.totalorder %s14, 1
      %p74 = scmp.ne.s32.totalorder %s69, %s71
      %p75 = scmp.eq.s32.totalorder %s14, 0
      %p76 = por %p74, %p75
      %p77 = scmp.ne.s32.totalorder %s69, %s71
      %p78 = scmp.eq.s32.totalorder %s19, 1
      %p79 = por %p77, %p78
      %p80 = scmp.ne.s32.totalorder %s71, %s72
      %p81 = scmp.eq.s32.totalorder %s19, 0
      %p82 = por %p80, %p81
      %p83 = scmp.ne.s32.totalorder %s71, %s72
      %p84 = scmp.eq.s32.totalorder %s20, 1
      %p85 = por %p83, %p84
      %p87 = scmp.ne.s32.totalorder %s72, %s86
      %p88 = scmp.eq.s32.totalorder %s20, 0
      %p89 = por %p87, %p88
      %s91 = sadd.s32 %s90, 1
      %p94 = scmp.eq.s32.totalorder %s14, 1
      %p95 = scmp.ne.s32.totalorder %s90, %s92
      %p96 = scmp.eq.s32.totalorder %s14, 0
      %p97 = por %p95, %p96
      %p98 = scmp.ne.s32.totalorder %s90, %s92
      %p99 = scmp.eq.s32.totalorder %s19, 1
      %p100 = por %p98, %p99
      %p101 = scmp.ne.s32.totalorder %s92, %s93
      %p102 = scmp.eq.s32.totalorder %s19, 0
      %p103 = por %p101, %p102
      %p104 = scmp.ne.s32.totalorder %s92, %s93
      %p105 = scmp.eq.s32.totalorder %s20, 1
      %p106 = por %p104, %p105
      %p108 = scmp.ne.s32.totalorder %s93, %s107
      %p109 = scmp.eq.s32.totalorder %s20, 0
      %p110 = por %p108, %p109
      %s112 = sadd.s32 %s111, 1
      %p115 = scmp.eq.s32.totalorder %s14, 1
      %p116 = scmp.ne.s32.totalorder %s111, %s113
      %p117 = scmp.eq.s32.totalorder %s14, 0
      %p118 = por %p116, %p117
      %p119 = scmp.ne.s32.totalorder %s111, %s113
      %p120 = scmp.eq.s32.totalorder %s19, 1
      %p121 = por %p119, %p120
      %p122 = scmp.ne.s32.totalorder %s113, %s114
      %p123 = scmp.eq.s32.totalorder %s19, 0
      %p124 = por %p122, %p123
      %p125 = scmp.ne.s32.totalorder %s113, %s114
      %p126 = scmp.eq.s32.totalorder %s20, 1
      %p127 = por %p125, %p126
      %p129 = scmp.ne.s32.totalorder %s114, %s128
      %p130 = scmp.eq.s32.totalorder %s20, 0
      %p131 = por %p129, %p130
      %s132 = ssub.s32 %s14, %s21
      %p133 = scmp.eq.s32.totalorder %s132, 0
      %s135 = sadd.s32 %s134, 1
      %s136 = scalar_select %p133, %s134, %s135
      %p139 = pneg %p133
      %p140 = scmp.eq.s32.totalorder %s14, 1
      %p141 = por %p139, %p140
      %p142 = scmp.ne.s32.totalorder %s134, %s137
      %p143 = scmp.eq.s32.totalorder %s14, 0
      %p144 = por %p142, %p143
      %p145 = scmp.ne.s32.totalorder %s134, %s137
      %p146 = scmp.eq.s32.totalorder %s19, 1
      %p147 = por %p145, %p146
      %p148 = scmp.ne.s32.totalorder %s137, %s138
      %p149 = scmp.eq.s32.totalorder %s19, 0
      %p150 = por %p148, %p149
      %p151 = scmp.ne.s32.totalorder %s137, %s138
      %p152 = scmp.eq.s32.totalorder %s20, 1
      %p153 = por %p151, %p152
      %p155 = scmp.ne.s32.totalorder %s138, %s154
      %p156 = scmp.eq.s32.totalorder %s20, 0
      %p157 = por %p155, %p156
      %p158 = scmp.le.s32.totalorder 1, %s14
      %p159 = scmp.lt.s32.totalorder %s14, 3
      %p160 = pnand %p158, %p159
      %p161 = pneg %p160
      // Predicated region
      $region9: #{basic_block_forward.1} parent=5 // pred_check
        _
      $region10: #{basic_block_forward.1} parent=5 // pred_check_branch
        %163 = sbr.rel (%p160) target = $region12
      $region11: #{basic_block_forward.1} parent=5 // pred_region
        %s164 = ssub.s32 %s14, 1
        // Predicated region
        $region13: #{basic_block_forward.1} parent=11 // pred_check
          %p165 = pneg %p61
        $region14: #{basic_block_forward.1} parent=11 // pred_check_branch
          %167 = sbr.rel (%p165) target = $region16
        $region15: #{basic_block_forward.1} parent=11 // pred_region
          %s169 = ssub.s32 49152, 49152
          %170 = vsyncadd [#allocation3], %s169
          %s171 = sshll.u32 [#allocation2], 4
          %s172 = int_to_ptr.vmem [resolvable:$true] %s171
          %177 = dma.hbm_to_vmem [thread:$0]  %s1, 49152, %s172, [#allocation3], 256, 256, 16
        $region16: #{basic_block_forward.1} parent=11 // pred_fallthru
          _
        // Predicated region
        $region17: #{basic_block_forward.1} parent=11 // pred_check
          %p178 = pneg %p82
        $region18: #{basic_block_forward.1} parent=11 // pred_check_branch
          %180 = sbr.rel (%p178) target = $region20
        $region19: #{basic_block_forward.1} parent=11 // pred_region
          %s182 = ssub.s32 64, 64
          %183 = vsyncadd [#allocation5], %s182
          %s185 = sshll.u32 [#allocation4], 4
          %s186 = int_to_ptr.vmem [resolvable:$true] %s185
          %188 = dma.hbm_to_vmem [thread:$0]  %s2, 64, %s186, [#allocation5]
        $region20: #{basic_block_forward.1} parent=11 // pred_fallthru
          _
        // Predicated region
        $region21: #{basic_block_forward.1} parent=11 // pred_check
          %p189 = pneg %p103
        $region22: #{basic_block_forward.1} parent=11 // pred_check_branch
          %191 = sbr.rel (%p189) target = $region24
        $region23: #{basic_block_forward.1} parent=11 // pred_region
          %s193 = ssub.s32 49152, 49152
          %194 = vsyncadd [#allocation5], %s193
          %s195 = sshll.u32 [#allocation6], 4
          %s196 = int_to_ptr.vmem [resolvable:$true] %s195
          %201 = dma.hbm_to_vmem [thread:$0]  %s3, 49152, %s196, [#allocation5], 256, 256, 16
        $region24: #{basic_block_forward.1} parent=11 // pred_fallthru
          _
        // Predicated region
        $region25: #{basic_block_forward.1} parent=11 // pred_check
          %p202 = pneg %p124
        $region26: #{basic_block_forward.1} parent=11 // pred_check_branch
          %204 = sbr.rel (%p202) target = $region28
        $region27: #{basic_block_forward.1} parent=11 // pred_region
          %s206 = ssub.s32 64, 64
          %207 = vsyncadd [#allocation8], %s206
          %s209 = sshll.u32 [#allocation7], 4
          %s210 = int_to_ptr.vmem [resolvable:$true] %s209
          %212 = dma.hbm_to_vmem [thread:$0]  %s4, 64, %s210, [#allocation8]
        $region28: #{basic_block_forward.1} parent=11 // pred_fallthru
          _
      $region12: #{basic_block_forward.1} parent=5 // pred_fallthru
        _
      %p213 = scmp.lt.s32.totalorder %s14, 2
      // Predicated region
      $region29: #{basic_block_forward.1} parent=5 // pred_check
        %p214 = pneg %p213
      $region30: #{basic_block_forward.1} parent=5 // pred_check_branch
        %216 = sbr.rel (%p214) target = $region32
      $region31: #{basic_block_forward.1} parent=5 // pred_region
        // Predicated region
        $region33: #{basic_block_forward.1} parent=31 // pred_check
          %p217 = pneg %p34
        $region34: #{basic_block_forward.1} parent=31 // pred_check_branch
          %219 = sbr.rel (%p217) target = $region36
        $region35: #{basic_block_forward.1} parent=31 // pred_region
          %s220 = smul.u32 2, %s14
          %p221 = scmp.lt.s32.totalorder %s220, 3
          %s222 = scalar_select %p221, %s220, 3
          %s223 = smul.addr %s222, 4
          %s224 = smul.addr %s223, 8
          %s225 = scalar_lea.vmem %s0, %s224
          %s226 = smul.u32 2, %s14
        $region36: #{basic_block_forward.1} parent=31 // pred_fallthru
          _
      $region32: #{basic_block_forward.1} parent=5 // pred_fallthru
        _
      %p227 = scmp.le.s32.totalorder 1, %s14
      %p228 = scmp.lt.s32.totalorder %s14, 3
      %p229 = pnand %p227, %p228
      %p230 = pneg %p229
      // Predicated region
      $region37: #{basic_block_forward.1} parent=5 // pred_check
        _
      $region38: #{basic_block_forward.1} parent=5 // pred_check_branch
        %232 = sbr.rel (%p229) target = $region40
      $region39: #{basic_block_forward.1} parent=5 // pred_region
        %s233 = ssub.s32 %s14, 1
        // Predicated region
        $region41: #{basic_block_forward.1} parent=39 // pred_check
          %p234 = pneg %p61
        $region42: #{basic_block_forward.1} parent=39 // pred_check_branch
          %236 = sbr.rel (%p234) target = $region44
        $region43: #{basic_block_forward.1} parent=39 // pred_region
          %237 = dma.done [#allocation3], 49152
        $region44: #{basic_block_forward.1} parent=39 // pred_fallthru
          _
        // Predicated region
        $region45: #{basic_block_forward.1} parent=39 // pred_check
          %p238 = pneg %p82
        $region46: #{basic_block_forward.1} parent=39 // pred_check_branch
          %240 = sbr.rel (%p238) target = $region48
        $region47: #{basic_block_forward.1} parent=39 // pred_region
          %241 = dma.done [#allocation5], 64
        $region48: #{basic_block_forward.1} parent=39 // pred_fallthru
          _
        // Predicated region
        $region49: #{basic_block_forward.1} parent=39 // pred_check
          %p242 = pneg %p103
        $region50: #{basic_block_forward.1} parent=39 // pred_check_branch
          %244 = sbr.rel (%p242) target = $region52
        $region51: #{basic_block_forward.1} parent=39 // pred_region
          %245 = dma.done [#allocation5], 49152
        $region52: #{basic_block_forward.1} parent=39 // pred_fallthru
          _
        // Predicated region
        $region53: #{basic_block_forward.1} parent=39 // pred_check
          %p246 = pneg %p124
        $region54: #{basic_block_forward.1} parent=39 // pred_check_branch
          %248 = sbr.rel (%p246) target = $region56
        $region55: #{basic_block_forward.1} parent=39 // pred_region
          %249 = dma.done [#allocation8], 64
        $region56: #{basic_block_forward.1} parent=39 // pred_fallthru
          _
        %s250 = smul.u32 2, %s19
        %p251 = scmp.lt.s32.totalorder %s250, 3
        %s252 = scalar_select %p251, %s250, 3
        %s253 = smul.addr %s252, 4
        %s254 = smul.addr %s253, 8
        %s255 = scalar_lea.vmem %s0, %s254
        %p256 = pneg %p40
        %p257 = pneg %p37
        %p258 = pneg %p61
        %p259 = pneg %p58
        %p260 = pneg %p82
        %p261 = pneg %p79
        %p262 = pneg %p103
        %p263 = pneg %p100
        %p264 = pneg %p124
        %p265 = pneg %p121
        %p266 = pneg %p150
        %p267 = pneg %p147
        %s268 = smul.u32 2, %s19
        %p269 = scmp.lt.s32.totalorder %s268, 3
        %s270 = scalar_select %p269, %s268, 3
        %s271 = smul.addr %s270, 4
        %s272 = smul.addr %s271, 8
        %s273 = scalar_lea.vmem %s5, %s272
        %s274 = smul.u32 2, %s19
        %p275 = scmp.lt.s32.totalorder %s274, 3
        %s276 = scalar_select %p275, %s274, 3
        %s277 = smul.addr %s276, 4
        %s278 = smul.addr %s277, 8
        %s279 = scalar_lea.vmem %s0, %s278
        %s280 = smul.u32 2, %s19
        %s281 = smul.u32 2, %s19
        %p282 = scmp.lt.s32.totalorder %s281, 3
        %s283 = scalar_select %p282, %s281, 3
        %s284 = smul.addr %s283, 4
        %s285 = smul.addr %s284, 8
        %s286 = scalar_lea.vmem %s5, %s285
        %s287 = smul.u32 2, %s19
        %v291 = vlaneseq
        %v292 = vshrl.u32 %v291, 7
        %v293 = vadd.s32 %v292, 8
        %vm294 = vcmp.lt.s32.totalorder %v292, 0
        %v295 = vsub.s32 0, %v292
        %v296 = vsel %vm294, %v295, %v292
        %v297 = vshrl.u32 %v296, 3
        %v298 = vand.u32 %v296, 7
        %v299 = vsub.s32 0, %v298
        %v300 = vsel %vm294, %v299, %v298
        %vm301 = vcmp.lt.s32.totalorder %v293, 0
        %v302 = vsub.s32 0, %v293
        %v303 = vsel %vm301, %v302, %v293
        %v304 = vshrl.u32 %v303, 3
        %v305 = vand.u32 %v303, 7
        %v306 = vsub.s32 0, %v305
        %v307 = vsel %vm301, %v306, %v305
        %vm308 = vcmp.ne.s32.totalorder %v300, 0
        %vm309 = vcmp.ne.s32.totalorder %v307, 0
        %vm310 = vcmp.lt.s32.totalorder %v300, 0
        %vm311 = vcmp.lt.s32.totalorder %v307, 0
        %vm312 = vmand %vm310, %vm308
        %vm313 = vmand %vm311, %vm309
        %v314 = vadd.s32 %v300, 8
        %v315 = vadd.s32 %v307, 8
        %v316 = vsel %vm312, %v314, %v300
        %v317 = vsel %vm313, %v315, %v307
        %vm318 = vcmp.ne.s32.totalorder %v316, 0
        %vm319 = vcmp.ne.s32.totalorder %v317, 0
        %vm320 = vcmp.ne.s32.totalorder %v316, 7
        %vm321 = vcmp.ne.s32.totalorder %v317, 7
        %v322 = vld [vmem:[%s279] sm:$0xff]
        %v323 = vld [vmem:[%s279 + $0x8] sm:$0xff]
        %v324 = vld [vmem:[%s279 + $0x10] sm:$0xff]
        %v325 = vld [vmem:[%s279 + $0x18] sm:$0xff]
        %v326 = vld [vmem:[%s279 + $0x20] sm:$0xff]
        %v327 = vld [vmem:[%s279 + $0x28] sm:$0xff]
        %v328 = vld [vmem:[%s279 + $0x30] sm:$0xff]
        %v329 = vld [vmem:[%s279 + $0x38] sm:$0xff]
        %v330 = vmax.f32 %v322, 0.0
        %v331 = vmax.f32 %v323, 0.0
        %v332 = vmax.f32 %v324, 0.0
        %v333 = vmax.f32 %v325, 0.0
        %v334 = vmax.f32 %v326, 0.0
        %v335 = vmax.f32 %v327, 0.0
        %v336 = vmax.f32 %v328, 0.0
        %v337 = vmax.f32 %v329, 0.0
        %v338 = vpack.c.bf16 %v334, %v330
        %v339 = vpack.c.bf16 %v335, %v331
        %v340 = vpack.c.bf16 %v336, %v332
        %v341 = vpack.c.bf16 %v337, %v333
        %v343 = vshrl.u32 %v338, 16
        %v345 = vrot.slane %v343, 7
        %v346 = vshll.u32 %v338, 16
        %v348 = vor.u32 %v345, %v346
        %v350 = vshrl.u32 %v339, 16
        %v352 = vrot.slane %v350, 7
        %v353 = vshll.u32 %v339, 16
        %v355 = vor.u32 %v352, %v353
        %v357 = vshrl.u32 %v340, 16
        %v359 = vrot.slane %v357, 7
        %v360 = vshll.u32 %v340, 16
        %v362 = vor.u32 %v359, %v360
        %v364 = vshrl.u32 %v341, 16
        %v366 = vrot.slane %v364, 7
        %v367 = vshll.u32 %v341, 16
        %v369 = vor.u32 %v366, %v367
        %vm374 = vcmask 1040384
        %vm375 = vsmask.f32 256
        %vm376 = vmand %vm374, %vm375
        %v377 = vsel %vm376, 0, %v348
        %v378 = vsel %vm376, 0, %v355
        %v379 = vsel %vm376, 0, %v362
        %v380 = vsel %vm376, 0, %v369
        %v381 = vsel %vm318, 1, 0
        %v382 = vsel %vm319, 1, 0
        %vm383 = vcmp.eq.s32.totalorder %v381, 1
        %vm384 = vcmp.eq.s32.totalorder %v382, 1
        %vm385 = vmpackc.low %vm383, %vm383
        %vm386 = vmpackc.low %vm384, %vm384
        %v387 = vsel %vm385, 65537, 0
        %v388 = vsel %vm386, 65537, 0
        %v389 = vunpack.c.l.b16 %v387
        %v390 = vunpack.c.l.b16 %v388
        %v391 = vpack.c.b16 %v390, %v389
        %vm392 = vcmp.ne.s16.totalorder %v391, 0
        %v393 = vsel %vm392, %v377, 0
        %v394 = vsel %vm392, %v378, 0
        %v395 = vsel %vm392, %v379, 0
        %v396 = vsel %vm392, %v380, 0
        %v397 = vrot.slane %v346, 1
        %v398 = vor.u32 %v343, %v397
        %v399 = vrot.slane %v353, 1
        %v400 = vor.u32 %v350, %v399
        %v401 = vrot.slane %v360, 1
        %v402 = vor.u32 %v357, %v401
        %v403 = vrot.slane %v367, 1
        %v404 = vor.u32 %v364, %v403
        %vm409 = vcmask 1047552
        %vm410 = vsmask.f32 7424
        %vm411 = vmand %vm409, %vm410
        %v412 = vsel %vm411, %v398, 0
        %v413 = vsel %vm411, %v400, 0
        %v414 = vsel %vm411, %v402, 0
        %v415 = vsel %vm411, %v404, 0
        %v416 = vsel %vm320, 1, 0
        %v417 = vsel %vm321, 1, 0
        %vm418 = vcmp.eq.s32.totalorder %v416, 1
        %vm419 = vcmp.eq.s32.totalorder %v417, 1
        %vm420 = vmpackc.low %vm418, %vm418
        %vm421 = vmpackc.low %vm419, %vm419
        %v422 = vsel %vm420, 65537, 0
        %v423 = vsel %vm421, 65537, 0
        %v424 = vunpack.c.l.b16 %v422
        %v425 = vunpack.c.l.b16 %v423
        %v426 = vpack.c.b16 %v425, %v424
        %vm427 = vcmp.ne.s16.totalorder %v426, 0
        %v428 = vsel %vm427, %v412, 0
        %v429 = vsel %vm427, %v413, 0
        %v430 = vsel %vm427, %v414, 0
        %v431 = vsel %vm427, %v415, 0
        %v432 = vld [vmem:[#allocation2] sm:$0xff]
        %v433 = vld [vmem:[#allocation2 + $0x8] sm:$0xff]
        %v434 = vld [vmem:[#allocation2 + $0x10] sm:$0xff]
        %v435 = vld [vmem:[#allocation2 + $0x18] sm:$0xff]
        %v436 = vld [vmem:[#allocation2 + $0x20] sm:$0xff]
        %v437 = vld [vmem:[#allocation2 + $0x28] sm:$0xff]
        %v438 = vld [vmem:[#allocation2 + $0x30] sm:$0xff]
        %v439 = vld [vmem:[#allocation2 + $0x38] sm:$0xff]
        %v440 = vld [vmem:[#allocation2 + $0x40] sm:$0xff]
        %v441 = vld [vmem:[#allocation2 + $0x48] sm:$0xff]
        %v442 = vld [vmem:[#allocation2 + $0x50] sm:$0xff]
        %v443 = vld [vmem:[#allocation2 + $0x58] sm:$0xff]
        %v444 = vld [vmem:[#allocation2 + $0x60] sm:$0xff]
        %v445 = vld [vmem:[#allocation2 + $0x68] sm:$0xff]
        %v446 = vld [vmem:[#allocation2 + $0x70] sm:$0xff]
        %v447 = vld [vmem:[#allocation2 + $0x78] sm:$0xff]
        %v448 = vld [vmem:[#allocation2 + $0x80] sm:$0xff]
        %v449 = vld [vmem:[#allocation2 + $0x88] sm:$0xff]
        %v450 = vld [vmem:[#allocation2 + $0x90] sm:$0xff]
        %v451 = vld [vmem:[#allocation2 + $0x98] sm:$0xff]
        %v452 = vld [vmem:[#allocation2 + $0xa0] sm:$0xff]
        %v453 = vld [vmem:[#allocation2 + $0xa8] sm:$0xff]
        %v454 = vld [vmem:[#allocation2 + $0xb0] sm:$0xff]
        %v455 = vld [vmem:[#allocation2 + $0xb8] sm:$0xff]
        %v456 = vld [vmem:[#allocation2 + $0xc0] sm:$0xff]
        %v457 = vld [vmem:[#allocation2 + $0xc8] sm:$0xff]
        %v458 = vld [vmem:[#allocation2 + $0xd0] sm:$0xff]
        %v459 = vld [vmem:[#allocation2 + $0xd8] sm:$0xff]
        %v460 = vld [vmem:[#allocation2 + $0xe0] sm:$0xff]
        %v461 = vld [vmem:[#allocation2 + $0xe8] sm:$0xff]
        %v462 = vld [vmem:[#allocation2 + $0xf0] sm:$0xff]
        %v463 = vld [vmem:[#allocation2 + $0xf8] sm:$0xff]
        %v464 = vld [vmem:[#allocation2 + $0x100] sm:$0xff]
        %v465 = vld [vmem:[#allocation2 + $0x108] sm:$0xff]
        %v466 = vld [vmem:[#allocation2 + $0x110] sm:$0xff]
        %v467 = vld [vmem:[#allocation2 + $0x118] sm:$0xff]
        %v468 = vld [vmem:[#allocation2 + $0x120] sm:$0xff]
        %v469 = vld [vmem:[#allocation2 + $0x128] sm:$0xff]
        %v470 = vld [vmem:[#allocation2 + $0x130] sm:$0xff]
        %v471 = vld [vmem:[#allocation2 + $0x138] sm:$0xff]
        %v472 = vld [vmem:[#allocation2 + $0x140] sm:$0xff]
        %v473 = vld [vmem:[#allocation2 + $0x148] sm:$0xff]
        %v474 = vld [vmem:[#allocation2 + $0x150] sm:$0xff]
        %v475 = vld [vmem:[#allocation2 + $0x158] sm:$0xff]
        %v476 = vld [vmem:[#allocation2 + $0x160] sm:$0xff]
        %v477 = vld [vmem:[#allocation2 + $0x168] sm:$0xff]
        %v478 = vld [vmem:[#allocation2 + $0x170] sm:$0xff]
        %v479 = vld [vmem:[#allocation2 + $0x178] sm:$0xff]
        %v480 = vld [vmem:[#allocation2 + $0x180] sm:$0xff]
        %v481 = vld [vmem:[#allocation2 + $0x188] sm:$0xff]
        %v482 = vld [vmem:[#allocation2 + $0x190] sm:$0xff]
        %v483 = vld [vmem:[#allocation2 + $0x198] sm:$0xff]
        %v484 = vld [vmem:[#allocation2 + $0x1a0] sm:$0xff]
        %v485 = vld [vmem:[#allocation2 + $0x1a8] sm:$0xff]
        %v486 = vld [vmem:[#allocation2 + $0x1b0] sm:$0xff]
        %v487 = vld [vmem:[#allocation2 + $0x1b8] sm:$0xff]
        %v488 = vld [vmem:[#allocation2 + $0x1c0] sm:$0xff]
        %v489 = vld [vmem:[#allocation2 + $0x1c8] sm:$0xff]
        %v490 = vld [vmem:[#allocation2 + $0x1d0] sm:$0xff]
        %v491 = vld [vmem:[#allocation2 + $0x1d8] sm:$0xff]
        %v492 = vld [vmem:[#allocation2 + $0x1e0] sm:$0xff]
        %v493 = vld [vmem:[#allocation2 + $0x1e8] sm:$0xff]
        %v494 = vld [vmem:[#allocation2 + $0x1f0] sm:$0xff]
        %v495 = vld [vmem:[#allocation2 + $0x1f8] sm:$0xff]
        %v496 = vld [vmem:[#allocation2 + $0x200] sm:$0xff]
        %v497 = vld [vmem:[#allocation2 + $0x208] sm:$0xff]
        %v498 = vld [vmem:[#allocation2 + $0x210] sm:$0xff]
        %v499 = vld [vmem:[#allocation2 + $0x218] sm:$0xff]
        %v500 = vld [vmem:[#allocation2 + $0x220] sm:$0xff]
        %v501 = vld [vmem:[#allocation2 + $0x228] sm:$0xff]
        %v502 = vld [vmem:[#allocation2 + $0x230] sm:$0xff]
        %v503 = vld [vmem:[#allocation2 + $0x238] sm:$0xff]
        %v504 = vld [vmem:[#allocation2 + $0x240] sm:$0xff]
        %v505 = vld [vmem:[#allocation2 + $0x248] sm:$0xff]
        %v506 = vld [vmem:[#allocation2 + $0x250] sm:$0xff]
        %v507 = vld [vmem:[#allocation2 + $0x258] sm:$0xff]
        %v508 = vld [vmem:[#allocation2 + $0x260] sm:$0xff]
        %v509 = vld [vmem:[#allocation2 + $0x268] sm:$0xff]
        %v510 = vld [vmem:[#allocation2 + $0x270] sm:$0xff]
        %v511 = vld [vmem:[#allocation2 + $0x278] sm:$0xff]
        %v512 = vld [vmem:[#allocation2 + $0x280] sm:$0xff]
        %v513 = vld [vmem:[#allocation2 + $0x288] sm:$0xff]
        %v514 = vld [vmem:[#allocation2 + $0x290] sm:$0xff]
        %v515 = vld [vmem:[#allocation2 + $0x298] sm:$0xff]
        %v516 = vld [vmem:[#allocation2 + $0x2a0] sm:$0xff]
        %v517 = vld [vmem:[#allocation2 + $0x2a8] sm:$0xff]
        %v518 = vld [vmem:[#allocation2 + $0x2b0] sm:$0xff]
        %v519 = vld [vmem:[#allocation2 + $0x2b8] sm:$0xff]
        %v520 = vld [vmem:[#allocation2 + $0x2c0] sm:$0xff]
        %v521 = vld [vmem:[#allocation2 + $0x2c8] sm:$0xff]
        %v522 = vld [vmem:[#allocation2 + $0x2d0] sm:$0xff]
        %v523 = vld [vmem:[#allocation2 + $0x2d8] sm:$0xff]
        %v524 = vld [vmem:[#allocation2 + $0x2e0] sm:$0xff]
        %v525 = vld [vmem:[#allocation2 + $0x2e8] sm:$0xff]
        %v526 = vld [vmem:[#allocation2 + $0x2f0] sm:$0xff]
        %v527 = vld [vmem:[#allocation2 + $0x2f8] sm:$0xff]
        %v528 = vld [vmem:[#allocation2 + $0x300] sm:$0xff]
        %v529 = vld [vmem:[#allocation2 + $0x308] sm:$0xff]
        %v530 = vld [vmem:[#allocation2 + $0x310] sm:$0xff]
        %v531 = vld [vmem:[#allocation2 + $0x318] sm:$0xff]
        %v532 = vld [vmem:[#allocation2 + $0x320] sm:$0xff]
        %v533 = vld [vmem:[#allocation2 + $0x328] sm:$0xff]
        %v534 = vld [vmem:[#allocation2 + $0x330] sm:$0xff]
        %v535 = vld [vmem:[#allocation2 + $0x338] sm:$0xff]
        %v536 = vld [vmem:[#allocation2 + $0x340] sm:$0xff]
        %v537 = vld [vmem:[#allocation2 + $0x348] sm:$0xff]
        %v538 = vld [vmem:[#allocation2 + $0x350] sm:$0xff]
        %v539 = vld [vmem:[#allocation2 + $0x358] sm:$0xff]
        %v540 = vld [vmem:[#allocation2 + $0x360] sm:$0xff]
        %v541 = vld [vmem:[#allocation2 + $0x368] sm:$0xff]
        %v542 = vld [vmem:[#allocation2 + $0x370] sm:$0xff]
        %v543 = vld [vmem:[#allocation2 + $0x378] sm:$0xff]
        %v544 = vld [vmem:[#allocation2 + $0x380] sm:$0xff]
        %v545 = vld [vmem:[#allocation2 + $0x388] sm:$0xff]
        %v546 = vld [vmem:[#allocation2 + $0x390] sm:$0xff]
        %v547 = vld [vmem:[#allocation2 + $0x398] sm:$0xff]
        %v548 = vld [vmem:[#allocation2 + $0x3a0] sm:$0xff]
        %v549 = vld [vmem:[#allocation2 + $0x3a8] sm:$0xff]
        %v550 = vld [vmem:[#allocation2 + $0x3b0] sm:$0xff]
        %v551 = vld [vmem:[#allocation2 + $0x3b8] sm:$0xff]
        %v552 = vld [vmem:[#allocation2 + $0x3c0] sm:$0xff]
        %v553 = vld [vmem:[#allocation2 + $0x3c8] sm:$0xff]
        %v554 = vld [vmem:[#allocation2 + $0x3d0] sm:$0xff]
        %v555 = vld [vmem:[#allocation2 + $0x3d8] sm:$0xff]
        %v556 = vld [vmem:[#allocation2 + $0x3e0] sm:$0xff]
        %v557 = vld [vmem:[#allocation2 + $0x3e8] sm:$0xff]
        %v558 = vld [vmem:[#allocation2 + $0x3f0] sm:$0xff]
        %v559 = vld [vmem:[#allocation2 + $0x3f8] sm:$0xff]
        %s560 = scalar_lea.vmem [#allocation2], 1024
        %v561 = vld [vmem:[%s560] sm:$0xff]
        %v562 = vld [vmem:[%s560 + $0x8] sm:$0xff]
        %v563 = vld [vmem:[%s560 + $0x10] sm:$0xff]
        %v564 = vld [vmem:[%s560 + $0x18] sm:$0xff]
        %v565 = vld [vmem:[%s560 + $0x20] sm:$0xff]
        %v566 = vld [vmem:[%s560 + $0x28] sm:$0xff]
        %v567 = vld [vmem:[%s560 + $0x30] sm:$0xff]
        %v568 = vld [vmem:[%s560 + $0x38] sm:$0xff]
        %v569 = vld [vmem:[%s560 + $0x40] sm:$0xff]
        %v570 = vld [vmem:[%s560 + $0x48] sm:$0xff]
        %v571 = vld [vmem:[%s560 + $0x50] sm:$0xff]
        %v572 = vld [vmem:[%s560 + $0x58] sm:$0xff]
        %v573 = vld [vmem:[%s560 + $0x60] sm:$0xff]
        %v574 = vld [vmem:[%s560 + $0x68] sm:$0xff]
        %v575 = vld [vmem:[%s560 + $0x70] sm:$0xff]
        %v576 = vld [vmem:[%s560 + $0x78] sm:$0xff]
        %v577 = vld [vmem:[%s560 + $0x80] sm:$0xff]
        %v578 = vld [vmem:[%s560 + $0x88] sm:$0xff]
        %v579 = vld [vmem:[%s560 + $0x90] sm:$0xff]
        %v580 = vld [vmem:[%s560 + $0x98] sm:$0xff]
        %v581 = vld [vmem:[%s560 + $0xa0] sm:$0xff]
        %v582 = vld [vmem:[%s560 + $0xa8] sm:$0xff]
        %v583 = vld [vmem:[%s560 + $0xb0] sm:$0xff]
        %v584 = vld [vmem:[%s560 + $0xb8] sm:$0xff]
        %v585 = vld [vmem:[%s560 + $0xc0] sm:$0xff]
        %v586 = vld [vmem:[%s560 + $0xc8] sm:$0xff]
        %v587 = vld [vmem:[%s560 + $0xd0] sm:$0xff]
        %v588 = vld [vmem:[%s560 + $0xd8] sm:$0xff]
        %v589 = vld [vmem:[%s560 + $0xe0] sm:$0xff]
        %v590 = vld [vmem:[%s560 + $0xe8] sm:$0xff]
        %v591 = vld [vmem:[%s560 + $0xf0] sm:$0xff]
        %v592 = vld [vmem:[%s560 + $0xf8] sm:$0xff]
        %v593 = vld [vmem:[%s560 + $0x100] sm:$0xff]
        %v594 = vld [vmem:[%s560 + $0x108] sm:$0xff]
        %v595 = vld [vmem:[%s560 + $0x110] sm:$0xff]
        %v596 = vld [vmem:[%s560 + $0x118] sm:$0xff]
        %v597 = vld [vmem:[%s560 + $0x120] sm:$0xff]
        %v598 = vld [vmem:[%s560 + $0x128] sm:$0xff]
        %v599 = vld [vmem:[%s560 + $0x130] sm:$0xff]
        %v600 = vld [vmem:[%s560 + $0x138] sm:$0xff]
        %v601 = vld [vmem:[%s560 + $0x140] sm:$0xff]
        %v602 = vld [vmem:[%s560 + $0x148] sm:$0xff]
        %v603 = vld [vmem:[%s560 + $0x150] sm:$0xff]
        %v604 = vld [vmem:[%s560 + $0x158] sm:$0xff]
        %v605 = vld [vmem:[%s560 + $0x160] sm:$0xff]
        %v606 = vld [vmem:[%s560 + $0x168] sm:$0xff]
        %v607 = vld [vmem:[%s560 + $0x170] sm:$0xff]
        %v608 = vld [vmem:[%s560 + $0x178] sm:$0xff]
        %v609 = vld [vmem:[%s560 + $0x180] sm:$0xff]
        %v610 = vld [vmem:[%s560 + $0x188] sm:$0xff]
        %v611 = vld [vmem:[%s560 + $0x190] sm:$0xff]
        %v612 = vld [vmem:[%s560 + $0x198] sm:$0xff]
        %v613 = vld [vmem:[%s560 + $0x1a0] sm:$0xff]
        %v614 = vld [vmem:[%s560 + $0x1a8] sm:$0xff]
        %v615 = vld [vmem:[%s560 + $0x1b0] sm:$0xff]
        %v616 = vld [vmem:[%s560 + $0x1b8] sm:$0xff]
        %v617 = vld [vmem:[%s560 + $0x1c0] sm:$0xff]
        %v618 = vld [vmem:[%s560 + $0x1c8] sm:$0xff]
        %v619 = vld [vmem:[%s560 + $0x1d0] sm:$0xff]
        %v620 = vld [vmem:[%s560 + $0x1d8] sm:$0xff]
        %v621 = vld [vmem:[%s560 + $0x1e0] sm:$0xff]
        %v622 = vld [vmem:[%s560 + $0x1e8] sm:$0xff]
        %v623 = vld [vmem:[%s560 + $0x1f0] sm:$0xff]
        %v624 = vld [vmem:[%s560 + $0x1f8] sm:$0xff]
        %v625 = vld [vmem:[%s560 + $0x200] sm:$0xff]
        %v626 = vld [vmem:[%s560 + $0x208] sm:$0xff]
        %v627 = vld [vmem:[%s560 + $0x210] sm:$0xff]
        %v628 = vld [vmem:[%s560 + $0x218] sm:$0xff]
        %v629 = vld [vmem:[%s560 + $0x220] sm:$0xff]
        %v630 = vld [vmem:[%s560 + $0x228] sm:$0xff]
        %v631 = vld [vmem:[%s560 + $0x230] sm:$0xff]
        %v632 = vld [vmem:[%s560 + $0x238] sm:$0xff]
        %v633 = vld [vmem:[%s560 + $0x240] sm:$0xff]
        %v634 = vld [vmem:[%s560 + $0x248] sm:$0xff]
        %v635 = vld [vmem:[%s560 + $0x250] sm:$0xff]
        %v636 = vld [vmem:[%s560 + $0x258] sm:$0xff]
        %v637 = vld [vmem:[%s560 + $0x260] sm:$0xff]
        %v638 = vld [vmem:[%s560 + $0x268] sm:$0xff]
        %v639 = vld [vmem:[%s560 + $0x270] sm:$0xff]
        %v640 = vld [vmem:[%s560 + $0x278] sm:$0xff]
        %v641 = vld [vmem:[%s560 + $0x280] sm:$0xff]
        %v642 = vld [vmem:[%s560 + $0x288] sm:$0xff]
        %v643 = vld [vmem:[%s560 + $0x290] sm:$0xff]
        %v644 = vld [vmem:[%s560 + $0x298] sm:$0xff]
        %v645 = vld [vmem:[%s560 + $0x2a0] sm:$0xff]
        %v646 = vld [vmem:[%s560 + $0x2a8] sm:$0xff]
        %v647 = vld [vmem:[%s560 + $0x2b0] sm:$0xff]
        %v648 = vld [vmem:[%s560 + $0x2b8] sm:$0xff]
        %v649 = vld [vmem:[%s560 + $0x2c0] sm:$0xff]
        %v650 = vld [vmem:[%s560 + $0x2c8] sm:$0xff]
        %v651 = vld [vmem:[%s560 + $0x2d0] sm:$0xff]
        %v652 = vld [vmem:[%s560 + $0x2d8] sm:$0xff]
        %v653 = vld [vmem:[%s560 + $0x2e0] sm:$0xff]
        %v654 = vld [vmem:[%s560 + $0x2e8] sm:$0xff]
        %v655 = vld [vmem:[%s560 + $0x2f0] sm:$0xff]
        %v656 = vld [vmem:[%s560 + $0x2f8] sm:$0xff]
        %v657 = vld [vmem:[%s560 + $0x300] sm:$0xff]
        %v658 = vld [vmem:[%s560 + $0x308] sm:$0xff]
        %v659 = vld [vmem:[%s560 + $0x310] sm:$0xff]
        %v660 = vld [vmem:[%s560 + $0x318] sm:$0xff]
        %v661 = vld [vmem:[%s560 + $0x320] sm:$0xff]
        %v662 = vld [vmem:[%s560 + $0x328] sm:$0xff]
        %v663 = vld [vmem:[%s560 + $0x330] sm:$0xff]
        %v664 = vld [vmem:[%s560 + $0x338] sm:$0xff]
        %v665 = vld [vmem:[%s560 + $0x340] sm:$0xff]
        %v666 = vld [vmem:[%s560 + $0x348] sm:$0xff]
        %v667 = vld [vmem:[%s560 + $0x350] sm:$0xff]
        %v668 = vld [vmem:[%s560 + $0x358] sm:$0xff]
        %v669 = vld [vmem:[%s560 + $0x360] sm:$0xff]
        %v670 = vld [vmem:[%s560 + $0x368] sm:$0xff]
        %v671 = vld [vmem:[%s560 + $0x370] sm:$0xff]
        %v672 = vld [vmem:[%s560 + $0x378] sm:$0xff]
        %v673 = vld [vmem:[%s560 + $0x380] sm:$0xff]
        %v674 = vld [vmem:[%s560 + $0x388] sm:$0xff]
        %v675 = vld [vmem:[%s560 + $0x390] sm:$0xff]
        %v676 = vld [vmem:[%s560 + $0x398] sm:$0xff]
        %v677 = vld [vmem:[%s560 + $0x3a0] sm:$0xff]
        %v678 = vld [vmem:[%s560 + $0x3a8] sm:$0xff]
        %v679 = vld [vmem:[%s560 + $0x3b0] sm:$0xff]
        %v680 = vld [vmem:[%s560 + $0x3b8] sm:$0xff]
        %v681 = vld [vmem:[%s560 + $0x3c0] sm:$0xff]
        %v682 = vld [vmem:[%s560 + $0x3c8] sm:$0xff]
        %v683 = vld [vmem:[%s560 + $0x3d0] sm:$0xff]
        %v684 = vld [vmem:[%s560 + $0x3d8] sm:$0xff]
        %v685 = vld [vmem:[%s560 + $0x3e0] sm:$0xff]
        %v686 = vld [vmem:[%s560 + $0x3e8] sm:$0xff]
        %v687 = vld [vmem:[%s560 + $0x3f0] sm:$0xff]
        %v688 = vld [vmem:[%s560 + $0x3f8] sm:$0xff]
        %v817 = vunpack.c.l.b16 %v561
        %v818 = vunpack.c.h.b16 %v561
        %v819 = vunpack.c.l.b16 %v562
        %v820 = vunpack.c.h.b16 %v562
        %v821 = vunpack.c.l.b16 %v563
        %v822 = vunpack.c.h.b16 %v563
        %v823 = vunpack.c.l.b16 %v564
        %v824 = vunpack.c.h.b16 %v564
        %v825 = vunpack.c.l.b16 %v565
        %v826 = vunpack.c.h.b16 %v565
        %v827 = vunpack.c.l.b16 %v566
        %v828 = vunpack.c.h.b16 %v566
        %v829 = vunpack.c.l.b16 %v567
        %v830 = vunpack.c.h.b16 %v567
        %v831 = vunpack.c.l.b16 %v568
        %v832 = vunpack.c.h.b16 %v568
        %v833 = vunpack.c.l.b16 %v569
        %v834 = vunpack.c.h.b16 %v569
        %v835 = vunpack.c.l.b16 %v570
        %v836 = vunpack.c.h.b16 %v570
        %v837 = vunpack.c.l.b16 %v571
        %v838 = vunpack.c.h.b16 %v571
        %v839 = vunpack.c.l.b16 %v572
        %v840 = vunpack.c.h.b16 %v572
        %v841 = vunpack.c.l.b16 %v573
        %v842 = vunpack.c.h.b16 %v573
        %v843 = vunpack.c.l.b16 %v574
        %v844 = vunpack.c.h.b16 %v574
        %v845 = vunpack.c.l.b16 %v575
        %v846 = vunpack.c.h.b16 %v575
        %v847 = vunpack.c.l.b16 %v576
        %v848 = vunpack.c.h.b16 %v576
        %v849 = vunpack.c.l.b16 %v577
        %v850 = vunpack.c.h.b16 %v577
        %v851 = vunpack.c.l.b16 %v578
        %v852 = vunpack.c.h.b16 %v578
        %v853 = vunpack.c.l.b16 %v579
        %v854 = vunpack.c.h.b16 %v579
        %v855 = vunpack.c.l.b16 %v580
        %v856 = vunpack.c.h.b16 %v580
        %v857 = vunpack.c.l.b16 %v581
        %v858 = vunpack.c.h.b16 %v581
        %v859 = vunpack.c.l.b16 %v582
        %v860 = vunpack.c.h.b16 %v582
        %v861 = vunpack.c.l.b16 %v583
        %v862 = vunpack.c.h.b16 %v583
        %v863 = vunpack.c.l.b16 %v584
        %v864 = vunpack.c.h.b16 %v584
        %v865 = vunpack.c.l.b16 %v585
        %v866 = vunpack.c.h.b16 %v585
        %v867 = vunpack.c.l.b16 %v586
        %v868 = vunpack.c.h.b16 %v586
        %v869 = vunpack.c.l.b16 %v587
        %v870 = vunpack.c.h.b16 %v587
        %v871 = vunpack.c.l.b16 %v588
        %v872 = vunpack.c.h.b16 %v588
        %v873 = vunpack.c.l.b16 %v589
        %v874 = vunpack.c.h.b16 %v589
        %v875 = vunpack.c.l.b16 %v590
        %v876 = vunpack.c.h.b16 %v590
        %v877 = vunpack.c.l.b16 %v591
        %v878 = vunpack.c.h.b16 %v591
        %v879 = vunpack.c.l.b16 %v592
        %v880 = vunpack.c.h.b16 %v592
        %v881 = vunpack.c.l.b16 %v593
        %v882 = vunpack.c.h.b16 %v593
        %v883 = vunpack.c.l.b16 %v594
        %v884 = vunpack.c.h.b16 %v594
        %v885 = vunpack.c.l.b16 %v595
        %v886 = vunpack.c.h.b16 %v595
        %v887 = vunpack.c.l.b16 %v596
        %v888 = vunpack.c.h.b16 %v596
        %v889 = vunpack.c.l.b16 %v597
        %v890 = vunpack.c.h.b16 %v597
        %v891 = vunpack.c.l.b16 %v598
        %v892 = vunpack.c.h.b16 %v598
        %v893 = vunpack.c.l.b16 %v599
        %v894 = vunpack.c.h.b16 %v599
        %v895 = vunpack.c.l.b16 %v600
        %v896 = vunpack.c.h.b16 %v600
        %v897 = vunpack.c.l.b16 %v601
        %v898 = vunpack.c.h.b16 %v601
        %v899 = vunpack.c.l.b16 %v602
        %v900 = vunpack.c.h.b16 %v602
        %v901 = vunpack.c.l.b16 %v603
        %v902 = vunpack.c.h.b16 %v603
        %v903 = vunpack.c.l.b16 %v604
        %v904 = vunpack.c.h.b16 %v604
        %v905 = vunpack.c.l.b16 %v605
        %v906 = vunpack.c.h.b16 %v605
        %v907 = vunpack.c.l.b16 %v606
        %v908 = vunpack.c.h.b16 %v606
        %v909 = vunpack.c.l.b16 %v607
        %v910 = vunpack.c.h.b16 %v607
        %v911 = vunpack.c.l.b16 %v608
        %v912 = vunpack.c.h.b16 %v608
        %v913 = vunpack.c.l.b16 %v609
        %v914 = vunpack.c.h.b16 %v609
        %v915 = vunpack.c.l.b16 %v610
        %v916 = vunpack.c.h.b16 %v610
        %v917 = vunpack.c.l.b16 %v611
        %v918 = vunpack.c.h.b16 %v611
        %v919 = vunpack.c.l.b16 %v612
        %v920 = vunpack.c.h.b16 %v612
        %v921 = vunpack.c.l.b16 %v613
        %v922 = vunpack.c.h.b16 %v613
        %v923 = vunpack.c.l.b16 %v614
        %v924 = vunpack.c.h.b16 %v614
        %v925 = vunpack.c.l.b16 %v615
        %v926 = vunpack.c.h.b16 %v615
        %v927 = vunpack.c.l.b16 %v616
        %v928 = vunpack.c.h.b16 %v616
        %v929 = vunpack.c.l.b16 %v617
        %v930 = vunpack.c.h.b16 %v617
        %v931 = vunpack.c.l.b16 %v618
        %v932 = vunpack.c.h.b16 %v618
        %v933 = vunpack.c.l.b16 %v619
        %v934 = vunpack.c.h.b16 %v619
        %v935 = vunpack.c.l.b16 %v620
        %v936 = vunpack.c.h.b16 %v620
        %v937 = vunpack.c.l.b16 %v621
        %v938 = vunpack.c.h.b16 %v621
        %v939 = vunpack.c.l.b16 %v622
        %v940 = vunpack.c.h.b16 %v622
        %v941 = vunpack.c.l.b16 %v623
        %v942 = vunpack.c.h.b16 %v623
        %v943 = vunpack.c.l.b16 %v624
        %v944 = vunpack.c.h.b16 %v624
        %v945 = vunpack.c.l.b16 %v625
        %v946 = vunpack.c.h.b16 %v625
        %v947 = vunpack.c.l.b16 %v626
        %v948 = vunpack.c.h.b16 %v626
        %v949 = vunpack.c.l.b16 %v627
        %v950 = vunpack.c.h.b16 %v627
        %v951 = vunpack.c.l.b16 %v628
        %v952 = vunpack.c.h.b16 %v628
        %v953 = vunpack.c.l.b16 %v629
        %v954 = vunpack.c.h.b16 %v629
        %v955 = vunpack.c.l.b16 %v630
        %v956 = vunpack.c.h.b16 %v630
        %v957 = vunpack.c.l.b16 %v631
        %v958 = vunpack.c.h.b16 %v631
        %v959 = vunpack.c.l.b16 %v632
        %v960 = vunpack.c.h.b16 %v632
        %v961 = vunpack.c.l.b16 %v633
        %v962 = vunpack.c.h.b16 %v633
        %v963 = vunpack.c.l.b16 %v634
        %v964 = vunpack.c.h.b16 %v634
        %v965 = vunpack.c.l.b16 %v635
        %v966 = vunpack.c.h.b16 %v635
        %v967 = vunpack.c.l.b16 %v636
        %v968 = vunpack.c.h.b16 %v636
        %v969 = vunpack.c.l.b16 %v637
        %v970 = vunpack.c.h.b16 %v637
        %v971 = vunpack.c.l.b16 %v638
        %v972 = vunpack.c.h.b16 %v638
        %v973 = vunpack.c.l.b16 %v639
        %v974 = vunpack.c.h.b16 %v639
        %v975 = vunpack.c.l.b16 %v640
        %v976 = vunpack.c.h.b16 %v640
        %v977 = vunpack.c.l.b16 %v641
        %v978 = vunpack.c.h.b16 %v641
        %v979 = vunpack.c.l.b16 %v642
        %v980 = vunpack.c.h.b16 %v642
        %v981 = vunpack.c.l.b16 %v643
        %v982 = vunpack.c.h.b16 %v643
        %v983 = vunpack.c.l.b16 %v644
        %v984 = vunpack.c.h.b16 %v644
        %v985 = vunpack.c.l.b16 %v645
        %v986 = vunpack.c.h.b16 %v645
        %v987 = vunpack.c.l.b16 %v646
        %v988 = vunpack.c.h.b16 %v646
        %v989 = vunpack.c.l.b16 %v647
        %v990 = vunpack.c.h.b16 %v647
        %v991 = vunpack.c.l.b16 %v648
        %v992 = vunpack.c.h.b16 %v648
        %v993 = vunpack.c.l.b16 %v649
        %v994 = vunpack.c.h.b16 %v649
        %v995 = vunpack.c.l.b16 %v650
        %v996 = vunpack.c.h.b16 %v650
        %v997 = vunpack.c.l.b16 %v651
        %v998 = vunpack.c.h.b16 %v651
        %v999 = vunpack.c.l.b16 %v652
        %v1000 = vunpack.c.h.b16 %v652
        %v1001 = vunpack.c.l.b16 %v653
        %v1002 = vunpack.c.h.b16 %v653
        %v1003 = vunpack.c.l.b16 %v654
        %v1004 = vunpack.c.h.b16 %v654
        %v1005 = vunpack.c.l.b16 %v655
        %v1006 = vunpack.c.h.b16 %v655
        %v1007 = vunpack.c.l.b16 %v656
        %v1008 = vunpack.c.h.b16 %v656
        %v1009 = vunpack.c.l.b16 %v657
        %v1010 = vunpack.c.h.b16 %v657
        %v1011 = vunpack.c.l.b16 %v658
        %v1012 = vunpack.c.h.b16 %v658
        %v1013 = vunpack.c.l.b16 %v659
        %v1014 = vunpack.c.h.b16 %v659
        %v1015 = vunpack.c.l.b16 %v660
        %v1016 = vunpack.c.h.b16 %v660
        %v1017 = vunpack.c.l.b16 %v661
        %v1018 = vunpack.c.h.b16 %v661
        %v1019 = vunpack.c.l.b16 %v662
        %v1020 = vunpack.c.h.b16 %v662
        %v1021 = vunpack.c.l.b16 %v663
        %v1022 = vunpack.c.h.b16 %v663
        %v1023 = vunpack.c.l.b16 %v664
        %v1024 = vunpack.c.h.b16 %v664
        %v1025 = vunpack.c.l.b16 %v665
        %v1026 = vunpack.c.h.b16 %v665
        %v1027 = vunpack.c.l.b16 %v666
        %v1028 = vunpack.c.h.b16 %v666
        %v1029 = vunpack.c.l.b16 %v667
        %v1030 = vunpack.c.h.b16 %v667
        %v1031 = vunpack.c.l.b16 %v668
        %v1032 = vunpack.c.h.b16 %v668
        %v1033 = vunpack.c.l.b16 %v669
        %v1034 = vunpack.c.h.b16 %v669
        %v1035 = vunpack.c.l.b16 %v670
        %v1036 = vunpack.c.h.b16 %v670
        %v1037 = vunpack.c.l.b16 %v671
        %v1038 = vunpack.c.h.b16 %v671
        %v1039 = vunpack.c.l.b16 %v672
        %v1040 = vunpack.c.h.b16 %v672
        %v1041 = vunpack.c.l.b16 %v673
        %v1042 = vunpack.c.h.b16 %v673
        %v1043 = vunpack.c.l.b16 %v674
        %v1044 = vunpack.c.h.b16 %v674
        %v1045 = vunpack.c.l.b16 %v675
        %v1046 = vunpack.c.h.b16 %v675
        %v1047 = vunpack.c.l.b16 %v676
        %v1048 = vunpack.c.h.b16 %v676
        %v1049 = vunpack.c.l.b16 %v677
        %v1050 = vunpack.c.h.b16 %v677
        %v1051 = vunpack.c.l.b16 %v678
        %v1052 = vunpack.c.h.b16 %v678
        %v1053 = vunpack.c.l.b16 %v679
        %v1054 = vunpack.c.h.b16 %v679
        %v1055 = vunpack.c.l.b16 %v680
        %v1056 = vunpack.c.h.b16 %v680
        %v1057 = vunpack.c.l.b16 %v681
        %v1058 = vunpack.c.h.b16 %v681
        %v1059 = vunpack.c.l.b16 %v682
        %v1060 = vunpack.c.h.b16 %v682
        %v1061 = vunpack.c.l.b16 %v683
        %v1062 = vunpack.c.h.b16 %v683
        %v1063 = vunpack.c.l.b16 %v684
        %v1064 = vunpack.c.h.b16 %v684
        %v1065 = vunpack.c.l.b16 %v685
        %v1066 = vunpack.c.h.b16 %v685
        %v1067 = vunpack.c.l.b16 %v686
        %v1068 = vunpack.c.h.b16 %v686
        %v1069 = vunpack.c.l.b16 %v687
        %v1070 = vunpack.c.h.b16 %v687
        %v1071 = vunpack.c.l.b16 %v688
        %v1072 = vunpack.c.h.b16 %v688
        %v1073 = vpack.c.b16 %v821, %v817
        %v1074 = vpack.c.b16 %v822, %v818
        %v1075 = vpack.c.b16 %v823, %v819
        %v1076 = vpack.c.b16 %v824, %v820
        %v1077 = vpack.c.b16 %v829, %v825
        %v1078 = vpack.c.b16 %v830, %v826
        %v1079 = vpack.c.b16 %v831, %v827
        %v1080 = vpack.c.b16 %v832, %v828
        %v1081 = vpack.c.b16 %v837, %v833
        %v1082 = vpack.c.b16 %v838, %v834
        %v1083 = vpack.c.b16 %v839, %v835
        %v1084 = vpack.c.b16 %v840, %v836
        %v1085 = vpack.c.b16 %v845, %v841
        %v1086 = vpack.c.b16 %v846, %v842
        %v1087 = vpack.c.b16 %v847, %v843
        %v1088 = vpack.c.b16 %v848, %v844
        %v1089 = vpack.c.b16 %v853, %v849
        %v1090 = vpack.c.b16 %v854, %v850
        %v1091 = vpack.c.b16 %v855, %v851
        %v1092 = vpack.c.b16 %v856, %v852
        %v1093 = vpack.c.b16 %v861, %v857
        %v1094 = vpack.c.b16 %v862, %v858
        %v1095 = vpack.c.b16 %v863, %v859
        %v1096 = vpack.c.b16 %v864, %v860
        %v1097 = vpack.c.b16 %v869, %v865
        %v1098 = vpack.c.b16 %v870, %v866
        %v1099 = vpack.c.b16 %v871, %v867
        %v1100 = vpack.c.b16 %v872, %v868
        %v1101 = vpack.c.b16 %v877, %v873
        %v1102 = vpack.c.b16 %v878, %v874
        %v1103 = vpack.c.b16 %v879, %v875
        %v1104 = vpack.c.b16 %v880, %v876
        %v1105 = vpack.c.b16 %v885, %v881
        %v1106 = vpack.c.b16 %v886, %v882
        %v1107 = vpack.c.b16 %v887, %v883
        %v1108 = vpack.c.b16 %v888, %v884
        %v1109 = vpack.c.b16 %v893, %v889
        %v1110 = vpack.c.b16 %v894, %v890
        %v1111 = vpack.c.b16 %v895, %v891
        %v1112 = vpack.c.b16 %v896, %v892
        %v1113 = vpack.c.b16 %v901, %v897
        %v1114 = vpack.c.b16 %v902, %v898
        %v1115 = vpack.c.b16 %v903, %v899
        %v1116 = vpack.c.b16 %v904, %v900
        %v1117 = vpack.c.b16 %v909, %v905
        %v1118 = vpack.c.b16 %v910, %v906
        %v1119 = vpack.c.b16 %v911, %v907
        %v1120 = vpack.c.b16 %v912, %v908
        %v1121 = vpack.c.b16 %v917, %v913
        %v1122 = vpack.c.b16 %v918, %v914
        %v1123 = vpack.c.b16 %v919, %v915
        %v1124 = vpack.c.b16 %v920, %v916
        %v1125 = vpack.c.b16 %v925, %v921
        %v1126 = vpack.c.b16 %v926, %v922
        %v1127 = vpack.c.b16 %v927, %v923
        %v1128 = vpack.c.b16 %v928, %v924
        %v1129 = vpack.c.b16 %v933, %v929
        %v1130 = vpack.c.b16 %v934, %v930
        %v1131 = vpack.c.b16 %v935, %v931
        %v1132 = vpack.c.b16 %v936, %v932
        %v1133 = vpack.c.b16 %v941, %v937
        %v1134 = vpack.c.b16 %v942, %v938
        %v1135 = vpack.c.b16 %v943, %v939
        %v1136 = vpack.c.b16 %v944, %v940
        %v1137 = vpack.c.b16 %v949, %v945
        %v1138 = vpack.c.b16 %v950, %v946
        %v1139 = vpack.c.b16 %v951, %v947
        %v1140 = vpack.c.b16 %v952, %v948
        %v1141 = vpack.c.b16 %v957, %v953
        %v1142 = vpack.c.b16 %v958, %v954
        %v1143 = vpack.c.b16 %v959, %v955
        %v1144 = vpack.c.b16 %v960, %v956
        %v1145 = vpack.c.b16 %v965, %v961
        %v1146 = vpack.c.b16 %v966, %v962
        %v1147 = vpack.c.b16 %v967, %v963
        %v1148 = vpack.c.b16 %v968, %v964
        %v1149 = vpack.c.b16 %v973, %v969
        %v1150 = vpack.c.b16 %v974, %v970
        %v1151 = vpack.c.b16 %v975, %v971
        %v1152 = vpack.c.b16 %v976, %v972
        %v1153 = vpack.c.b16 %v981, %v977
        %v1154 = vpack.c.b16 %v982, %v978
        %v1155 = vpack.c.b16 %v983, %v979
        %v1156 = vpack.c.b16 %v984, %v980
        %v1157 = vpack.c.b16 %v989, %v985
        %v1158 = vpack.c.b16 %v990, %v986
        %v1159 = vpack.c.b16 %v991, %v987
        %v1160 = vpack.c.b16 %v992, %v988
        %v1161 = vpack.c.b16 %v997, %v993
        %v1162 = vpack.c.b16 %v998, %v994
        %v1163 = vpack.c.b16 %v999, %v995
        %v1164 = vpack.c.b16 %v1000, %v996
        %v1165 = vpack.c.b16 %v1005, %v1001
        %v1166 = vpack.c.b16 %v1006, %v1002
        %v1167 = vpack.c.b16 %v1007, %v1003
        %v1168 = vpack.c.b16 %v1008, %v1004
        %v1169 = vpack.c.b16 %v1013, %v1009
        %v1170 = vpack.c.b16 %v1014, %v1010
        %v1171 = vpack.c.b16 %v1015, %v1011
        %v1172 = vpack.c.b16 %v1016, %v1012
        %v1173 = vpack.c.b16 %v1021, %v1017
        %v1174 = vpack.c.b16 %v1022, %v1018
        %v1175 = vpack.c.b16 %v1023, %v1019
        %v1176 = vpack.c.b16 %v1024, %v1020
        %v1177 = vpack.c.b16 %v1029, %v1025
        %v1178 = vpack.c.b16 %v1030, %v1026
        %v1179 = vpack.c.b16 %v1031, %v1027
        %v1180 = vpack.c.b16 %v1032, %v1028
        %v1181 = vpack.c.b16 %v1037, %v1033
        %v1182 = vpack.c.b16 %v1038, %v1034
        %v1183 = vpack.c.b16 %v1039, %v1035
        %v1184 = vpack.c.b16 %v1040, %v1036
        %v1185 = vpack.c.b16 %v1045, %v1041
        %v1186 = vpack.c.b16 %v1046, %v1042
        %v1187 = vpack.c.b16 %v1047, %v1043
        %v1188 = vpack.c.b16 %v1048, %v1044
        %v1189 = vpack.c.b16 %v1053, %v1049
        %v1190 = vpack.c.b16 %v1054, %v1050
        %v1191 = vpack.c.b16 %v1055, %v1051
        %v1192 = vpack.c.b16 %v1056, %v1052
        %v1193 = vpack.c.b16 %v1061, %v1057
        %v1194 = vpack.c.b16 %v1062, %v1058
        %v1195 = vpack.c.b16 %v1063, %v1059
        %v1196 = vpack.c.b16 %v1064, %v1060
        %v1197 = vpack.c.b16 %v1069, %v1065
        %v1198 = vpack.c.b16 %v1070, %v1066
        %v1199 = vpack.c.b16 %v1071, %v1067
        %v1200 = vpack.c.b16 %v1072, %v1068
        %1329 = vmatprep.subr.bf16.mxu0 %v1074
        %1330 = vmatpush1.bf16.msra.mxu0 %v1073
        %1331 = vmatprep.subr.bf16.mxu0 %v1078
        %1332 = vmatpush1.bf16.msra.mxu0 %v1077
        %1333 = vmatprep.subr.bf16.mxu0 %v1082
        %1334 = vmatpush1.bf16.msra.mxu0 %v1081
        %1335 = vmatprep.subr.bf16.mxu0 %v1086
        %1336 = vmatpush1.bf16.msra.mxu0 %v1085
        %1337 = vmatprep.subr.bf16.mxu0 %v1090
        %1338 = vmatpush1.bf16.msra.mxu0 %v1089
        %1339 = vmatprep.subr.bf16.mxu0 %v1094
        %1340 = vmatpush1.bf16.msra.mxu0 %v1093
        %1341 = vmatprep.subr.bf16.mxu0 %v1098
        %1342 = vmatpush1.bf16.msra.mxu0 %v1097
        %1343 = vmatprep.subr.bf16.mxu0 %v1102
        %1344 = vmatpush1.bf16.msra.mxu0 %v1101
        %1345 = vmatprep.subr.bf16.mxu0 %v1106
        %1346 = vmatpush1.bf16.msra.mxu0 %v1105
        %1347 = vmatprep.subr.bf16.mxu0 %v1110
        %1348 = vmatpush1.bf16.msra.mxu0 %v1109
        %1349 = vmatprep.subr.bf16.mxu0 %v1114
        %1350 = vmatpush1.bf16.msra.mxu0 %v1113
        %1351 = vmatprep.subr.bf16.mxu0 %v1118
        %1352 = vmatpush1.bf16.msra.mxu0 %v1117
        %1353 = vmatprep.subr.bf16.mxu0 %v1122
        %1354 = vmatpush1.bf16.msra.mxu0 %v1121
        %1355 = vmatprep.subr.bf16.mxu0 %v1126
        %1356 = vmatpush1.bf16.msra.mxu0 %v1125
        %1357 = vmatprep.subr.bf16.mxu0 %v1130
        %1358 = vmatpush1.bf16.msra.mxu0 %v1129
        %1359 = vmatprep.subr.bf16.mxu0 %v1134
        %1360 = vmatpush1.bf16.msra.mxu0 %v1133
        %1361 = vmatprep.mubr.bf16.mxu0 %v339
        %1362 = vmatmul.mubr.bf16.gmra.mrb[0].mxu0 %v338
        %v1363 = vpop.f32.mrb[0].mxu0
        %v1364 = vadd.f32 0.0, %v1363
        %v1365 = vpop.f32.mrb[0].mxu0
        %v1366 = vadd.f32 0.0, %v1365
        %v1367 = vpop.f32.mrb[0].mxu0
        %v1368 = vadd.f32 0.0, %v1367
        %v1369 = vpop.f32.mrb[0].mxu0
        %v1370 = vadd.f32 0.0, %v1369
        %1371 = vdwg.mxu0
        %1372 = vmatprep.subr.bf16.mxu0 %v1138
        %1373 = vmatpush1.bf16.msra.mxu0 %v1137
        %1374 = vmatprep.subr.bf16.mxu0 %v1142
        %1375 = vmatpush1.bf16.msra.mxu0 %v1141
        %1376 = vmatprep.subr.bf16.mxu0 %v1146
        %1377 = vmatpush1.bf16.msra.mxu0 %v1145
        %1378 = vmatprep.subr.bf16.mxu0 %v1150
        %1379 = vmatpush1.bf16.msra.mxu0 %v1149
        %1380 = vmatprep.subr.bf16.mxu0 %v1154
        %1381 = vmatpush1.bf16.msra.mxu0 %v1153
        %1382 = vmatprep.subr.bf16.mxu0 %v1158
        %1383 = vmatpush1.bf16.msra.mxu0 %v1157
        %1384 = vmatprep.subr.bf16.mxu0 %v1162
        %1385 = vmatpush1.bf16.msra.mxu0 %v1161
        %1386 = vmatprep.subr.bf16.mxu0 %v1166
        %1387 = vmatpush1.bf16.msra.mxu0 %v1165
        %1388 = vmatprep.subr.bf16.mxu0 %v1170
        %1389 = vmatpush1.bf16.msra.mxu0 %v1169
        %1390 = vmatprep.subr.bf16.mxu0 %v1174
        %1391 = vmatpush1.bf16.msra.mxu0 %v1173
        %1392 = vmatprep.subr.bf16.mxu0 %v1178
        %1393 = vmatpush1.bf16.msra.mxu0 %v1177
        %1394 = vmatprep.subr.bf16.mxu0 %v1182
        %1395 = vmatpush1.bf16.msra.mxu0 %v1181
        %1396 = vmatprep.subr.bf16.mxu0 %v1186
        %1397 = vmatpush1.bf16.msra.mxu0 %v1185
        %1398 = vmatprep.subr.bf16.mxu0 %v1190
        %1399 = vmatpush1.bf16.msra.mxu0 %v1189
        %1400 = vmatprep.subr.bf16.mxu0 %v1194
        %1401 = vmatpush1.bf16.msra.mxu0 %v1193
        %1402 = vmatprep.subr.bf16.mxu0 %v1198
        %1403 = vmatpush1.bf16.msra.mxu0 %v1197
        %1404 = vmatprep.mubr.bf16.mxu0 %v341
        %1405 = vmatmul.mubr.bf16.gmra.mrb[0].mxu0 %v340
        %v1406 = vpop.f32.mrb[0].mxu0
        %v1407 = vadd.f32 %v1364, %v1406
        %v1408 = vpop.f32.mrb[0].mxu0
        %v1409 = vadd.f32 %v1366, %v1408
        %v1410 = vpop.f32.mrb[0].mxu0
        %v1411 = vadd.f32 %v1368, %v1410
        %v1412 = vpop.f32.mrb[0].mxu0
        %v1413 = vadd.f32 %v1370, %v1412
        %1414 = vdwg.mxu0
        %1415 = vmatprep.subr.bf16.mxu0 %v1076
        %1416 = vmatpush1.bf16.msra.mxu0 %v1075
        %1417 = vmatprep.subr.bf16.mxu0 %v1080
        %1418 = vmatpush1.bf16.msra.mxu0 %v1079
        %1419 = vmatprep.subr.bf16.mxu0 %v1084
        %1420 = vmatpush1.bf16.msra.mxu0 %v1083
        %1421 = vmatprep.subr.bf16.mxu0 %v1088
        %1422 = vmatpush1.bf16.msra.mxu0 %v1087
        %1423 = vmatprep.subr.bf16.mxu0 %v1092
        %1424 = vmatpush1.bf16.msra.mxu0 %v1091
        %1425 = vmatprep.subr.bf16.mxu0 %v1096
        %1426 = vmatpush1.bf16.msra.mxu0 %v1095
        %1427 = vmatprep.subr.bf16.mxu0 %v1100
        %1428 = vmatpush1.bf16.msra.mxu0 %v1099
        %1429 = vmatprep.subr.bf16.mxu0 %v1104
        %1430 = vmatpush1.bf16.msra.mxu0 %v1103
        %1431 = vmatprep.subr.bf16.mxu0 %v1108
        %1432 = vmatpush1.bf16.msra.mxu0 %v1107
        %1433 = vmatprep.subr.bf16.mxu0 %v1112
        %1434 = vmatpush1.bf16.msra.mxu0 %v1111
        %1435 = vmatprep.subr.bf16.mxu0 %v1116
        %1436 = vmatpush1.bf16.msra.mxu0 %v1115
        %1437 = vmatprep.subr.bf16.mxu0 %v1120
        %1438 = vmatpush1.bf16.msra.mxu0 %v1119
        %1439 = vmatprep.subr.bf16.mxu0 %v1124
        %1440 = vmatpush1.bf16.msra.mxu0 %v1123
        %1441 = vmatprep.subr.bf16.mxu0 %v1128
        %1442 = vmatpush1.bf16.msra.mxu0 %v1127
        %1443 = vmatprep.subr.bf16.mxu0 %v1132
        %1444 = vmatpush1.bf16.msra.mxu0 %v1131
        %1445 = vmatprep.subr.bf16.mxu0 %v1136
        %1446 = vmatpush1.bf16.msra.mxu0 %v1135
        %1447 = vmatprep.mubr.bf16.mxu0 %v339
        %1448 = vmatmul.mubr.bf16.gmra.mrb[0].mxu0 %v338
        %v1449 = vpop.f32.mrb[0].mxu0
        %v1450 = vadd.f32 0.0, %v1449
        %v1451 = vpop.f32.mrb[0].mxu0
        %v1452 = vadd.f32 0.0, %v1451
        %v1453 = vpop.f32.mrb[0].mxu0
        %v1454 = vadd.f32 0.0, %v1453
        %v1455 = vpop.f32.mrb[0].mxu0
        %v1456 = vadd.f32 0.0, %v1455
        %1457 = vdwg.mxu0
        %1458 = vmatprep.subr.bf16.mxu0 %v1140
        %1459 = vmatpush1.bf16.msra.mxu0 %v1139
        %1460 = vmatprep.subr.bf16.mxu0 %v1144
        %1461 = vmatpush1.bf16.msra.mxu0 %v1143
        %1462 = vmatprep.subr.bf16.mxu0 %v1148
        %1463 = vmatpush1.bf16.msra.mxu0 %v1147
        %1464 = vmatprep.subr.bf16.mxu0 %v1152
        %1465 = vmatpush1.bf16.msra.mxu0 %v1151
        %1466 = vmatprep.subr.bf16.mxu0 %v1156
        %1467 = vmatpush1.bf16.msra.mxu0 %v1155
        %1468 = vmatprep.subr.bf16.mxu0 %v1160
        %1469 = vmatpush1.bf16.msra.mxu0 %v1159
        %1470 = vmatprep.subr.bf16.mxu0 %v1164
        %1471 = vmatpush1.bf16.msra.mxu0 %v1163
        %1472 = vmatprep.subr.bf16.mxu0 %v1168
        %1473 = vmatpush1.bf16.msra.mxu0 %v1167
        %1474 = vmatprep.subr.bf16.mxu0 %v1172
        %1475 = vmatpush1.bf16.msra.mxu0 %v1171
        %1476 = vmatprep.subr.bf16.mxu0 %v1176
        %1477 = vmatpush1.bf16.msra.mxu0 %v1175
        %1478 = vmatprep.subr.bf16.mxu0 %v1180
        %1479 = vmatpush1.bf16.msra.mxu0 %v1179
        %1480 = vmatprep.subr.bf16.mxu0 %v1184
        %1481 = vmatpush1.bf16.msra.mxu0 %v1183
        %1482 = vmatprep.subr.bf16.mxu0 %v1188
        %1483 = vmatpush1.bf16.msra.mxu0 %v1187
        %1484 = vmatprep.subr.bf16.mxu0 %v1192
        %1485 = vmatpush1.bf16.msra.mxu0 %v1191
        %1486 = vmatprep.subr.bf16.mxu0 %v1196
        %1487 = vmatpush1.bf16.msra.mxu0 %v1195
        %1488 = vmatprep.subr.bf16.mxu0 %v1200
        %1489 = vmatpush1.bf16.msra.mxu0 %v1199
        %1490 = vmatprep.mubr.bf16.mxu0 %v341
        %1491 = vmatmul.mubr.bf16.gmra.mrb[0].mxu0 %v340
        %v1492 = vpop.f32.mrb[0].mxu0
        %v1493 = vadd.f32 %v1450, %v1492
        %v1494 = vpop.f32.mrb[0].mxu0
        %v1495 = vadd.f32 %v1452, %v1494
        %v1496 = vpop.f32.mrb[0].mxu0
        %v1497 = vadd.f32 %v1454, %v1496
        %v1498 = vpop.f32.mrb[0].mxu0
        %v1499 = vadd.f32 %v1456, %v1498
        %1500 = vdwg.mxu0
        %v1629 = vunpack.c.l.b16 %v432
        %v1630 = vunpack.c.h.b16 %v432
        %v1631 = vunpack.c.l.b16 %v433
        %v1632 = vunpack.c.h.b16 %v433
        %v1633 = vunpack.c.l.b16 %v434
        %v1634 = vunpack.c.h.b16 %v434
        %v1635 = vunpack.c.l.b16 %v435
        %v1636 = vunpack.c.h.b16 %v435
        %v1637 = vunpack.c.l.b16 %v436
        %v1638 = vunpack.c.h.b16 %v436
        %v1639 = vunpack.c.l.b16 %v437
        %v1640 = vunpack.c.h.b16 %v437
        %v1641 = vunpack.c.l.b16 %v438
        %v1642 = vunpack.c.h.b16 %v438
        %v1643 = vunpack.c.l.b16 %v439
        %v1644 = vunpack.c.h.b16 %v439
        %v1645 = vunpack.c.l.b16 %v440
        %v1646 = vunpack.c.h.b16 %v440
        %v1647 = vunpack.c.l.b16 %v441
        %v1648 = vunpack.c.h.b16 %v441
        %v1649 = vunpack.c.l.b16 %v442
        %v1650 = vunpack.c.h.b16 %v442
        %v1651 = vunpack.c.l.b16 %v443
        %v1652 = vunpack.c.h.b16 %v443
        %v1653 = vunpack.c.l.b16 %v444
        %v1654 = vunpack.c.h.b16 %v444
        %v1655 = vunpack.c.l.b16 %v445
        %v1656 = vunpack.c.h.b16 %v445
        %v1657 = vunpack.c.l.b16 %v446
        %v1658 = vunpack.c.h.b16 %v446
        %v1659 = vunpack.c.l.b16 %v447
        %v1660 = vunpack.c.h.b16 %v447
        %v1661 = vunpack.c.l.b16 %v448
        %v1662 = vunpack.c.h.b16 %v448
        %v1663 = vunpack.c.l.b16 %v449
        %v1664 = vunpack.c.h.b16 %v449
        %v1665 = vunpack.c.l.b16 %v450
        %v1666 = vunpack.c.h.b16 %v450
        %v1667 = vunpack.c.l.b16 %v451
        %v1668 = vunpack.c.h.b16 %v451
        %v1669 = vunpack.c.l.b16 %v452
        %v1670 = vunpack.c.h.b16 %v452
        %v1671 = vunpack.c.l.b16 %v453
        %v1672 = vunpack.c.h.b16 %v453
        %v1673 = vunpack.c.l.b16 %v454
        %v1674 = vunpack.c.h.b16 %v454
        %v1675 = vunpack.c.l.b16 %v455
        %v1676 = vunpack.c.h.b16 %v455
        %v1677 = vunpack.c.l.b16 %v456
        %v1678 = vunpack.c.h.b16 %v456
        %v1679 = vunpack.c.l.b16 %v457
        %v1680 = vunpack.c.h.b16 %v457
        %v1681 = vunpack.c.l.b16 %v458
        %v1682 = vunpack.c.h.b16 %v458
        %v1683 = vunpack.c.l.b16 %v459
        %v1684 = vunpack.c.h.b16 %v459
        %v1685 = vunpack.c.l.b16 %v460
        %v1686 = vunpack.c.h.b16 %v460
        %v1687 = vunpack.c.l.b16 %v461
        %v1688 = vunpack.c.h.b16 %v461
        %v1689 = vunpack.c.l.b16 %v462
        %v1690 = vunpack.c.h.b16 %v462
        %v1691 = vunpack.c.l.b16 %v463
        %v1692 = vunpack.c.h.b16 %v463
        %v1693 = vunpack.c.l.b16 %v464
        %v1694 = vunpack.c.h.b16 %v464
        %v1695 = vunpack.c.l.b16 %v465
        %v1696 = vunpack.c.h.b16 %v465
        %v1697 = vunpack.c.l.b16 %v466
        %v1698 = vunpack.c.h.b16 %v466
        %v1699 = vunpack.c.l.b16 %v467
        %v1700 = vunpack.c.h.b16 %v467
        %v1701 = vunpack.c.l.b16 %v468
        %v1702 = vunpack.c.h.b16 %v468
        %v1703 = vunpack.c.l.b16 %v469
        %v1704 = vunpack.c.h.b16 %v469
        %v1705 = vunpack.c.l.b16 %v470
        %v1706 = vunpack.c.h.b16 %v470
        %v1707 = vunpack.c.l.b16 %v471
        %v1708 = vunpack.c.h.b16 %v471
        %v1709 = vunpack.c.l.b16 %v472
        %v1710 = vunpack.c.h.b16 %v472
        %v1711 = vunpack.c.l.b16 %v473
        %v1712 = vunpack.c.h.b16 %v473
        %v1713 = vunpack.c.l.b16 %v474
        %v1714 = vunpack.c.h.b16 %v474
        %v1715 = vunpack.c.l.b16 %v475
        %v1716 = vunpack.c.h.b16 %v475
        %v1717 = vunpack.c.l.b16 %v476
        %v1718 = vunpack.c.h.b16 %v476
        %v1719 = vunpack.c.l.b16 %v477
        %v1720 = vunpack.c.h.b16 %v477
        %v1721 = vunpack.c.l.b16 %v478
        %v1722 = vunpack.c.h.b16 %v478
        %v1723 = vunpack.c.l.b16 %v479
        %v1724 = vunpack.c.h.b16 %v479
        %v1725 = vunpack.c.l.b16 %v480
        %v1726 = vunpack.c.h.b16 %v480
        %v1727 = vunpack.c.l.b16 %v481
        %v1728 = vunpack.c.h.b16 %v481
        %v1729 = vunpack.c.l.b16 %v482
        %v1730 = vunpack.c.h.b16 %v482
        %v1731 = vunpack.c.l.b16 %v483
        %v1732 = vunpack.c.h.b16 %v483
        %v1733 = vunpack.c.l.b16 %v484
        %v1734 = vunpack.c.h.b16 %v484
        %v1735 = vunpack.c.l.b16 %v485
        %v1736 = vunpack.c.h.b16 %v485
        %v1737 = vunpack.c.l.b16 %v486
        %v1738 = vunpack.c.h.b16 %v486
        %v1739 = vunpack.c.l.b16 %v487
        %v1740 = vunpack.c.h.b16 %v487
        %v1741 = vunpack.c.l.b16 %v488
        %v1742 = vunpack.c.h.b16 %v488
        %v1743 = vunpack.c.l.b16 %v489
        %v1744 = vunpack.c.h.b16 %v489
        %v1745 = vunpack.c.l.b16 %v490
        %v1746 = vunpack.c.h.b16 %v490
        %v1747 = vunpack.c.l.b16 %v491
        %v1748 = vunpack.c.h.b16 %v491
        %v1749 = vunpack.c.l.b16 %v492
        %v1750 = vunpack.c.h.b16 %v492
        %v1751 = vunpack.c.l.b16 %v493
        %v1752 = vunpack.c.h.b16 %v493
        %v1753 = vunpack.c.l.b16 %v494
        %v1754 = vunpack.c.h.b16 %v494
        %v1755 = vunpack.c.l.b16 %v495
        %v1756 = vunpack.c.h.b16 %v495
        %v1757 = vunpack.c.l.b16 %v496
        %v1758 = vunpack.c.h.b16 %v496
        %v1759 = vunpack.c.l.b16 %v497
        %v1760 = vunpack.c.h.b16 %v497
        %v1761 = vunpack.c.l.b16 %v498
        %v1762 = vunpack.c.h.b16 %v498
        %v1763 = vunpack.c.l.b16 %v499
        %v1764 = vunpack.c.h.b16 %v499
        %v1765 = vunpack.c.l.b16 %v500
        %v1766 = vunpack.c.h.b16 %v500
        %v1767 = vunpack.c.l.b16 %v501
        %v1768 = vunpack.c.h.b16 %v501
        %v1769 = vunpack.c.l.b16 %v502
        %v1770 = vunpack.c.h.b16 %v502
        %v1771 = vunpack.c.l.b16 %v503
        %v1772 = vunpack.c.h.b16 %v503
        %v1773 = vunpack.c.l.b16 %v504
        %v1774 = vunpack.c.h.b16 %v504
        %v1775 = vunpack.c.l.b16 %v505
        %v1776 = vunpack.c.h.b16 %v505
        %v1777 = vunpack.c.l.b16 %v506
        %v1778 = vunpack.c.h.b16 %v506
        %v1779 = vunpack.c.l.b16 %v507
        %v1780 = vunpack.c.h.b16 %v507
        %v1781 = vunpack.c.l.b16 %v508
        %v1782 = vunpack.c.h.b16 %v508
        %v1783 = vunpack.c.l.b16 %v509
        %v1784 = vunpack.c.h.b16 %v509
        %v1785 = vunpack.c.l.b16 %v510
        %v1786 = vunpack.c.h.b16 %v510
        %v1787 = vunpack.c.l.b16 %v511
        %v1788 = vunpack.c.h.b16 %v511
        %v1789 = vunpack.c.l.b16 %v512
        %v1790 = vunpack.c.h.b16 %v512
        %v1791 = vunpack.c.l.b16 %v513
        %v1792 = vunpack.c.h.b16 %v513
        %v1793 = vunpack.c.l.b16 %v514
        %v1794 = vunpack.c.h.b16 %v514
        %v1795 = vunpack.c.l.b16 %v515
        %v1796 = vunpack.c.h.b16 %v515
        %v1797 = vunpack.c.l.b16 %v516
        %v1798 = vunpack.c.h.b16 %v516
        %v1799 = vunpack.c.l.b16 %v517
        %v1800 = vunpack.c.h.b16 %v517
        %v1801 = vunpack.c.l.b16 %v518
        %v1802 = vunpack.c.h.b16 %v518
        %v1803 = vunpack.c.l.b16 %v519
        %v1804 = vunpack.c.h.b16 %v519
        %v1805 = vunpack.c.l.b16 %v520
        %v1806 = vunpack.c.h.b16 %v520
        %v1807 = vunpack.c.l.b16 %v521
        %v1808 = vunpack.c.h.b16 %v521
        %v1809 = vunpack.c.l.b16 %v522
        %v1810 = vunpack.c.h.b16 %v522
        %v1811 = vunpack.c.l.b16 %v523
        %v1812 = vunpack.c.h.b16 %v523
        %v1813 = vunpack.c.l.b16 %v524
        %v1814 = vunpack.c.h.b16 %v524
        %v1815 = vunpack.c.l.b16 %v525
        %v1816 = vunpack.c.h.b16 %v525
        %v1817 = vunpack.c.l.b16 %v526
        %v1818 = vunpack.c.h.b16 %v526
        %v1819 = vunpack.c.l.b16 %v527
        %v1820 = vunpack.c.h.b16 %v527
        %v1821 = vunpack.c.l.b16 %v528
        %v1822 = vunpack.c.h.b16 %v528
        %v1823 = vunpack.c.l.b16 %v529
        %v1824 = vunpack.c.h.b16 %v529
        %v1825 = vunpack.c.l.b16 %v530
        %v1826 = vunpack.c.h.b16 %v530
        %v1827 = vunpack.c.l.b16 %v531
        %v1828 = vunpack.c.h.b16 %v531
        %v1829 = vunpack.c.l.b16 %v532
        %v1830 = vunpack.c.h.b16 %v532
        %v1831 = vunpack.c.l.b16 %v533
        %v1832 = vunpack.c.h.b16 %v533
        %v1833 = vunpack.c.l.b16 %v534
        %v1834 = vunpack.c.h.b16 %v534
        %v1835 = vunpack.c.l.b16 %v535
        %v1836 = vunpack.c.h.b16 %v535
        %v1837 = vunpack.c.l.b16 %v536
        %v1838 = vunpack.c.h.b16 %v536
        %v1839 = vunpack.c.l.b16 %v537
        %v1840 = vunpack.c.h.b16 %v537
        %v1841 = vunpack.c.l.b16 %v538
        %v1842 = vunpack.c.h.b16 %v538
        %v1843 = vunpack.c.l.b16 %v539
        %v1844 = vunpack.c.h.b16 %v539
        %v1845 = vunpack.c.l.b16 %v540
        %v1846 = vunpack.c.h.b16 %v540
        %v1847 = vunpack.c.l.b16 %v541
        %v1848 = vunpack.c.h.b16 %v541
        %v1849 = vunpack.c.l.b16 %v542
        %v1850 = vunpack.c.h.b16 %v542
        %v1851 = vunpack.c.l.b16 %v543
        %v1852 = vunpack.c.h.b16 %v543
        %v1853 = vunpack.c.l.b16 %v544
        %v1854 = vunpack.c.h.b16 %v544
        %v1855 = vunpack.c.l.b16 %v545
        %v1856 = vunpack.c.h.b16 %v545
        %v1857 = vunpack.c.l.b16 %v546
        %v1858 = vunpack.c.h.b16 %v546
        %v1859 = vunpack.c.l.b16 %v547
        %v1860 = vunpack.c.h.b16 %v547
        %v1861 = vunpack.c.l.b16 %v548
        %v1862 = vunpack.c.h.b16 %v548
        %v1863 = vunpack.c.l.b16 %v549
        %v1864 = vunpack.c.h.b16 %v549
        %v1865 = vunpack.c.l.b16 %v550
        %v1866 = vunpack.c.h.b16 %v550
        %v1867 = vunpack.c.l.b16 %v551
        %v1868 = vunpack.c.h.b16 %v551
        %v1869 = vunpack.c.l.b16 %v552
        %v1870 = vunpack.c.h.b16 %v552
        %v1871 = vunpack.c.l.b16 %v553
        %v1872 = vunpack.c.h.b16 %v553
        %v1873 = vunpack.c.l.b16 %v554
        %v1874 = vunpack.c.h.b16 %v554
        %v1875 = vunpack.c.l.b16 %v555
        %v1876 = vunpack.c.h.b16 %v555
        %v1877 = vunpack.c.l.b16 %v556
        %v1878 = vunpack.c.h.b16 %v556
        %v1879 = vunpack.c.l.b16 %v557
        %v1880 = vunpack.c.h.b16 %v557
        %v1881 = vunpack.c.l.b16 %v558
        %v1882 = vunpack.c.h.b16 %v558
        %v1883 = vunpack.c.l.b16 %v559
        %v1884 = vunpack.c.h.b16 %v559
        %v1885 = vpack.c.b16 %v1633, %v1629
        %v1886 = vpack.c.b16 %v1634, %v1630
        %v1887 = vpack.c.b16 %v1635, %v1631
        %v1888 = vpack.c.b16 %v1636, %v1632
        %v1889 = vpack.c.b16 %v1641, %v1637
        %v1890 = vpack.c.b16 %v1642, %v1638
        %v1891 = vpack.c.b16 %v1643, %v1639
        %v1892 = vpack.c.b16 %v1644, %v1640
        %v1893 = vpack.c.b16 %v1649, %v1645
        %v1894 = vpack.c.b16 %v1650, %v1646
        %v1895 = vpack.c.b16 %v1651, %v1647
        %v1896 = vpack.c.b16 %v1652, %v1648
        %v1897 = vpack.c.b16 %v1657, %v1653
        %v1898 = vpack.c.b16 %v1658, %v1654
        %v1899 = vpack.c.b16 %v1659, %v1655
        %v1900 = vpack.c.b16 %v1660, %v1656
        %v1901 = vpack.c.b16 %v1665, %v1661
        %v1902 = vpack.c.b16 %v1666, %v1662
        %v1903 = vpack.c.b16 %v1667, %v1663
        %v1904 = vpack.c.b16 %v1668, %v1664
        %v1905 = vpack.c.b16 %v1673, %v1669
        %v1906 = vpack.c.b16 %v1674, %v1670
        %v1907 = vpack.c.b16 %v1675, %v1671
        %v1908 = vpack.c.b16 %v1676, %v1672
        %v1909 = vpack.c.b16 %v1681, %v1677
        %v1910 = vpack.c.b16 %v1682, %v1678
        %v1911 = vpack.c.b16 %v1683, %v1679
        %v1912 = vpack.c.b16 %v1684, %v1680
        %v1913 = vpack.c.b16 %v1689, %v1685
        %v1914 = vpack.c.b16 %v1690, %v1686
        %v1915 = vpack.c.b16 %v1691, %v1687
        %v1916 = vpack.c.b16 %v1692, %v1688
        %v1917 = vpack.c.b16 %v1697, %v1693
        %v1918 = vpack.c.b16 %v1698, %v1694
        %v1919 = vpack.c.b16 %v1699, %v1695
        %v1920 = vpack.c.b16 %v1700, %v1696
        %v1921 = vpack.c.b16 %v1705, %v1701
        %v1922 = vpack.c.b16 %v1706, %v1702
        %v1923 = vpack.c.b16 %v1707, %v1703
        %v1924 = vpack.c.b16 %v1708, %v1704
        %v1925 = vpack.c.b16 %v1713, %v1709
        %v1926 = vpack.c.b16 %v1714, %v1710
        %v1927 = vpack.c.b16 %v1715, %v1711
        %v1928 = vpack.c.b16 %v1716, %v1712
        %v1929 = vpack.c.b16 %v1721, %v1717
        %v1930 = vpack.c.b16 %v1722, %v1718
        %v1931 = vpack.c.b16 %v1723, %v1719
        %v1932 = vpack.c.b16 %v1724, %v1720
        %v1933 = vpack.c.b16 %v1729, %v1725
        %v1934 = vpack.c.b16 %v1730, %v1726
        %v1935 = vpack.c.b16 %v1731, %v1727
        %v1936 = vpack.c.b16 %v1732, %v1728
        %v1937 = vpack.c.b16 %v1737, %v1733
        %v1938 = vpack.c.b16 %v1738, %v1734
        %v1939 = vpack.c.b16 %v1739, %v1735
        %v1940 = vpack.c.b16 %v1740, %v1736
        %v1941 = vpack.c.b16 %v1745, %v1741
        %v1942 = vpack.c.b16 %v1746, %v1742
        %v1943 = vpack.c.b16 %v1747, %v1743
        %v1944 = vpack.c.b16 %v1748, %v1744
        %v1945 = vpack.c.b16 %v1753, %v1749
        %v1946 = vpack.c.b16 %v1754, %v1750
        %v1947 = vpack.c.b16 %v1755, %v1751
        %v1948 = vpack.c.b16 %v1756, %v1752
        %v1949 = vpack.c.b16 %v1761, %v1757
        %v1950 = vpack.c.b16 %v1762, %v1758
        %v1951 = vpack.c.b16 %v1763, %v1759
        %v1952 = vpack.c.b16 %v1764, %v1760
        %v1953 = vpack.c.b16 %v1769, %v1765
        %v1954 = vpack.c.b16 %v1770, %v1766
        %v1955 = vpack.c.b16 %v1771, %v1767
        %v1956 = vpack.c.b16 %v1772, %v1768
        %v1957 = vpack.c.b16 %v1777, %v1773
        %v1958 = vpack.c.b16 %v1778, %v1774
        %v1959 = vpack.c.b16 %v1779, %v1775
        %v1960 = vpack.c.b16 %v1780, %v1776
        %v1961 = vpack.c.b16 %v1785, %v1781
        %v1962 = vpack.c.b16 %v1786, %v1782
        %v1963 = vpack.c.b16 %v1787, %v1783
        %v1964 = vpack.c.b16 %v1788, %v1784
        %v1965 = vpack.c.b16 %v1793, %v1789
        %v1966 = vpack.c.b16 %v1794, %v1790
        %v1967 = vpack.c.b16 %v1795, %v1791
        %v1968 = vpack.c.b16 %v1796, %v1792
        %v1969 = vpack.c.b16 %v1801, %v1797
        %v1970 = vpack.c.b16 %v1802, %v1798
        %v1971 = vpack.c.b16 %v1803, %v1799
        %v1972 = vpack.c.b16 %v1804, %v1800
        %v1973 = vpack.c.b16 %v1809, %v1805
        %v1974 = vpack.c.b16 %v1810, %v1806
        %v1975 = vpack.c.b16 %v1811, %v1807
        %v1976 = vpack.c.b16 %v1812, %v1808
        %v1977 = vpack.c.b16 %v1817, %v1813
        %v1978 = vpack.c.b16 %v1818, %v1814
        %v1979 = vpack.c.b16 %v1819, %v1815
        %v1980 = vpack.c.b16 %v1820, %v1816
        %v1981 = vpack.c.b16 %v1825, %v1821
        %v1982 = vpack.c.b16 %v1826, %v1822
        %v1983 = vpack.c.b16 %v1827, %v1823
        %v1984 = vpack.c.b16 %v1828, %v1824
        %v1985 = vpack.c.b16 %v1833, %v1829
        %v1986 = vpack.c.b16 %v1834, %v1830
        %v1987 = vpack.c.b16 %v1835, %v1831
        %v1988 = vpack.c.b16 %v1836, %v1832
        %v1989 = vpack.c.b16 %v1841, %v1837
        %v1990 = vpack.c.b16 %v1842, %v1838
        %v1991 = vpack.c.b16 %v1843, %v1839
        %v1992 = vpack.c.b16 %v1844, %v1840
        %v1993 = vpack.c.b16 %v1849, %v1845
        %v1994 = vpack.c.b16 %v1850, %v1846
        %v1995 = vpack.c.b16 %v1851, %v1847
        %v1996 = vpack.c.b16 %v1852, %v1848
        %v1997 = vpack.c.b16 %v1857, %v1853
        %v1998 = vpack.c.b16 %v1858, %v1854
        %v1999 = vpack.c.b16 %v1859, %v1855
        %v2000 = vpack.c.b16 %v1860, %v1856
        %v2001 = vpack.c.b16 %v1865, %v1861
        %v2002 = vpack.c.b16 %v1866, %v1862
        %v2003 = vpack.c.b16 %v1867, %v1863
        %v2004 = vpack.c.b16 %v1868, %v1864
        %v2005 = vpack.c.b16 %v1873, %v1869
        %v2006 = vpack.c.b16 %v1874, %v1870
        %v2007 = vpack.c.b16 %v1875, %v1871
        %v2008 = vpack.c.b16 %v1876, %v1872
        %v2009 = vpack.c.b16 %v1881, %v1877
        %v2010 = vpack.c.b16 %v1882, %v1878
        %v2011 = vpack.c.b16 %v1883, %v1879
        %v2012 = vpack.c.b16 %v1884, %v1880
        %2141 = vmatprep.subr.bf16.mxu0 %v1886
        %2142 = vmatpush1.bf16.msra.mxu0 %v1885
        %2143 = vmatprep.subr.bf16.mxu0 %v1890
        %2144 = vmatpush1.bf16.msra.mxu0 %v1889
        %2145 = vmatprep.subr.bf16.mxu0 %v1894
        %2146 = vmatpush1.bf16.msra.mxu0 %v1893
        %2147 = vmatprep.subr.bf16.mxu0 %v1898
        %2148 = vmatpush1.bf16.msra.mxu0 %v1897
        %2149 = vmatprep.subr.bf16.mxu0 %v1902
        %2150 = vmatpush1.bf16.msra.mxu0 %v1901
        %2151 = vmatprep.subr.bf16.mxu0 %v1906
        %2152 = vmatpush1.bf16.msra.mxu0 %v1905
        %2153 = vmatprep.subr.bf16.mxu0 %v1910
        %2154 = vmatpush1.bf16.msra.mxu0 %v1909
        %2155 = vmatprep.subr.bf16.mxu0 %v1914
        %2156 = vmatpush1.bf16.msra.mxu0 %v1913
        %2157 = vmatprep.subr.bf16.mxu0 %v1918
        %2158 = vmatpush1.bf16.msra.mxu0 %v1917
        %2159 = vmatprep.subr.bf16.mxu0 %v1922
        %2160 = vmatpush1.bf16.msra.mxu0 %v1921
        %2161 = vmatprep.subr.bf16.mxu0 %v1926
        %2162 = vmatpush1.bf16.msra.mxu0 %v1925
        %2163 = vmatprep.subr.bf16.mxu0 %v1930
        %2164 = vmatpush1.bf16.msra.mxu0 %v1929
        %2165 = vmatprep.subr.bf16.mxu0 %v1934
        %2166 = vmatpush1.bf16.msra.mxu0 %v1933
        %2167 = vmatprep.subr.bf16.mxu0 %v1938
        %2168 = vmatpush1.bf16.msra.mxu0 %v1937
        %2169 = vmatprep.subr.bf16.mxu0 %v1942
        %2170 = vmatpush1.bf16.msra.mxu0 %v1941
        %2171 = vmatprep.subr.bf16.mxu0 %v1946
        %2172 = vmatpush1.bf16.msra.mxu0 %v1945
        %2173 = vmatprep.mubr.bf16.mxu0 %v394
        %2174 = vmatmul.mubr.bf16.gmra.mrb[0].mxu0 %v393
        %v2175 = vpop.f32.mrb[0].mxu0
        %v2176 = vadd.f32 %v1407, %v2175
        %v2177 = vpop.f32.mrb[0].mxu0
        %v2178 = vadd.f32 %v1409, %v2177
        %v2179 = vpop.f32.mrb[0].mxu0
        %v2180 = vadd.f32 %v1411, %v2179
        %v2181 = vpop.f32.mrb[0].mxu0
        %v2182 = vadd.f32 %v1413, %v2181
        %2183 = vdwg.mxu0
        %2184 = vmatprep.subr.bf16.mxu0 %v1950
        %2185 = vmatpush1.bf16.msra.mxu0 %v1949
        %2186 = vmatprep.subr.bf16.mxu0 %v1954
        %2187 = vmatpush1.bf16.msra.mxu0 %v1953
        %2188 = vmatprep.subr.bf16.mxu0 %v1958
        %2189 = vmatpush1.bf16.msra.mxu0 %v1957
        %2190 = vmatprep.subr.bf16.mxu0 %v1962
        %2191 = vmatpush1.bf16.msra.mxu0 %v1961
        %2192 = vmatprep.subr.bf16.mxu0 %v1966
        %2193 = vmatpush1.bf16.msra.mxu0 %v1965
        %2194 = vmatprep.subr.bf16.mxu0 %v1970
        %2195 = vmatpush1.bf16.msra.mxu0 %v1969
        %2196 = vmatprep.subr.bf16.mxu0 %v1974
        %2197 = vmatpush1.bf16.msra.mxu0 %v1973
        %2198 = vmatprep.subr.bf16.mxu0 %v1978
        %2199 = vmatpush1.bf16.msra.mxu0 %v1977
        %2200 = vmatprep.subr.bf16.mxu0 %v1982
        %2201 = vmatpush1.bf16.msra.mxu0 %v1981
        %2202 = vmatprep.subr.bf16.mxu0 %v1986
        %2203 = vmatpush1.bf16.msra.mxu0 %v1985
        %2204 = vmatprep.subr.bf16.mxu0 %v1990
        %2205 = vmatpush1.bf16.msra.mxu0 %v1989
        %2206 = vmatprep.subr.bf16.mxu0 %v1994
        %2207 = vmatpush1.bf16.msra.mxu0 %v1993
        %2208 = vmatprep.subr.bf16.mxu0 %v1998
        %2209 = vmatpush1.bf16.msra.mxu0 %v1997
        %2210 = vmatprep.subr.bf16.mxu0 %v2002
        %2211 = vmatpush1.bf16.msra.mxu0 %v2001
        %2212 = vmatprep.subr.bf16.mxu0 %v2006
        %2213 = vmatpush1.bf16.msra.mxu0 %v2005
        %2214 = vmatprep.subr.bf16.mxu0 %v2010
        %2215 = vmatpush1.bf16.msra.mxu0 %v2009
        %2216 = vmatprep.mubr.bf16.mxu0 %v396
        %2217 = vmatmul.mubr.bf16.gmra.mrb[0].mxu0 %v395
        %v2218 = vpop.f32.mrb[0].mxu0
        %v2219 = vadd.f32 %v2176, %v2218
        %v2220 = vpop.f32.mrb[0].mxu0
        %v2221 = vadd.f32 %v2178, %v2220
        %v2222 = vpop.f32.mrb[0].mxu0
        %v2223 = vadd.f32 %v2180, %v2222
        %v2224 = vpop.f32.mrb[0].mxu0
        %v2225 = vadd.f32 %v2182, %v2224
        %2226 = vdwg.mxu0
        %2227 = vmatprep.subr.bf16.mxu0 %v1888
        %2228 = vmatpush1.bf16.msra.mxu0 %v1887
        %2229 = vmatprep.subr.bf16.mxu0 %v1892
        %2230 = vmatpush1.bf16.msra.mxu0 %v1891
        %2231 = vmatprep.subr.bf16.mxu0 %v1896
        %2232 = vmatpush1.bf16.msra.mxu0 %v1895
        %2233 = vmatprep.subr.bf16.mxu0 %v1900
        %2234 = vmatpush1.bf16.msra.mxu0 %v1899
        %2235 = vmatprep.subr.bf16.mxu0 %v1904
        %2236 = vmatpush1.bf16.msra.mxu0 %v1903
        %2237 = vmatprep.subr.bf16.mxu0 %v1908
        %2238 = vmatpush1.bf16.msra.mxu0 %v1907
        %2239 = vmatprep.subr.bf16.mxu0 %v1912
        %2240 = vmatpush1.bf16.msra.mxu0 %v1911
        %2241 = vmatprep.subr.bf16.mxu0 %v1916
        %2242 = vmatpush1.bf16.msra.mxu0 %v1915
        %2243 = vmatprep.subr.bf16.mxu0 %v1920
        %2244 = vmatpush1.bf16.msra.mxu0 %v1919
        %2245 = vmatprep.subr.bf16.mxu0 %v1924
        %2246 = vmatpush1.bf16.msra.mxu0 %v1923
        %2247 = vmatprep.subr.bf16.mxu0 %v1928
        %2248 = vmatpush1.bf16.msra.mxu0 %v1927
        %2249 = vmatprep.subr.bf16.mxu0 %v1932
        %2250 = vmatpush1.bf16.msra.mxu0 %v1931
        %2251 = vmatprep.subr.bf16.mxu0 %v1936
        %2252 = vmatpush1.bf16.msra.mxu0 %v1935
        %2253 = vmatprep.subr.bf16.mxu0 %v1940
        %2254 = vmatpush1.bf16.msra.mxu0 %v1939
        %2255 = vmatprep.subr.bf16.mxu0 %v1944
        %2256 = vmatpush1.bf16.msra.mxu0 %v1943
        %2257 = vmatprep.subr.bf16.mxu0 %v1948
        %2258 = vmatpush1.bf16.msra.mxu0 %v1947
        %2259 = vmatprep.mubr.bf16.mxu0 %v394
        %2260 = vmatmul.mubr.bf16.gmra.mrb[0].mxu0 %v393
        %v2261 = vpop.f32.mrb[0].mxu0
        %v2262 = vadd.f32 %v1493, %v2261
        %v2263 = vpop.f32.mrb[0].mxu0
        %v2264 = vadd.f32 %v1495, %v2263
        %v2265 = vpop.f32.mrb[0].mxu0
        %v2266 = vadd.f32 %v1497, %v2265
        %v2267 = vpop.f32.mrb[0].mxu0
        %v2268 = vadd.f32 %v1499, %v2267
        %2269 = vdwg.mxu0
        %2270 = vmatprep.subr.bf16.mxu0 %v1952
        %2271 = vmatpush1.bf16.msra.mxu0 %v1951
        %2272 = vmatprep.subr.bf16.mxu0 %v1956
        %2273 = vmatpush1.bf16.msra.mxu0 %v1955
        %2274 = vmatprep.subr.bf16.mxu0 %v1960
        %2275 = vmatpush1.bf16.msra.mxu0 %v1959
        %2276 = vmatprep.subr.bf16.mxu0 %v1964
        %2277 = vmatpush1.bf16.msra.mxu0 %v1963
        %2278 = vmatprep.subr.bf16.mxu0 %v1968
        %2279 = vmatpush1.bf16.msra.mxu0 %v1967
        %2280 = vmatprep.subr.bf16.mxu0 %v1972
        %2281 = vmatpush1.bf16.msra.mxu0 %v1971
        %2282 = vmatprep.subr.bf16.mxu0 %v1976
        %2283 = vmatpush1.bf16.msra.mxu0 %v1975
        %2284 = vmatprep.subr.bf16.mxu0 %v1980
        %2285 = vmatpush1.bf16.msra.mxu0 %v1979
        %2286 = vmatprep.subr.bf16.mxu0 %v1984
        %2287 = vmatpush1.bf16.msra.mxu0 %v1983
        %2288 = vmatprep.subr.bf16.mxu0 %v1988
        %2289 = vmatpush1.bf16.msra.mxu0 %v1987
        %2290 = vmatprep.subr.bf16.mxu0 %v1992
        %2291 = vmatpush1.bf16.msra.mxu0 %v1991
        %2292 = vmatprep.subr.bf16.mxu0 %v1996
        %2293 = vmatpush1.bf16.msra.mxu0 %v1995
        %2294 = vmatprep.subr.bf16.mxu0 %v2000
        %2295 = vmatpush1.bf16.msra.mxu0 %v1999
        %2296 = vmatprep.subr.bf16.mxu0 %v2004
        %2297 = vmatpush1.bf16.msra.mxu0 %v2003
        %2298 = vmatprep.subr.bf16.mxu0 %v2008
        %2299 = vmatpush1.bf16.msra.mxu0 %v2007
        %2300 = vmatprep.subr.bf16.mxu0 %v2012
        %2301 = vmatpush1.bf16.msra.mxu0 %v2011
        %2302 = vmatprep.mubr.bf16.mxu0 %v396
        %2303 = vmatmul.mubr.bf16.gmra.mrb[0].mxu0 %v395
        %v2304 = vpop.f32.mrb[0].mxu0
        %v2305 = vadd.f32 %v2262, %v2304
        %v2306 = vpop.f32.mrb[0].mxu0
        %v2307 = vadd.f32 %v2264, %v2306
        %v2308 = vpop.f32.mrb[0].mxu0
        %v2309 = vadd.f32 %v2266, %v2308
        %v2310 = vpop.f32.mrb[0].mxu0
        %v2311 = vadd.f32 %v2268, %v2310
        %2312 = vdwg.mxu0
        %s2313 = scalar_lea.vmem [#allocation2], 2048
        %v2314 = vld [vmem:[%s2313] sm:$0xff]
        %v2315 = vld [vmem:[%s2313 + $0x8] sm:$0xff]
        %v2316 = vld [vmem:[%s2313 + $0x10] sm:$0xff]
        %v2317 = vld [vmem:[%s2313 + $0x18] sm:$0xff]
        %v2318 = vld [vmem:[%s2313 + $0x20] sm:$0xff]
        %v2319 = vld [vmem:[%s2313 + $0x28] sm:$0xff]
        %v2320 = vld [vmem:[%s2313 + $0x30] sm:$0xff]
        %v2321 = vld [vmem:[%s2313 + $0x38] sm:$0xff]
        %v2322 = vld [vmem:[%s2313 + $0x40] sm:$0xff]
        %v2323 = vld [vmem:[%s2313 + $0x48] sm:$0xff]
        %v2324 = vld [vmem:[%s2313 + $0x50] sm:$0xff]
        %v2325 = vld [vmem:[%s2313 + $0x58] sm:$0xff]
        %v2326 = vld [vmem:[%s2313 + $0x60] sm:$0xff]
        %v2327 = vld [vmem:[%s2313 + $0x68] sm:$0xff]
        %v2328 = vld [vmem:[%s2313 + $0x70] sm:$0xff]
        %v2329 = vld [vmem:[%s2313 + $0x78] sm:$0xff]
        %v2330 = vld [vmem:[%s2313 + $0x80] sm:$0xff]
        %v2331 = vld [vmem:[%s2313 + $0x88] sm:$0xff]
        %v2332 = vld [vmem:[%s2313 + $0x90] sm:$0xff]
        %v2333 = vld [vmem:[%s2313 + $0x98] sm:$0xff]
        %v2334 = vld [vmem:[%s2313 + $0xa0] sm:$0xff]
        %v2335 = vld [vmem:[%s2313 + $0xa8] sm:$0xff]
        %v2336 = vld [vmem:[%s2313 + $0xb0] sm:$0xff]
        %v2337 = vld [vmem:[%s2313 + $0xb8] sm:$0xff]
        %v2338 = vld [vmem:[%s2313 + $0xc0] sm:$0xff]
        %v2339 = vld [vmem:[%s2313 + $0xc8] sm:$0xff]
        %v2340 = vld [vmem:[%s2313 + $0xd0] sm:$0xff]
        %v2341 = vld [vmem:[%s2313 + $0xd8] sm:$0xff]
        %v2342 = vld [vmem:[%s2313 + $0xe0] sm:$0xff]
        %v2343 = vld [vmem:[%s2313 + $0xe8] sm:$0xff]
        %v2344 = vld [vmem:[%s2313 + $0xf0] sm:$0xff]
        %v2345 = vld [vmem:[%s2313 + $0xf8] sm:$0xff]
        %v2346 = vld [vmem:[%s2313 + $0x100] sm:$0xff]
        %v2347 = vld [vmem:[%s2313 + $0x108] sm:$0xff]
        %v2348 = vld [vmem:[%s2313 + $0x110] sm:$0xff]
        %v2349 = vld [vmem:[%s2313 + $0x118] sm:$0xff]
        %v2350 = vld [vmem:[%s2313 + $0x120] sm:$0xff]
        %v2351 = vld [vmem:[%s2313 + $0x128] sm:$0xff]
        %v2352 = vld [vmem:[%s2313 + $0x130] sm:$0xff]
        %v2353 = vld [vmem:[%s2313 + $0x138] sm:$0xff]
        %v2354 = vld [vmem:[%s2313 + $0x140] sm:$0xff]
        %v2355 = vld [vmem:[%s2313 + $0x148] sm:$0xff]
        %v2356 = vld [vmem:[%s2313 + $0x150] sm:$0xff]
        %v2357 = vld [vmem:[%s2313 + $0x158] sm:$0xff]
        %v2358 = vld [vmem:[%s2313 + $0x160] sm:$0xff]
        %v2359 = vld [vmem:[%s2313 + $0x168] sm:$0xff]
        %v2360 = vld [vmem:[%s2313 + $0x170] sm:$0xff]
        %v2361 = vld [vmem:[%s2313 + $0x178] sm:$0xff]
        %v2362 = vld [vmem:[%s2313 + $0x180] sm:$0xff]
        %v2363 = vld [vmem:[%s2313 + $0x188] sm:$0xff]
        %v2364 = vld [vmem:[%s2313 + $0x190] sm:$0xff]
        %v2365 = vld [vmem:[%s2313 + $0x198] sm:$0xff]
        %v2366 = vld [vmem:[%s2313 + $0x1a0] sm:$0xff]
        %v2367 = vld [vmem:[%s2313 + $0x1a8] sm:$0xff]
        %v2368 = vld [vmem:[%s2313 + $0x1b0] sm:$0xff]
        %v2369 = vld [vmem:[%s2313 + $0x1b8] sm:$0xff]
        %v2370 = vld [vmem:[%s2313 + $0x1c0] sm:$0xff]
        %v2371 = vld [vmem:[%s2313 + $0x1c8] sm:$0xff]
        %v2372 = vld [vmem:[%s2313 + $0x1d0] sm:$0xff]
        %v2373 = vld [vmem:[%s2313 + $0x1d8] sm:$0xff]
        %v2374 = vld [vmem:[%s2313 + $0x1e0] sm:$0xff]
        %v2375 = vld [vmem:[%s2313 + $0x1e8] sm:$0xff]
        %v2376 = vld [vmem:[%s2313 + $0x1f0] sm:$0xff]
        %v2377 = vld [vmem:[%s2313 + $0x1f8] sm:$0xff]
        %v2378 = vld [vmem:[%s2313 + $0x200] sm:$0xff]
        %v2379 = vld [vmem:[%s2313 + $0x208] sm:$0xff]
        %v2380 = vld [vmem:[%s2313 + $0x210] sm:$0xff]
        %v2381 = vld [vmem:[%s2313 + $0x218] sm:$0xff]
        %v2382 = vld [vmem:[%s2313 + $0x220] sm:$0xff]
        %v2383 = vld [vmem:[%s2313 + $0x228] sm:$0xff]
        %v2384 = vld [vmem:[%s2313 + $0x230] sm:$0xff]
        %v2385 = vld [vmem:[%s2313 + $0x238] sm:$0xff]
        %v2386 = vld [vmem:[%s2313 + $0x240] sm:$0xff]
        %v2387 = vld [vmem:[%s2313 + $0x248] sm:$0xff]
        %v2388 = vld [vmem:[%s2313 + $0x250] sm:$0xff]
        %v2389 = vld [vmem:[%s2313 + $0x258] sm:$0xff]
        %v2390 = vld [vmem:[%s2313 + $0x260] sm:$0xff]
        %v2391 = vld [vmem:[%s2313 + $0x268] sm:$0xff]
        %v2392 = vld [vmem:[%s2313 + $0x270] sm:$0xff]
        %v2393 = vld [vmem:[%s2313 + $0x278] sm:$0xff]
        %v2394 = vld [vmem:[%s2313 + $0x280] sm:$0xff]
        %v2395 = vld [vmem:[%s2313 + $0x288] sm:$0xff]
        %v2396 = vld [vmem:[%s2313 + $0x290] sm:$0xff]
        %v2397 = vld [vmem:[%s2313 + $0x298] sm:$0xff]
        %v2398 = vld [vmem:[%s2313 + $0x2a0] sm:$0xff]
        %v2399 = vld [vmem:[%s2313 + $0x2a8] sm:$0xff]
        %v2400 = vld [vmem:[%s2313 + $0x2b0] sm:$0xff]
        %v2401 = vld [vmem:[%s2313 + $0x2b8] sm:$0xff]
        %v2402 = vld [vmem:[%s2313 + $0x2c0] sm:$0xff]
        %v2403 = vld [vmem:[%s2313 + $0x2c8] sm:$0xff]
        %v2404 = vld [vmem:[%s2313 + $0x2d0] sm:$0xff]
        %v2405 = vld [vmem:[%s2313 + $0x2d8] sm:$0xff]
        %v2406 = vld [vmem:[%s2313 + $0x2e0] sm:$0xff]
        %v2407 = vld [vmem:[%s2313 + $0x2e8] sm:$0xff]
        %v2408 = vld [vmem:[%s2313 + $0x2f0] sm:$0xff]
        %v2409 = vld [vmem:[%s2313 + $0x2f8] sm:$0xff]
        %v2410 = vld [vmem:[%s2313 + $0x300] sm:$0xff]
        %v2411 = vld [vmem:[%s2313 + $0x308] sm:$0xff]
        %v2412 = vld [vmem:[%s2313 + $0x310] sm:$0xff]
        %v2413 = vld [vmem:[%s2313 + $0x318] sm:$0xff]
        %v2414 = vld [vmem:[%s2313 + $0x320] sm:$0xff]
        %v2415 = vld [vmem:[%s2313 + $0x328] sm:$0xff]
        %v2416 = vld [vmem:[%s2313 + $0x330] sm:$0xff]
        %v2417 = vld [vmem:[%s2313 + $0x338] sm:$0xff]
        %v2418 = vld [vmem:[%s2313 + $0x340] sm:$0xff]
        %v2419 = vld [vmem:[%s2313 + $0x348] sm:$0xff]
        %v2420 = vld [vmem:[%s2313 + $0x350] sm:$0xff]
        %v2421 = vld [vmem:[%s2313 + $0x358] sm:$0xff]
        %v2422 = vld [vmem:[%s2313 + $0x360] sm:$0xff]
        %v2423 = vld [vmem:[%s2313 + $0x368] sm:$0xff]
        %v2424 = vld [vmem:[%s2313 + $0x370] sm:$0xff]
        %v2425 = vld [vmem:[%s2313 + $0x378] sm:$0xff]
        %v2426 = vld [vmem:[%s2313 + $0x380] sm:$0xff]
        %v2427 = vld [vmem:[%s2313 + $0x388] sm:$0xff]
        %v2428 = vld [vmem:[%s2313 + $0x390] sm:$0xff]
        %v2429 = vld [vmem:[%s2313 + $0x398] sm:$0xff]
        %v2430 = vld [vmem:[%s2313 + $0x3a0] sm:$0xff]
        %v2431 = vld [vmem:[%s2313 + $0x3a8] sm:$0xff]
        %v2432 = vld [vmem:[%s2313 + $0x3b0] sm:$0xff]
        %v2433 = vld [vmem:[%s2313 + $0x3b8] sm:$0xff]
        %v2434 = vld [vmem:[%s2313 + $0x3c0] sm:$0xff]
        %v2435 = vld [vmem:[%s2313 + $0x3c8] sm:$0xff]
        %v2436 = vld [vmem:[%s2313 + $0x3d0] sm:$0xff]
        %v2437 = vld [vmem:[%s2313 + $0x3d8] sm:$0xff]
        %v2438 = vld [vmem:[%s2313 + $0x3e0] sm:$0xff]
        %v2439 = vld [vmem:[%s2313 + $0x3e8] sm:$0xff]
        %v2440 = vld [vmem:[%s2313 + $0x3f0] sm:$0xff]
        %v2441 = vld [vmem:[%s2313 + $0x3f8] sm:$0xff]
        %v2570 = vunpack.c.l.b16 %v2314
        %v2571 = vunpack.c.h.b16 %v2314
        %v2572 = vunpack.c.l.b16 %v2315
        %v2573 = vunpack.c.h.b16 %v2315
        %v2574 = vunpack.c.l.b16 %v2316
        %v2575 = vunpack.c.h.b16 %v2316
        %v2576 = vunpack.c.l.b16 %v2317
        %v2577 = vunpack.c.h.b16 %v2317
        %v2578 = vunpack.c.l.b16 %v2318
        %v2579 = vunpack.c.h.b16 %v2318
        %v2580 = vunpack.c.l.b16 %v2319
        %v2581 = vunpack.c.h.b16 %v2319
        %v2582 = vunpack.c.l.b16 %v2320
        %v2583 = vunpack.c.h.b16 %v2320
        %v2584 = vunpack.c.l.b16 %v2321
        %v2585 = vunpack.c.h.b16 %v2321
        %v2586 = vunpack.c.l.b16 %v2322
        %v2587 = vunpack.c.h.b16 %v2322
        %v2588 = vunpack.c.l.b16 %v2323
        %v2589 = vunpack.c.h.b16 %v2323
        %v2590 = vunpack.c.l.b16 %v2324
        %v2591 = vunpack.c.h.b16 %v2324
        %v2592 = vunpack.c.l.b16 %v2325
        %v2593 = vunpack.c.h.b16 %v2325
        %v2594 = vunpack.c.l.b16 %v2326
        %v2595 = vunpack.c.h.b16 %v2326
        %v2596 = vunpack.c.l.b16 %v2327
        %v2597 = vunpack.c.h.b16 %v2327
        %v2598 = vunpack.c.l.b16 %v2328
        %v2599 = vunpack.c.h.b16 %v2328
        %v2600 = vunpack.c.l.b16 %v2329
        %v2601 = vunpack.c.h.b16 %v2329
        %v2602 = vunpack.c.l.b16 %v2330
        %v2603 = vunpack.c.h.b16 %v2330
        %v2604 = vunpack.c.l.b16 %v2331
        %v2605 = vunpack.c.h.b16 %v2331
        %v2606 = vunpack.c.l.b16 %v2332
        %v2607 = vunpack.c.h.b16 %v2332
        %v2608 = vunpack.c.l.b16 %v2333
        %v2609 = vunpack.c.h.b16 %v2333
        %v2610 = vunpack.c.l.b16 %v2334
        %v2611 = vunpack.c.h.b16 %v2334
        %v2612 = vunpack.c.l.b16 %v2335
        %v2613 = vunpack.c.h.b16 %v2335
        %v2614 = vunpack.c.l.b16 %v2336
        %v2615 = vunpack.c.h.b16 %v2336
        %v2616 = vunpack.c.l.b16 %v2337
        %v2617 = vunpack.c.h.b16 %v2337
        %v2618 = vunpack.c.l.b16 %v2338
        %v2619 = vunpack.c.h.b16 %v2338
        %v2620 = vunpack.c.l.b16 %v2339
        %v2621 = vunpack.c.h.b16 %v2339
        %v2622 = vunpack.c.l.b16 %v2340
        %v2623 = vunpack.c.h.b16 %v2340
        %v2624 = vunpack.c.l.b16 %v2341
        %v2625 = vunpack.c.h.b16 %v2341
        %v2626 = vunpack.c.l.b16 %v2342
        %v2627 = vunpack.c.h.b16 %v2342
        %v2628 = vunpack.c.l.b16 %v2343
        %v2629 = vunpack.c.h.b16 %v2343
        %v2630 = vunpack.c.l.b16 %v2344
        %v2631 = vunpack.c.h.b16 %v2344
        %v2632 = vunpack.c.l.b16 %v2345
        %v2633 = vunpack.c.h.b16 %v2345
        %v2634 = vunpack.c.l.b16 %v2346
        %v2635 = vunpack.c.h.b16 %v2346
        %v2636 = vunpack.c.l.b16 %v2347
        %v2637 = vunpack.c.h.b16 %v2347
        %v2638 = vunpack.c.l.b16 %v2348
        %v2639 = vunpack.c.h.b16 %v2348
        %v2640 = vunpack.c.l.b16 %v2349
        %v2641 = vunpack.c.h.b16 %v2349
        %v2642 = vunpack.c.l.b16 %v2350
        %v2643 = vunpack.c.h.b16 %v2350
        %v2644 = vunpack.c.l.b16 %v2351
        %v2645 = vunpack.c.h.b16 %v2351
        %v2646 = vunpack.c.l.b16 %v2352
        %v2647 = vunpack.c.h.b16 %v2352
        %v2648 = vunpack.c.l.b16 %v2353
        %v2649 = vunpack.c.h.b16 %v2353
        %v2650 = vunpack.c.l.b16 %v2354
        %v2651 = vunpack.c.h.b16 %v2354
        %v2652 = vunpack.c.l.b16 %v2355
        %v2653 = vunpack.c.h.b16 %v2355
        %v2654 = vunpack.c.l.b16 %v2356
        %v2655 = vunpack.c.h.b16 %v2356
        %v2656 = vunpack.c.l.b16 %v2357
        %v2657 = vunpack.c.h.b16 %v2357
        %v2658 = vunpack.c.l.b16 %v2358
        %v2659 = vunpack.c.h.b16 %v2358
        %v2660 = vunpack.c.l.b16 %v2359
        %v2661 = vunpack.c.h.b16 %v2359
        %v2662 = vunpack.c.l.b16 %v2360
        %v2663 = vunpack.c.h.b16 %v2360
        %v2664 = vunpack.c.l.b16 %v2361
        %v2665 = vunpack.c.h.b16 %v2361
        %v2666 = vunpack.c.l.b16 %v2362
        %v2667 = vunpack.c.h.b16 %v2362
        %v2668 = vunpack.c.l.b16 %v2363
        %v2669 = vunpack.c.h.b16 %v2363
        %v2670 = vunpack.c.l.b16 %v2364
        %v2671 = vunpack.c.h.b16 %v2364
        %v2672 = vunpack.c.l.b16 %v2365
        %v2673 = vunpack.c.h.b16 %v2365
        %v2674 = vunpack.c.l.b16 %v2366
        %v2675 = vunpack.c.h.b16 %v2366
        %v2676 = vunpack.c.l.b16 %v2367
        %v2677 = vunpack.c.h.b16 %v2367
        %v2678 = vunpack.c.l.b16 %v2368
        %v2679 = vunpack.c.h.b16 %v2368
        %v2680 = vunpack.c.l.b16 %v2369
        %v2681 = vunpack.c.h.b16 %v2369
        %v2682 = vunpack.c.l.b16 %v2370
        %v2683 = vunpack.c.h.b16 %v2370
        %v2684 = vunpack.c.l.b16 %v2371
        %v2685 = vunpack.c.h.b16 %v2371
        %v2686 = vunpack.c.l.b16 %v2372
        %v2687 = vunpack.c.h.b16 %v2372
        %v2688 = vunpack.c.l.b16 %v2373
        %v2689 = vunpack.c.h.b16 %v2373
        %v2690 = vunpack.c.l.b16 %v2374
        %v2691 = vunpack.c.h.b16 %v2374
        %v2692 = vunpack.c.l.b16 %v2375
        %v2693 = vunpack.c.h.b16 %v2375
        %v2694 = vunpack.c.l.b16 %v2376
        %v2695 = vunpack.c.h.b16 %v2376
        %v2696 = vunpack.c.l.b16 %v2377
        %v2697 = vunpack.c.h.b16 %v2377
        %v2698 = vunpack.c.l.b16 %v2378
        %v2699 = vunpack.c.h.b16 %v2378
        %v2700 = vunpack.c.l.b16 %v2379
        %v2701 = vunpack.c.h.b16 %v2379
        %v2702 = vunpack.c.l.b16 %v2380
        %v2703 = vunpack.c.h.b16 %v2380
        %v2704 = vunpack.c.l.b16 %v2381
        %v2705 = vunpack.c.h.b16 %v2381
        %v2706 = vunpack.c.l.b16 %v2382
        %v2707 = vunpack.c.h.b16 %v2382
        %v2708 = vunpack.c.l.b16 %v2383
        %v2709 = vunpack.c.h.b16 %v2383
        %v2710 = vunpack.c.l.b16 %v2384
        %v2711 = vunpack.c.h.b16 %v2384
        %v2712 = vunpack.c.l.b16 %v2385
        %v2713 = vunpack.c.h.b16 %v2385
        %v2714 = vunpack.c.l.b16 %v2386
        %v2715 = vunpack.c.h.b16 %v2386
        %v2716 = vunpack.c.l.b16 %v2387
        %v2717 = vunpack.c.h.b16 %v2387
        %v2718 = vunpack.c.l.b16 %v2388
        %v2719 = vunpack.c.h.b16 %v2388
        %v2720 = vunpack.c.l.b16 %v2389
        %v2721 = vunpack.c.h.b16 %v2389
        %v2722 = vunpack.c.l.b16 %v2390
        %v2723 = vunpack.c.h.b16 %v2390
        %v2724 = vunpack.c.l.b16 %v2391
        %v2725 = vunpack.c.h.b16 %v2391
        %v2726 = vunpack.c.l.b16 %v2392
        %v2727 = vunpack.c.h.b16 %v2392
        %v2728 = vunpack.c.l.b16 %v2393
        %v2729 = vunpack.c.h.b16 %v2393
        %v2730 = vunpack.c.l.b16 %v2394
        %v2731 = vunpack.c.h.b16 %v2394
        %v2732 = vunpack.c.l.b16 %v2395
        %v2733 = vunpack.c.h.b16 %v2395
        %v2734 = vunpack.c.l.b16 %v2396
        %v2735 = vunpack.c.h.b16 %v2396
        %v2736 = vunpack.c.l.b16 %v2397
        %v2737 = vunpack.c.h.b16 %v2397
        %v2738 = vunpack.c.l.b16 %v2398
        %v2739 = vunpack.c.h.b16 %v2398
        %v2740 = vunpack.c.l.b16 %v2399
        %v2741 = vunpack.c.h.b16 %v2399
        %v2742 = vunpack.c.l.b16 %v2400
        %v2743 = vunpack.c.h.b16 %v2400
        %v2744 = vunpack.c.l.b16 %v2401
        %v2745 = vunpack.c.h.b16 %v2401
        %v2746 = vunpack.c.l.b16 %v2402
        %v2747 = vunpack.c.h.b16 %v2402
        %v2748 = vunpack.c.l.b16 %v2403
        %v2749 = vunpack.c.h.b16 %v2403
        %v2750 = vunpack.c.l.b16 %v2404
        %v2751 = vunpack.c.h.b16 %v2404
        %v2752 = vunpack.c.l.b16 %v2405
        %v2753 = vunpack.c.h.b16 %v2405
        %v2754 = vunpack.c.l.b16 %v2406
        %v2755 = vunpack.c.h.b16 %v2406
        %v2756 = vunpack.c.l.b16 %v2407
        %v2757 = vunpack.c.h.b16 %v2407
        %v2758 = vunpack.c.l.b16 %v2408
        %v2759 = vunpack.c.h.b16 %v2408
        %v2760 = vunpack.c.l.b16 %v2409
        %v2761 = vunpack.c.h.b16 %v2409
        %v2762 = vunpack.c.l.b16 %v2410
        %v2763 = vunpack.c.h.b16 %v2410
        %v2764 = vunpack.c.l.b16 %v2411
        %v2765 = vunpack.c.h.b16 %v2411
        %v2766 = vunpack.c.l.b16 %v2412
        %v2767 = vunpack.c.h.b16 %v2412
        %v2768 = vunpack.c.l.b16 %v2413
        %v2769 = vunpack.c.h.b16 %v2413
        %v2770 = vunpack.c.l.b16 %v2414
        %v2771 = vunpack.c.h.b16 %v2414
        %v2772 = vunpack.c.l.b16 %v2415
        %v2773 = vunpack.c.h.b16 %v2415
        %v2774 = vunpack.c.l.b16 %v2416
        %v2775 = vunpack.c.h.b16 %v2416
        %v2776 = vunpack.c.l.b16 %v2417
        %v2777 = vunpack.c.h.b16 %v2417
        %v2778 = vunpack.c.l.b16 %v2418
        %v2779 = vunpack.c.h.b16 %v2418
        %v2780 = vunpack.c.l.b16 %v2419
        %v2781 = vunpack.c.h.b16 %v2419
        %v2782 = vunpack.c.l.b16 %v2420
        %v2783 = vunpack.c.h.b16 %v2420
        %v2784 = vunpack.c.l.b16 %v2421
        %v2785 = vunpack.c.h.b16 %v2421
        %v2786 = vunpack.c.l.b16 %v2422
        %v2787 = vunpack.c.h.b16 %v2422
        %v2788 = vunpack.c.l.b16 %v2423
        %v2789 = vunpack.c.h.b16 %v2423
        %v2790 = vunpack.c.l.b16 %v2424
        %v2791 = vunpack.c.h.b16 %v2424
        %v2792 = vunpack.c.l.b16 %v2425
        %v2793 = vunpack.c.h.b16 %v2425
        %v2794 = vunpack.c.l.b16 %v2426
        %v2795 = vunpack.c.h.b16 %v2426
        %v2796 = vunpack.c.l.b16 %v2427
        %v2797 = vunpack.c.h.b16 %v2427
        %v2798 = vunpack.c.l.b16 %v2428
        %v2799 = vunpack.c.h.b16 %v2428
        %v2800 = vunpack.c.l.b16 %v2429
        %v2801 = vunpack.c.h.b16 %v2429
        %v2802 = vunpack.c.l.b16 %v2430
        %v2803 = vunpack.c.h.b16 %v2430
        %v2804 = vunpack.c.l.b16 %v2431
        %v2805 = vunpack.c.h.b16 %v2431
        %v2806 = vunpack.c.l.b16 %v2432
        %v2807 = vunpack.c.h.b16 %v2432
        %v2808 = vunpack.c.l.b16 %v2433
        %v2809 = vunpack.c.h.b16 %v2433
        %v2810 = vunpack.c.l.b16 %v2434
        %v2811 = vunpack.c.h.b16 %v2434
        %v2812 = vunpack.c.l.b16 %v2435
        %v2813 = vunpack.c.h.b16 %v2435
        %v2814 = vunpack.c.l.b16 %v2436
        %v2815 = vunpack.c.h.b16 %v2436
        %v2816 = vunpack.c.l.b16 %v2437
        %v2817 = vunpack.c.h.b16 %v2437
        %v2818 = vunpack.c.l.b16 %v2438
        %v2819 = vunpack.c.h.b16 %v2438
        %v2820 = vunpack.c.l.b16 %v2439
        %v2821 = vunpack.c.h.b16 %v2439
        %v2822 = vunpack.c.l.b16 %v2440
        %v2823 = vunpack.c.h.b16 %v2440
        %v2824 = vunpack.c.l.b16 %v2441
        %v2825 = vunpack.c.h.b16 %v2441
        %v2826 = vpack.c.b16 %v2574, %v2570
        %v2827 = vpack.c.b16 %v2575, %v2571
        %v2828 = vpack.c.b16 %v2576, %v2572
        %v2829 = vpack.c.b16 %v2577, %v2573
        %v2830 = vpack.c.b16 %v2582, %v2578
        %v2831 = vpack.c.b16 %v2583, %v2579
        %v2832 = vpack.c.b16 %v2584, %v2580
        %v2833 = vpack.c.b16 %v2585, %v2581
        %v2834 = vpack.c.b16 %v2590, %v2586
        %v2835 = vpack.c.b16 %v2591, %v2587
        %v2836 = vpack.c.b16 %v2592, %v2588
        %v2837 = vpack.c.b16 %v2593, %v2589
        %v2838 = vpack.c.b16 %v2598, %v2594
        %v2839 = vpack.c.b16 %v2599, %v2595
        %v2840 = vpack.c.b16 %v2600, %v2596
        %v2841 = vpack.c.b16 %v2601, %v2597
        %v2842 = vpack.c.b16 %v2606, %v2602
        %v2843 = vpack.c.b16 %v2607, %v2603
        %v2844 = vpack.c.b16 %v2608, %v2604
        %v2845 = vpack.c.b16 %v2609, %v2605
        %v2846 = vpack.c.b16 %v2614, %v2610
        %v2847 = vpack.c.b16 %v2615, %v2611
        %v2848 = vpack.c.b16 %v2616, %v2612
        %v2849 = vpack.c.b16 %v2617, %v2613
        %v2850 = vpack.c.b16 %v2622, %v2618
        %v2851 = vpack.c.b16 %v2623, %v2619
        %v2852 = vpack.c.b16 %v2624, %v2620
        %v2853 = vpack.c.b16 %v2625, %v2621
        %v2854 = vpack.c.b16 %v2630, %v2626
        %v2855 = vpack.c.b16 %v2631, %v2627
        %v2856 = vpack.c.b16 %v2632, %v2628
        %v2857 = vpack.c.b16 %v2633, %v2629
        %v2858 = vpack.c.b16 %v2638, %v2634
        %v2859 = vpack.c.b16 %v2639, %v2635
        %v2860 = vpack.c.b16 %v2640, %v2636
        %v2861 = vpack.c.b16 %v2641, %v2637
        %v2862 = vpack.c.b16 %v2646, %v2642
        %v2863 = vpack.c.b16 %v2647, %v2643
        %v2864 = vpack.c.b16 %v2648, %v2644
        %v2865 = vpack.c.b16 %v2649, %v2645
        %v2866 = vpack.c.b16 %v2654, %v2650
        %v2867 = vpack.c.b16 %v2655, %v2651
        %v2868 = vpack.c.b16 %v2656, %v2652
        %v2869 = vpack.c.b16 %v2657, %v2653
        %v2870 = vpack.c.b16 %v2662, %v2658
        %v2871 = vpack.c.b16 %v2663, %v2659
        %v2872 = vpack.c.b16 %v2664, %v2660
        %v2873 = vpack.c.b16 %v2665, %v2661
        %v2874 = vpack.c.b16 %v2670, %v2666
        %v2875 = vpack.c.b16 %v2671, %v2667
        %v2876 = vpack.c.b16 %v2672, %v2668
        %v2877 = vpack.c.b16 %v2673, %v2669
        %v2878 = vpack.c.b16 %v2678, %v2674
        %v2879 = vpack.c.b16 %v2679, %v2675
        %v2880 = vpack.c.b16 %v2680, %v2676
        %v2881 = vpack.c.b16 %v2681, %v2677
        %v2882 = vpack.c.b16 %v2686, %v2682
        %v2883 = vpack.c.b16 %v2687, %v2683
        %v2884 = vpack.c.b16 %v2688, %v2684
        %v2885 = vpack.c.b16 %v2689, %v2685
        %v2886 = vpack.c.b16 %v2694, %v2690
        %v2887 = vpack.c.b16 %v2695, %v2691
        %v2888 = vpack.c.b16 %v2696, %v2692
        %v2889 = vpack.c.b16 %v2697, %v2693
        %v2890 = vpack.c.b16 %v2702, %v2698
        %v2891 = vpack.c.b16 %v2703, %v2699
        %v2892 = vpack.c.b16 %v2704, %v2700
        %v2893 = vpack.c.b16 %v2705, %v2701
        %v2894 = vpack.c.b16 %v2710, %v2706
        %v2895 = vpack.c.b16 %v2711, %v2707
        %v2896 = vpack.c.b16 %v2712, %v2708
        %v2897 = vpack.c.b16 %v2713, %v2709
        %v2898 = vpack.c.b16 %v2718, %v2714
        %v2899 = vpack.c.b16 %v2719, %v2715
        %v2900 = vpack.c.b16 %v2720, %v2716
        %v2901 = vpack.c.b16 %v2721, %v2717
        %v2902 = vpack.c.b16 %v2726, %v2722
        %v2903 = vpack.c.b16 %v2727, %v2723
        %v2904 = vpack.c.b16 %v2728, %v2724
        %v2905 = vpack.c.b16 %v2729, %v2725
        %v2906 = vpack.c.b16 %v2734, %v2730
        %v2907 = vpack.c.b16 %v2735, %v2731
        %v2908 = vpack.c.b16 %v2736, %v2732
        %v2909 = vpack.c.b16 %v2737, %v2733
        %v2910 = vpack.c.b16 %v2742, %v2738
        %v2911 = vpack.c.b16 %v2743, %v2739
        %v2912 = vpack.c.b16 %v2744, %v2740
        %v2913 = vpack.c.b16 %v2745, %v2741
        %v2914 = vpack.c.b16 %v2750, %v2746
        %v2915 = vpack.c.b16 %v2751, %v2747
        %v2916 = vpack.c.b16 %v2752, %v2748
        %v2917 = vpack.c.b16 %v2753, %v2749
        %v2918 = vpack.c.b16 %v2758, %v2754
        %v2919 = vpack.c.b16 %v2759, %v2755
        %v2920 = vpack.c.b16 %v2760, %v2756
        %v2921 = vpack.c.b16 %v2761, %v2757
        %v2922 = vpack.c.b16 %v2766, %v2762
        %v2923 = vpack.c.b16 %v2767, %v2763
        %v2924 = vpack.c.b16 %v2768, %v2764
        %v2925 = vpack.c.b16 %v2769, %v2765
        %v2926 = vpack.c.b16 %v2774, %v2770
        %v2927 = vpack.c.b16 %v2775, %v2771
        %v2928 = vpack.c.b16 %v2776, %v2772
        %v2929 = vpack.c.b16 %v2777, %v2773
        %v2930 = vpack.c.b16 %v2782, %v2778
        %v2931 = vpack.c.b16 %v2783, %v2779
        %v2932 = vpack.c.b16 %v2784, %v2780
        %v2933 = vpack.c.b16 %v2785, %v2781
        %v2934 = vpack.c.b16 %v2790, %v2786
        %v2935 = vpack.c.b16 %v2791, %v2787
        %v2936 = vpack.c.b16 %v2792, %v2788
        %v2937 = vpack.c.b16 %v2793, %v2789
        %v2938 = vpack.c.b16 %v2798, %v2794
        %v2939 = vpack.c.b16 %v2799, %v2795
        %v2940 = vpack.c.b16 %v2800, %v2796
        %v2941 = vpack.c.b16 %v2801, %v2797
        %v2942 = vpack.c.b16 %v2806, %v2802
        %v2943 = vpack.c.b16 %v2807, %v2803
        %v2944 = vpack.c.b16 %v2808, %v2804
        %v2945 = vpack.c.b16 %v2809, %v2805
        %v2946 = vpack.c.b16 %v2814, %v2810
        %v2947 = vpack.c.b16 %v2815, %v2811
        %v2948 = vpack.c.b16 %v2816, %v2812
        %v2949 = vpack.c.b16 %v2817, %v2813
        %v2950 = vpack.c.b16 %v2822, %v2818
        %v2951 = vpack.c.b16 %v2823, %v2819
        %v2952 = vpack.c.b16 %v2824, %v2820
        %v2953 = vpack.c.b16 %v2825, %v2821
        %3082 = vmatprep.subr.bf16.mxu0 %v2827
        %3083 = vmatpush1.bf16.msra.mxu0 %v2826
        %3084 = vmatprep.subr.bf16.mxu0 %v2831
        %3085 = vmatpush1.bf16.msra.mxu0 %v2830
        %3086 = vmatprep.subr.bf16.mxu0 %v2835
        %3087 = vmatpush1.bf16.msra.mxu0 %v2834
        %3088 = vmatprep.subr.bf16.mxu0 %v2839
        %3089 = vmatpush1.bf16.msra.mxu0 %v2838
        %3090 = vmatprep.subr.bf16.mxu0 %v2843
        %3091 = vmatpush1.bf16.msra.mxu0 %v2842
        %3092 = vmatprep.subr.bf16.mxu0 %v2847
        %3093 = vmatpush1.bf16.msra.mxu0 %v2846
        %3094 = vmatprep.subr.bf16.mxu0 %v2851
        %3095 = vmatpush1.bf16.msra.mxu0 %v2850
        %3096 = vmatprep.subr.bf16.mxu0 %v2855
        %3097 = vmatpush1.bf16.msra.mxu0 %v2854
        %3098 = vmatprep.subr.bf16.mxu0 %v2859
        %3099 = vmatpush1.bf16.msra.mxu0 %v2858
        %3100 = vmatprep.subr.bf16.mxu0 %v2863
        %3101 = vmatpush1.bf16.msra.mxu0 %v2862
        %3102 = vmatprep.subr.bf16.mxu0 %v2867
        %3103 = vmatpush1.bf16.msra.mxu0 %v2866
        %3104 = vmatprep.subr.bf16.mxu0 %v2871
        %3105 = vmatpush1.bf16.msra.mxu0 %v2870
        %3106 = vmatprep.subr.bf16.mxu0 %v2875
        %3107 = vmatpush1.bf16.msra.mxu0 %v2874
        %3108 = vmatprep.subr.bf16.mxu0 %v2879
        %3109 = vmatpush1.bf16.msra.mxu0 %v2878
        %3110 = vmatprep.subr.bf16.mxu0 %v2883
        %3111 = vmatpush1.bf16.msra.mxu0 %v2882
        %3112 = vmatprep.subr.bf16.mxu0 %v2887
        %3113 = vmatpush1.bf16.msra.mxu0 %v2886
        %3114 = vmatprep.mubr.bf16.mxu0 %v429
        %3115 = vmatmul.mubr.bf16.gmra.mrb[0].mxu0 %v428
        %v3116 = vpop.f32.mrb[0].mxu0
        %v3117 = vadd.f32 0.0, %v3116
        %v3118 = vpop.f32.mrb[0].mxu0
        %v3119 = vadd.f32 0.0, %v3118
        %v3120 = vpop.f32.mrb[0].mxu0
        %v3121 = vadd.f32 0.0, %v3120
        %v3122 = vpop.f32.mrb[0].mxu0
        %v3123 = vadd.f32 0.0, %v3122
        %3124 = vdwg.mxu0
        %3125 = vmatprep.subr.bf16.mxu0 %v2891
        %3126 = vmatpush1.bf16.msra.mxu0 %v2890
        %3127 = vmatprep.subr.bf16.mxu0 %v2895
        %3128 = vmatpush1.bf16.msra.mxu0 %v2894
        %3129 = vmatprep.subr.bf16.mxu0 %v2899
        %3130 = vmatpush1.bf16.msra.mxu0 %v2898
        %3131 = vmatprep.subr.bf16.mxu0 %v2903
        %3132 = vmatpush1.bf16.msra.mxu0 %v2902
        %3133 = vmatprep.subr.bf16.mxu0 %v2907
        %3134 = vmatpush1.bf16.msra.mxu0 %v2906
        %3135 = vmatprep.subr.bf16.mxu0 %v2911
        %3136 = vmatpush1.bf16.msra.mxu0 %v2910
        %3137 = vmatprep.subr.bf16.mxu0 %v2915
        %3138 = vmatpush1.bf16.msra.mxu0 %v2914
        %3139 = vmatprep.subr.bf16.mxu0 %v2919
        %3140 = vmatpush1.bf16.msra.mxu0 %v2918
        %3141 = vmatprep.subr.bf16.mxu0 %v2923
        %3142 = vmatpush1.bf16.msra.mxu0 %v2922
        %3143 = vmatprep.subr.bf16.mxu0 %v2927
        %3144 = vmatpush1.bf16.msra.mxu0 %v2926
        %3145 = vmatprep.subr.bf16.mxu0 %v2931
        %3146 = vmatpush1.bf16.msra.mxu0 %v2930
        %3147 = vmatprep.subr.bf16.mxu0 %v2935
        %3148 = vmatpush1.bf16.msra.mxu0 %v2934
        %3149 = vmatprep.subr.bf16.mxu0 %v2939
        %3150 = vmatpush1.bf16.msra.mxu0 %v2938
        %3151 = vmatprep.subr.bf16.mxu0 %v2943
        %3152 = vmatpush1.bf16.msra.mxu0 %v2942
        %3153 = vmatprep.subr.bf16.mxu0 %v2947
        %3154 = vmatpush1.bf16.msra.mxu0 %v2946
        %3155 = vmatprep.subr.bf16.mxu0 %v2951
        %3156 = vmatpush1.bf16.msra.mxu0 %v2950
        %3157 = vmatprep.mubr.bf16.mxu0 %v431
        %3158 = vmatmul.mubr.bf16.gmra.mrb[0].mxu0 %v430
        %v3159 = vpop.f32.mrb[0].mxu0
        %v3160 = vadd.f32 %v3117, %v3159
        %v3161 = vpop.f32.mrb[0].mxu0
        %v3162 = vadd.f32 %v3119, %v3161
        %v3163 = vpop.f32.mrb[0].mxu0
        %v3164 = vadd.f32 %v3121, %v3163
        %v3165 = vpop.f32.mrb[0].mxu0
        %v3166 = vadd.f32 %v3123, %v3165
        %3167 = vdwg.mxu0
        %3168 = vmatprep.subr.bf16.mxu0 %v2829
        %3169 = vmatpush1.bf16.msra.mxu0 %v2828
        %3170 = vmatprep.subr.bf16.mxu0 %v2833
        %3171 = vmatpush1.bf16.msra.mxu0 %v2832
        %3172 = vmatprep.subr.bf16.mxu0 %v2837
        %3173 = vmatpush1.bf16.msra.mxu0 %v2836
        %3174 = vmatprep.subr.bf16.mxu0 %v2841
        %3175 = vmatpush1.bf16.msra.mxu0 %v2840
        %3176 = vmatprep.subr.bf16.mxu0 %v2845
        %3177 = vmatpush1.bf16.msra.mxu0 %v2844
        %3178 = vmatprep.subr.bf16.mxu0 %v2849
        %3179 = vmatpush1.bf16.msra.mxu0 %v2848
        %3180 = vmatprep.subr.bf16.mxu0 %v2853
        %3181 = vmatpush1.bf16.msra.mxu0 %v2852
        %3182 = vmatprep.subr.bf16.mxu0 %v2857
        %3183 = vmatpush1.bf16.msra.mxu0 %v2856
        %3184 = vmatprep.subr.bf16.mxu0 %v2861
        %3185 = vmatpush1.bf16.msra.mxu0 %v2860
        %3186 = vmatprep.subr.bf16.mxu0 %v2865
        %3187 = vmatpush1.bf16.msra.mxu0 %v2864
        %3188 = vmatprep.subr.bf16.mxu0 %v2869
        %3189 = vmatpush1.bf16.msra.mxu0 %v2868
        %3190 = vmatprep.subr.bf16.mxu0 %v2873
        %3191 = vmatpush1.bf16.msra.mxu0 %v2872
        %3192 = vmatprep.subr.bf16.mxu0 %v2877
        %3193 = vmatpush1.bf16.msra.mxu0 %v2876
        %3194 = vmatprep.subr.bf16.mxu0 %v2881
        %3195 = vmatpush1.bf16.msra.mxu0 %v2880
        %3196 = vmatprep.subr.bf16.mxu0 %v2885
        %3197 = vmatpush1.bf16.msra.mxu0 %v2884
        %3198 = vmatprep.subr.bf16.mxu0 %v2889
        %3199 = vmatpush1.bf16.msra.mxu0 %v2888
        %3200 = vmatprep.mubr.bf16.mxu0 %v429
        %3201 = vmatmul.mubr.bf16.gmra.mrb[0].mxu0 %v428
        %v3202 = vpop.f32.mrb[0].mxu0
        %v3203 = vadd.f32 0.0, %v3202
        %v3204 = vpop.f32.mrb[0].mxu0
        %v3205 = vadd.f32 0.0, %v3204
        %v3206 = vpop.f32.mrb[0].mxu0
        %v3207 = vadd.f32 0.0, %v3206
        %v3208 = vpop.f32.mrb[0].mxu0
        %v3209 = vadd.f32 0.0, %v3208
        %3210 = vdwg.mxu0
        %3211 = vmatprep.subr.bf16.mxu0 %v2893
        %3212 = vmatpush1.bf16.msra.mxu0 %v2892
        %3213 = vmatprep.subr.bf16.mxu0 %v2897
        %3214 = vmatpush1.bf16.msra.mxu0 %v2896
        %3215 = vmatprep.subr.bf16.mxu0 %v2901
        %3216 = vmatpush1.bf16.msra.mxu0 %v2900
        %3217 = vmatprep.subr.bf16.mxu0 %v2905
        %3218 = vmatpush1.bf16.msra.mxu0 %v2904
        %3219 = vmatprep.subr.bf16.mxu0 %v2909
        %3220 = vmatpush1.bf16.msra.mxu0 %v2908
        %3221 = vmatprep.subr.bf16.mxu0 %v2913
        %3222 = vmatpush1.bf16.msra.mxu0 %v2912
        %3223 = vmatprep.subr.bf16.mxu0 %v2917
        %3224 = vmatpush1.bf16.msra.mxu0 %v2916
        %3225 = vmatprep.subr.bf16.mxu0 %v2921
        %3226 = vmatpush1.bf16.msra.mxu0 %v2920
        %3227 = vmatprep.subr.bf16.mxu0 %v2925
        %3228 = vmatpush1.bf16.msra.mxu0 %v2924
        %3229 = vmatprep.subr.bf16.mxu0 %v2929
        %3230 = vmatpush1.bf16.msra.mxu0 %v2928
        %3231 = vmatprep.subr.bf16.mxu0 %v2933
        %3232 = vmatpush1.bf16.msra.mxu0 %v2932
        %3233 = vmatprep.subr.bf16.mxu0 %v2937
        %3234 = vmatpush1.bf16.msra.mxu0 %v2936
        %3235 = vmatprep.subr.bf16.mxu0 %v2941
        %3236 = vmatpush1.bf16.msra.mxu0 %v2940
        %3237 = vmatprep.subr.bf16.mxu0 %v2945
        %3238 = vmatpush1.bf16.msra.mxu0 %v2944
        %3239 = vmatprep.subr.bf16.mxu0 %v2949
        %3240 = vmatpush1.bf16.msra.mxu0 %v2948
        %3241 = vmatprep.subr.bf16.mxu0 %v2953
        %3242 = vmatpush1.bf16.msra.mxu0 %v2952
        %3243 = vmatprep.mubr.bf16.mxu0 %v431
        %3244 = vmatmul.mubr.bf16.gmra.mrb[0].mxu0 %v430
        %v3245 = vpop.f32.mrb[0].mxu0
        %v3246 = vadd.f32 %v3203, %v3245
        %v3247 = vpop.f32.mrb[0].mxu0
        %v3248 = vadd.f32 %v3205, %v3247
        %v3249 = vpop.f32.mrb[0].mxu0
        %v3250 = vadd.f32 %v3207, %v3249
        %v3251 = vpop.f32.mrb[0].mxu0
        %v3252 = vadd.f32 %v3209, %v3251
        %3253 = vdwg.mxu0
        %v3254 = vadd.f32 %v2219, %v3160
        %v3255 = vadd.f32 %v2221, %v3162
        %v3256 = vadd.f32 %v2305, %v3246
        %v3257 = vadd.f32 %v2307, %v3248
        %v3258 = vadd.f32 %v2223, %v3164
        %v3259 = vadd.f32 %v2225, %v3166
        %v3260 = vadd.f32 %v2309, %v3250
        %v3261 = vadd.f32 %v2311, %v3252
        %v3262 = vld [vmem:[#allocation4] sm:$0xf]
        %v3264 = vlaneseq
        %v3265 = vshrl.u32 %v3264, 7
        %v3266 = vsub.s32 0, %v3265
        %v3267 = vrot.slane %v3262, %v3266
        %v3268 = vlaneseq
        %v3269 = vshrl.u32 %v3268, 7
        %v3270 = vsub.s32 1, %v3269
        %v3271 = vrot.slane %v3262, %v3270
        %v3272 = vlaneseq
        %v3273 = vshrl.u32 %v3272, 7
        %v3274 = vsub.s32 2, %v3273
        %v3275 = vrot.slane %v3262, %v3274
        %v3276 = vlaneseq
        %v3277 = vshrl.u32 %v3276, 7
        %v3278 = vsub.s32 3, %v3277
        %v3279 = vrot.slane %v3262, %v3278
        %v3284 = vadd.f32 %v3254, %v3267
        %v3285 = vadd.f32 %v3255, %v3271
        %v3286 = vadd.f32 %v3256, %v3275
        %v3287 = vadd.f32 %v3257, %v3279
        %v3288 = vadd.f32 %v3258, %v3267
        %v3289 = vadd.f32 %v3259, %v3271
        %v3290 = vadd.f32 %v3260, %v3275
        %v3291 = vadd.f32 %v3261, %v3279
        %v3292 = vmax.f32 %v3284, 0.0
        %v3293 = vmax.f32 %v3285, 0.0
        %v3294 = vmax.f32 %v3286, 0.0
        %v3295 = vmax.f32 %v3287, 0.0
        %v3296 = vmax.f32 %v3288, 0.0
        %v3297 = vmax.f32 %v3289, 0.0
        %v3298 = vmax.f32 %v3290, 0.0
        %v3299 = vmax.f32 %v3291, 0.0
        %v3300 = vpack.c.bf16 %v3296, %v3292
        %v3301 = vpack.c.bf16 %v3297, %v3293
        %v3302 = vpack.c.bf16 %v3298, %v3294
        %v3303 = vpack.c.bf16 %v3299, %v3295
        %v3305 = vshrl.u32 %v3300, 16
        %v3307 = vrot.slane %v3305, 7
        %v3308 = vshll.u32 %v3300, 16
        %v3310 = vor.u32 %v3307, %v3308
        %v3312 = vshrl.u32 %v3301, 16
        %v3314 = vrot.slane %v3312, 7
        %v3315 = vshll.u32 %v3301, 16
        %v3317 = vor.u32 %v3314, %v3315
        %v3319 = vshrl.u32 %v3302, 16
        %v3321 = vrot.slane %v3319, 7
        %v3322 = vshll.u32 %v3302, 16
        %v3324 = vor.u32 %v3321, %v3322
        %v3326 = vshrl.u32 %v3303, 16
        %v3328 = vrot.slane %v3326, 7
        %v3329 = vshll.u32 %v3303, 16
        %v3331 = vor.u32 %v3328, %v3329
        %v3336 = vsel %vm376, 0, %v3310
        %v3337 = vsel %vm376, 0, %v3317
        %v3338 = vsel %vm376, 0, %v3324
        %v3339 = vsel %vm376, 0, %v3331
        %v3340 = vsel %vm392, %v3336, 0
        %v3341 = vsel %vm392, %v3337, 0
        %v3342 = vsel %vm392, %v3338, 0
        %v3343 = vsel %vm392, %v3339, 0
        %v3344 = vrot.slane %v3308, 1
        %v3345 = vor.u32 %v3305, %v3344
        %v3346 = vrot.slane %v3315, 1
        %v3347 = vor.u32 %v3312, %v3346
        %v3348 = vrot.slane %v3322, 1
        %v3349 = vor.u32 %v3319, %v3348
        %v3350 = vrot.slane %v3329, 1
        %v3351 = vor.u32 %v3326, %v3350
        %v3356 = vsel %vm411, %v3345, 0
        %v3357 = vsel %vm411, %v3347, 0
        %v3358 = vsel %vm411, %v3349, 0
        %v3359 = vsel %vm411, %v3351, 0
        %v3360 = vsel %vm427, %v3356, 0
        %v3361 = vsel %vm427, %v3357, 0
        %v3362 = vsel %vm427, %v3358, 0
        %v3363 = vsel %vm427, %v3359, 0
        %v3364 = vld [vmem:[#allocation6] sm:$0xff]
        %v3365 = vld [vmem:[#allocation6 + $0x8] sm:$0xff]
        %v3366 = vld [vmem:[#allocation6 + $0x10] sm:$0xff]
        %v3367 = vld [vmem:[#allocation6 + $0x18] sm:$0xff]
        %v3368 = vld [vmem:[#allocation6 + $0x20] sm:$0xff]
        %v3369 = vld [vmem:[#allocation6 + $0x28] sm:$0xff]
        %v3370 = vld [vmem:[#allocation6 + $0x30] sm:$0xff]
        %v3371 = vld [vmem:[#allocation6 + $0x38] sm:$0xff]
        %v3372 = vld [vmem:[#allocation6 + $0x40] sm:$0xff]
        %v3373 = vld [vmem:[#allocation6 + $0x48] sm:$0xff]
        %v3374 = vld [vmem:[#allocation6 + $0x50] sm:$0xff]
        %v3375 = vld [vmem:[#allocation6 + $0x58] sm:$0xff]
        %v3376 = vld [vmem:[#allocation6 + $0x60] sm:$0xff]
        %v3377 = vld [vmem:[#allocation6 + $0x68] sm:$0xff]
        %v3378 = vld [vmem:[#allocation6 + $0x70] sm:$0xff]
        %v3379 = vld [vmem:[#allocation6 + $0x78] sm:$0xff]
        %v3380 = vld [vmem:[#allocation6 + $0x80] sm:$0xff]
        %v3381 = vld [vmem:[#allocation6 + $0x88] sm:$0xff]
        %v3382 = vld [vmem:[#allocation6 + $0x90] sm:$0xff]
        %v3383 = vld [vmem:[#allocation6 + $0x98] sm:$0xff]
        %v3384 = vld [vmem:[#allocation6 + $0xa0] sm:$0xff]
        %v3385 = vld [vmem:[#allocation6 + $0xa8] sm:$0xff]
        %v3386 = vld [vmem:[#allocation6 + $0xb0] sm:$0xff]
        %v3387 = vld [vmem:[#allocation6 + $0xb8] sm:$0xff]
        %v3388 = vld [vmem:[#allocation6 + $0xc0] sm:$0xff]
        %v3389 = vld [vmem:[#allocation6 + $0xc8] sm:$0xff]
        %v3390 = vld [vmem:[#allocation6 + $0xd0] sm:$0xff]
        %v3391 = vld [vmem:[#allocation6 + $0xd8] sm:$0xff]
        %v3392 = vld [vmem:[#allocation6 + $0xe0] sm:$0xff]
        %v3393 = vld [vmem:[#allocation6 + $0xe8] sm:$0xff]
        %v3394 = vld [vmem:[#allocation6 + $0xf0] sm:$0xff]
        %v3395 = vld [vmem:[#allocation6 + $0xf8] sm:$0xff]
        %v3396 = vld [vmem:[#allocation6 + $0x100] sm:$0xff]
        %v3397 = vld [vmem:[#allocation6 + $0x108] sm:$0xff]
        %v3398 = vld [vmem:[#allocation6 + $0x110] sm:$0xff]
        %v3399 = vld [vmem:[#allocation6 + $0x118] sm:$0xff]
        %v3400 = vld [vmem:[#allocation6 + $0x120] sm:$0xff]
        %v3401 = vld [vmem:[#allocation6 + $0x128] sm:$0xff]
        %v3402 = vld [vmem:[#allocation6 + $0x130] sm:$0xff]
        %v3403 = vld [vmem:[#allocation6 + $0x138] sm:$0xff]
        %v3404 = vld [vmem:[#allocation6 + $0x140] sm:$0xff]
        %v3405 = vld [vmem:[#allocation6 + $0x148] sm:$0xff]
        %v3406 = vld [vmem:[#allocation6 + $0x150] sm:$0xff]
        %v3407 = vld [vmem:[#allocation6 + $0x158] sm:$0xff]
        %v3408 = vld [vmem:[#allocation6 + $0x160] sm:$0xff]
        %v3409 = vld [vmem:[#allocation6 + $0x168] sm:$0xff]
        %v3410 = vld [vmem:[#allocation6 + $0x170] sm:$0xff]
        %v3411 = vld [vmem:[#allocation6 + $0x178] sm:$0xff]
        %v3412 = vld [vmem:[#allocation6 + $0x180] sm:$0xff]
        %v3413 = vld [vmem:[#allocation6 + $0x188] sm:$0xff]
        %v3414 = vld [vmem:[#allocation6 + $0x190] sm:$0xff]
        %v3415 = vld [vmem:[#allocation6 + $0x198] sm:$0xff]
        %v3416 = vld [vmem:[#allocation6 + $0x1a0] sm:$0xff]
        %v3417 = vld [vmem:[#allocation6 + $0x1a8] sm:$0xff]
        %v3418 = vld [vmem:[#allocation6 + $0x1b0] sm:$0xff]
        %v3419 = vld [vmem:[#allocation6 + $0x1b8] sm:$0xff]
        %v3420 = vld [vmem:[#allocation6 + $0x1c0] sm:$0xff]
        %v3421 = vld [vmem:[#allocation6 + $0x1c8] sm:$0xff]
        %v3422 = vld [vmem:[#allocation6 + $0x1d0] sm:$0xff]
        %v3423 = vld [vmem:[#allocation6 + $0x1d8] sm:$0xff]
        %v3424 = vld [vmem:[#allocation6 + $0x1e0] sm:$0xff]
        %v3425 = vld [vmem:[#allocation6 + $0x1e8] sm:$0xff]
        %v3426 = vld [vmem:[#allocation6 + $0x1f0] sm:$0xff]
        %v3427 = vld [vmem:[#allocation6 + $0x1f8] sm:$0xff]
        %v3428 = vld [vmem:[#allocation6 + $0x200] sm:$0xff]
        %v3429 = vld [vmem:[#allocation6 + $0x208] sm:$0xff]
        %v3430 = vld [vmem:[#allocation6 + $0x210] sm:$0xff]
        %v3431 = vld [vmem:[#allocation6 + $0x218] sm:$0xff]
        %v3432 = vld [vmem:[#allocation6 + $0x220] sm:$0xff]
        %v3433 = vld [vmem:[#allocation6 + $0x228] sm:$0xff]
        %v3434 = vld [vmem:[#allocation6 + $0x230] sm:$0xff]
        %v3435 = vld [vmem:[#allocation6 + $0x238] sm:$0xff]
        %v3436 = vld [vmem:[#allocation6 + $0x240] sm:$0xff]
        %v3437 = vld [vmem:[#allocation6 + $0x248] sm:$0xff]
        %v3438 = vld [vmem:[#allocation6 + $0x250] sm:$0xff]
        %v3439 = vld [vmem:[#allocation6 + $0x258] sm:$0xff]
        %v3440 = vld [vmem:[#allocation6 + $0x260] sm:$0xff]
        %v3441 = vld [vmem:[#allocation6 + $0x268] sm:$0xff]
        %v3442 = vld [vmem:[#allocation6 + $0x270] sm:$0xff]
        %v3443 = vld [vmem:[#allocation6 + $0x278] sm:$0xff]
        %v3444 = vld [vmem:[#allocation6 + $0x280] sm:$0xff]
        %v3445 = vld [vmem:[#allocation6 + $0x288] sm:$0xff]
        %v3446 = vld [vmem:[#allocation6 + $0x290] sm:$0xff]
        %v3447 = vld [vmem:[#allocation6 + $0x298] sm:$0xff]
        %v3448 = vld [vmem:[#allocation6 + $0x2a0] sm:$0xff]
        %v3449 = vld [vmem:[#allocation6 + $0x2a8] sm:$0xff]
        %v3450 = vld [vmem:[#allocation6 + $0x2b0] sm:$0xff]
        %v3451 = vld [vmem:[#allocation6 + $0x2b8] sm:$0xff]
        %v3452 = vld [vmem:[#allocation6 + $0x2c0] sm:$0xff]
        %v3453 = vld [vmem:[#allocation6 + $0x2c8] sm:$0xff]
        %v3454 = vld [vmem:[#allocation6 + $0x2d0] sm:$0xff]
        %v3455 = vld [vmem:[#allocation6 + $0x2d8] sm:$0xff]
        %v3456 = vld [vmem:[#allocation6 + $0x2e0] sm:$0xff]
        %v3457 = vld [vmem:[#allocation6 + $0x2e8] sm:$0xff]
        %v3458 = vld [vmem:[#allocation6 + $0x2f0] sm:$0xff]
        %v3459 = vld [vmem:[#allocation6 + $0x2f8] sm:$0xff]
        %v3460 = vld [vmem:[#allocation6 + $0x300] sm:$0xff]
        %v3461 = vld [vmem:[#allocation6 + $0x308] sm:$0xff]
        %v3462 = vld [vmem:[#allocation6 + $0x310] sm:$0xff]
        %v3463 = vld [vmem:[#allocation6 + $0x318] sm:$0xff]
        %v3464 = vld [vmem:[#allocation6 + $0x320] sm:$0xff]
        %v3465 = vld [vmem:[#allocation6 + $0x328] sm:$0xff]
        %v3466 = vld [vmem:[#allocation6 + $0x330] sm:$0xff]
        %v3467 = vld [vmem:[#allocation6 + $0x338] sm:$0xff]
        %v3468 = vld [vmem:[#allocation6 + $0x340] sm:$0xff]
        %v3469 = vld [vmem:[#allocation6 + $0x348] sm:$0xff]
        %v3470 = vld [vmem:[#allocation6 + $0x350] sm:$0xff]
        %v3471 = vld [vmem:[#allocation6 + $0x358] sm:$0xff]
        %v3472 = vld [vmem:[#allocation6 + $0x360] sm:$0xff]
        %v3473 = vld [vmem:[#allocation6 + $0x368] sm:$0xff]
        %v3474 = vld [vmem:[#allocation6 + $0x370] sm:$0xff]
        %v3475 = vld [vmem:[#allocation6 + $0x378] sm:$0xff]
        %v3476 = vld [vmem:[#allocation6 + $0x380] sm:$0xff]
        %v3477 = vld [vmem:[#allocation6 + $0x388] sm:$0xff]
        %v3478 = vld [vmem:[#allocation6 + $0x390] sm:$0xff]
        %v3479 = vld [vmem:[#allocation6 + $0x398] sm:$0xff]
        %v3480 = vld [vmem:[#allocation6 + $0x3a0] sm:$0xff]
        %v3481 = vld [vmem:[#allocation6 + $0x3a8] sm:$0xff]
        %v3482 = vld [vmem:[#allocation6 + $0x3b0] sm:$0xff]
        %v3483 = vld [vmem:[#allocation6 + $0x3b8] sm:$0xff]
        %v3484 = vld [vmem:[#allocation6 + $0x3c0] sm:$0xff]
        %v3485 = vld [vmem:[#allocation6 + $0x3c8] sm:$0xff]
        %v3486 = vld [vmem:[#allocation6 + $0x3d0] sm:$0xff]
        %v3487 = vld [vmem:[#allocation6 + $0x3d8] sm:$0xff]
        %v3488 = vld [vmem:[#allocation6 + $0x3e0] sm:$0xff]
        %v3489 = vld [vmem:[#allocation6 + $0x3e8] sm:$0xff]
        %v3490 = vld [vmem:[#allocation6 + $0x3f0] sm:$0xff]
        %v3491 = vld [vmem:[#allocation6 + $0x3f8] sm:$0xff]
        %s3492 = scalar_lea.vmem [#allocation6], 1024
        %v3493 = vld [vmem:[%s3492] sm:$0xff]
        %v3494 = vld [vmem:[%s3492 + $0x8] sm:$0xff]
        %v3495 = vld [vmem:[%s3492 + $0x10] sm:$0xff]
        %v3496 = vld [vmem:[%s3492 + $0x18] sm:$0xff]
        %v3497 = vld [vmem:[%s3492 + $0x20] sm:$0xff]
        %v3498 = vld [vmem:[%s3492 + $0x28] sm:$0xff]
        %v3499 = vld [vmem:[%s3492 + $0x30] sm:$0xff]
        %v3500 = vld [vmem:[%s3492 + $0x38] sm:$0xff]
        %v3501 = vld [vmem:[%s3492 + $0x40] sm:$0xff]
        %v3502 = vld [vmem:[%s3492 + $0x48] sm:$0xff]
        %v3503 = vld [vmem:[%s3492 + $0x50] sm:$0xff]
        %v3504 = vld [vmem:[%s3492 + $0x58] sm:$0xff]
        %v3505 = vld [vmem:[%s3492 + $0x60] sm:$0xff]
        %v3506 = vld [vmem:[%s3492 + $0x68] sm:$0xff]
        %v3507 = vld [vmem:[%s3492 + $0x70] sm:$0xff]
        %v3508 = vld [vmem:[%s3492 + $0x78] sm:$0xff]
        %v3509 = vld [vmem:[%s3492 + $0x80] sm:$0xff]
        %v3510 = vld [vmem:[%s3492 + $0x88] sm:$0xff]
        %v3511 = vld [vmem:[%s3492 + $0x90] sm:$0xff]
        %v3512 = vld [vmem:[%s3492 + $0x98] sm:$0xff]
        %v3513 = vld [vmem:[%s3492 + $0xa0] sm:$0xff]
        %v3514 = vld [vmem:[%s3492 + $0xa8] sm:$0xff]
        %v3515 = vld [vmem:[%s3492 + $0xb0] sm:$0xff]
        %v3516 = vld [vmem:[%s3492 + $0xb8] sm:$0xff]
        %v3517 = vld [vmem:[%s3492 + $0xc0] sm:$0xff]
        %v3518 = vld [vmem:[%s3492 + $0xc8] sm:$0xff]
        %v3519 = vld [vmem:[%s3492 + $0xd0] sm:$0xff]
        %v3520 = vld [vmem:[%s3492 + $0xd8] sm:$0xff]
        %v3521 = vld [vmem:[%s3492 + $0xe0] sm:$0xff]
        %v3522 = vld [vmem:[%s3492 + $0xe8] sm:$0xff]
        %v3523 = vld [vmem:[%s3492 + $0xf0] sm:$0xff]
        %v3524 = vld [vmem:[%s3492 + $0xf8] sm:$0xff]
        %v3525 = vld [vmem:[%s3492 + $0x100] sm:$0xff]
        %v3526 = vld [vmem:[%s3492 + $0x108] sm:$0xff]
        %v3527 = vld [vmem:[%s3492 + $0x110] sm:$0xff]
        %v3528 = vld [vmem:[%s3492 + $0x118] sm:$0xff]
        %v3529 = vld [vmem:[%s3492 + $0x120] sm:$0xff]
        %v3530 = vld [vmem:[%s3492 + $0x128] sm:$0xff]
        %v3531 = vld [vmem:[%s3492 + $0x130] sm:$0xff]
        %v3532 = vld [vmem:[%s3492 + $0x138] sm:$0xff]
        %v3533 = vld [vmem:[%s3492 + $0x140] sm:$0xff]
        %v3534 = vld [vmem:[%s3492 + $0x148] sm:$0xff]
        %v3535 = vld [vmem:[%s3492 + $0x150] sm:$0xff]
        %v3536 = vld [vmem:[%s3492 + $0x158] sm:$0xff]
        %v3537 = vld [vmem:[%s3492 + $0x160] sm:$0xff]
        %v3538 = vld [vmem:[%s3492 + $0x168] sm:$0xff]
        %v3539 = vld [vmem:[%s3492 + $0x170] sm:$0xff]
        %v3540 = vld [vmem:[%s3492 + $0x178] sm:$0xff]
        %v3541 = vld [vmem:[%s3492 + $0x180] sm:$0xff]
        %v3542 = vld [vmem:[%s3492 + $0x188] sm:$0xff]
        %v3543 = vld [vmem:[%s3492 + $0x190] sm:$0xff]
        %v3544 = vld [vmem:[%s3492 + $0x198] sm:$0xff]
        %v3545 = vld [vmem:[%s3492 + $0x1a0] sm:$0xff]
        %v3546 = vld [vmem:[%s3492 + $0x1a8] sm:$0xff]
        %v3547 = vld [vmem:[%s3492 + $0x1b0] sm:$0xff]
        %v3548 = vld [vmem:[%s3492 + $0x1b8] sm:$0xff]
        %v3549 = vld [vmem:[%s3492 + $0x1c0] sm:$0xff]
        %v3550 = vld [vmem:[%s3492 + $0x1c8] sm:$0xff]
        %v3551 = vld [vmem:[%s3492 + $0x1d0] sm:$0xff]
        %v3552 = vld [vmem:[%s3492 + $0x1d8] sm:$0xff]
        %v3553 = vld [vmem:[%s3492 + $0x1e0] sm:$0xff]
        %v3554 = vld [vmem:[%s3492 + $0x1e8] sm:$0xff]
        %v3555 = vld [vmem:[%s3492 + $0x1f0] sm:$0xff]
        %v3556 = vld [vmem:[%s3492 + $0x1f8] sm:$0xff]
        %v3557 = vld [vmem:[%s3492 + $0x200] sm:$0xff]
        %v3558 = vld [vmem:[%s3492 + $0x208] sm:$0xff]
        %v3559 = vld [vmem:[%s3492 + $0x210] sm:$0xff]
        %v3560 = vld [vmem:[%s3492 + $0x218] sm:$0xff]
        %v3561 = vld [vmem:[%s3492 + $0x220] sm:$0xff]
        %v3562 = vld [vmem:[%s3492 + $0x228] sm:$0xff]
        %v3563 = vld [vmem:[%s3492 + $0x230] sm:$0xff]
        %v3564 = vld [vmem:[%s3492 + $0x238] sm:$0xff]
        %v3565 = vld [vmem:[%s3492 + $0x240] sm:$0xff]
        %v3566 = vld [vmem:[%s3492 + $0x248] sm:$0xff]
        %v3567 = vld [vmem:[%s3492 + $0x250] sm:$0xff]
        %v3568 = vld [vmem:[%s3492 + $0x258] sm:$0xff]
        %v3569 = vld [vmem:[%s3492 + $0x260] sm:$0xff]
        %v3570 = vld [vmem:[%s3492 + $0x268] sm:$0xff]
        %v3571 = vld [vmem:[%s3492 + $0x270] sm:$0xff]
        %v3572 = vld [vmem:[%s3492 + $0x278] sm:$0xff]
        %v3573 = vld [vmem:[%s3492 + $0x280] sm:$0xff]
        %v3574 = vld [vmem:[%s3492 + $0x288] sm:$0xff]
        %v3575 = vld [vmem:[%s3492 + $0x290] sm:$0xff]
        %v3576 = vld [vmem:[%s3492 + $0x298] sm:$0xff]
        %v3577 = vld [vmem:[%s3492 + $0x2a0] sm:$0xff]
        %v3578 = vld [vmem:[%s3492 + $0x2a8] sm:$0xff]
        %v3579 = vld [vmem:[%s3492 + $0x2b0] sm:$0xff]
        %v3580 = vld [vmem:[%s3492 + $0x2b8] sm:$0xff]
        %v3581 = vld [vmem:[%s3492 + $0x2c0] sm:$0xff]
        %v3582 = vld [vmem:[%s3492 + $0x2c8] sm:$0xff]
        %v3583 = vld [vmem:[%s3492 + $0x2d0] sm:$0xff]
        %v3584 = vld [vmem:[%s3492 + $0x2d8] sm:$0xff]
        %v3585 = vld [vmem:[%s3492 + $0x2e0] sm:$0xff]
        %v3586 = vld [vmem:[%s3492 + $0x2e8] sm:$0xff]
        %v3587 = vld [vmem:[%s3492 + $0x2f0] sm:$0xff]
        %v3588 = vld [vmem:[%s3492 + $0x2f8] sm:$0xff]
        %v3589 = vld [vmem:[%s3492 + $0x300] sm:$0xff]
        %v3590 = vld [vmem:[%s3492 + $0x308] sm:$0xff]
        %v3591 = vld [vmem:[%s3492 + $0x310] sm:$0xff]
        %v3592 = vld [vmem:[%s3492 + $0x318] sm:$0xff]
        %v3593 = vld [vmem:[%s3492 + $0x320] sm:$0xff]
        %v3594 = vld [vmem:[%s3492 + $0x328] sm:$0xff]
        %v3595 = vld [vmem:[%s3492 + $0x330] sm:$0xff]
        %v3596 = vld [vmem:[%s3492 + $0x338] sm:$0xff]
        %v3597 = vld [vmem:[%s3492 + $0x340] sm:$0xff]
        %v3598 = vld [vmem:[%s3492 + $0x348] sm:$0xff]
        %v3599 = vld [vmem:[%s3492 + $0x350] sm:$0xff]
        %v3600 = vld [vmem:[%s3492 + $0x358] sm:$0xff]
        %v3601 = vld [vmem:[%s3492 + $0x360] sm:$0xff]
        %v3602 = vld [vmem:[%s3492 + $0x368] sm:$0xff]
        %v3603 = vld [vmem:[%s3492 + $0x370] sm:$0xff]
        %v3604 = vld [vmem:[%s3492 + $0x378] sm:$0xff]
        %v3605 = vld [vmem:[%s3492 + $0x380] sm:$0xff]
        %v3606 = vld [vmem:[%s3492 + $0x388] sm:$0xff]
        %v3607 = vld [vmem:[%s3492 + $0x390] sm:$0xff]
        %v3608 = vld [vmem:[%s3492 + $0x398] sm:$0xff]
        %v3609 = vld [vmem:[%s3492 + $0x3a0] sm:$0xff]
        %v3610 = vld [vmem:[%s3492 + $0x3a8] sm:$0xff]
        %v3611 = vld [vmem:[%s3492 + $0x3b0] sm:$0xff]
        %v3612 = vld [vmem:[%s3492 + $0x3b8] sm:$0xff]
        %v3613 = vld [vmem:[%s3492 + $0x3c0] sm:$0xff]
        %v3614 = vld [vmem:[%s3492 + $0x3c8] sm:$0xff]
        %v3615 = vld [vmem:[%s3492 + $0x3d0] sm:$0xff]
        %v3616 = vld [vmem:[%s3492 + $0x3d8] sm:$0xff]
        %v3617 = vld [vmem:[%s3492 + $0x3e0] sm:$0xff]
        %v3618 = vld [vmem:[%s3492 + $0x3e8] sm:$0xff]
        %v3619 = vld [vmem:[%s3492 + $0x3f0] sm:$0xff]
        %v3620 = vld [vmem:[%s3492 + $0x3f8] sm:$0xff]
        %v3749 = vunpack.c.l.b16 %v3493
        %v3750 = vunpack.c.h.b16 %v3493
        %v3751 = vunpack.c.l.b16 %v3494
        %v3752 = vunpack.c.h.b16 %v3494
        %v3753 = vunpack.c.l.b16 %v3495
        %v3754 = vunpack.c.h.b16 %v3495
        %v3755 = vunpack.c.l.b16 %v3496
        %v3756 = vunpack.c.h.b16 %v3496
        %v3757 = vunpack.c.l.b16 %v3497
        %v3758 = vunpack.c.h.b16 %v3497
        %v3759 = vunpack.c.l.b16 %v3498
        %v3760 = vunpack.c.h.b16 %v3498
        %v3761 = vunpack.c.l.b16 %v3499
        %v3762 = vunpack.c.h.b16 %v3499
        %v3763 = vunpack.c.l.b16 %v3500
        %v3764 = vunpack.c.h.b16 %v3500
        %v3765 = vunpack.c.l.b16 %v3501
        %v3766 = vunpack.c.h.b16 %v3501
        %v3767 = vunpack.c.l.b16 %v3502
        %v3768 = vunpack.c.h.b16 %v3502
        %v3769 = vunpack.c.l.b16 %v3503
        %v3770 = vunpack.c.h.b16 %v3503
        %v3771 = vunpack.c.l.b16 %v3504
        %v3772 = vunpack.c.h.b16 %v3504
        %v3773 = vunpack.c.l.b16 %v3505
        %v3774 = vunpack.c.h.b16 %v3505
        %v3775 = vunpack.c.l.b16 %v3506
        %v3776 = vunpack.c.h.b16 %v3506
        %v3777 = vunpack.c.l.b16 %v3507
        %v3778 = vunpack.c.h.b16 %v3507
        %v3779 = vunpack.c.l.b16 %v3508
        %v3780 = vunpack.c.h.b16 %v3508
        %v3781 = vunpack.c.l.b16 %v3509
        %v3782 = vunpack.c.h.b16 %v3509
        %v3783 = vunpack.c.l.b16 %v3510
        %v3784 = vunpack.c.h.b16 %v3510
        %v3785 = vunpack.c.l.b16 %v3511
        %v3786 = vunpack.c.h.b16 %v3511
        %v3787 = vunpack.c.l.b16 %v3512
        %v3788 = vunpack.c.h.b16 %v3512
        %v3789 = vunpack.c.l.b16 %v3513
        %v3790 = vunpack.c.h.b16 %v3513
        %v3791 = vunpack.c.l.b16 %v3514
        %v3792 = vunpack.c.h.b16 %v3514
        %v3793 = vunpack.c.l.b16 %v3515
        %v3794 = vunpack.c.h.b16 %v3515
        %v3795 = vunpack.c.l.b16 %v3516
        %v3796 = vunpack.c.h.b16 %v3516
        %v3797 = vunpack.c.l.b16 %v3517
        %v3798 = vunpack.c.h.b16 %v3517
        %v3799 = vunpack.c.l.b16 %v3518
        %v3800 = vunpack.c.h.b16 %v3518
        %v3801 = vunpack.c.l.b16 %v3519
        %v3802 = vunpack.c.h.b16 %v3519
        %v3803 = vunpack.c.l.b16 %v3520
        %v3804 = vunpack.c.h.b16 %v3520
        %v3805 = vunpack.c.l.b16 %v3521
        %v3806 = vunpack.c.h.b16 %v3521
        %v3807 = vunpack.c.l.b16 %v3522
        %v3808 = vunpack.c.h.b16 %v3522
        %v3809 = vunpack.c.l.b16 %v3523
        %v3810 = vunpack.c.h.b16 %v3523
        %v3811 = vunpack.c.l.b16 %v3524
        %v3812 = vunpack.c.h.b16 %v3524
        %v3813 = vunpack.c.l.b16 %v3525
        %v3814 = vunpack.c.h.b16 %v3525
        %v3815 = vunpack.c.l.b16 %v3526
        %v3816 = vunpack.c.h.b16 %v3526
        %v3817 = vunpack.c.l.b16 %v3527
        %v3818 = vunpack.c.h.b16 %v3527
        %v3819 = vunpack.c.l.b16 %v3528
        %v3820 = vunpack.c.h.b16 %v3528
        %v3821 = vunpack.c.l.b16 %v3529
        %v3822 = vunpack.c.h.b16 %v3529
        %v3823 = vunpack.c.l.b16 %v3530
        %v3824 = vunpack.c.h.b16 %v3530
        %v3825 = vunpack.c.l.b16 %v3531
        %v3826 = vunpack.c.h.b16 %v3531
        %v3827 = vunpack.c.l.b16 %v3532
        %v3828 = vunpack.c.h.b16 %v3532
        %v3829 = vunpack.c.l.b16 %v3533
        %v3830 = vunpack.c.h.b16 %v3533
        %v3831 = vunpack.c.l.b16 %v3534
        %v3832 = vunpack.c.h.b16 %v3534
        %v3833 = vunpack.c.l.b16 %v3535
        %v3834 = vunpack.c.h.b16 %v3535
        %v3835 = vunpack.c.l.b16 %v3536
        %v3836 = vunpack.c.h.b16 %v3536
        %v3837 = vunpack.c.l.b16 %v3537
        %v3838 = vunpack.c.h.b16 %v3537
        %v3839 = vunpack.c.l.b16 %v3538
        %v3840 = vunpack.c.h.b16 %v3538
        %v3841 = vunpack.c.l.b16 %v3539
        %v3842 = vunpack.c.h.b16 %v3539
        %v3843 = vunpack.c.l.b16 %v3540
        %v3844 = vunpack.c.h.b16 %v3540
        %v3845 = vunpack.c.l.b16 %v3541
        %v3846 = vunpack.c.h.b16 %v3541
        %v3847 = vunpack.c.l.b16 %v3542
        %v3848 = vunpack.c.h.b16 %v3542
        %v3849 = vunpack.c.l.b16 %v3543
        %v3850 = vunpack.c.h.b16 %v3543
        %v3851 = vunpack.c.l.b16 %v3544
        %v3852 = vunpack.c.h.b16 %v3544
        %v3853 = vunpack.c.l.b16 %v3545
        %v3854 = vunpack.c.h.b16 %v3545
        %v3855 = vunpack.c.l.b16 %v3546
        %v3856 = vunpack.c.h.b16 %v3546
        %v3857 = vunpack.c.l.b16 %v3547
        %v3858 = vunpack.c.h.b16 %v3547
        %v3859 = vunpack.c.l.b16 %v3548
        %v3860 = vunpack.c.h.b16 %v3548
        %v3861 = vunpack.c.l.b16 %v3549
        %v3862 = vunpack.c.h.b16 %v3549
        %v3863 = vunpack.c.l.b16 %v3550
        %v3864 = vunpack.c.h.b16 %v3550
        %v3865 = vunpack.c.l.b16 %v3551
        %v3866 = vunpack.c.h.b16 %v3551
        %v3867 = vunpack.c.l.b16 %v3552
        %v3868 = vunpack.c.h.b16 %v3552
        %v3869 = vunpack.c.l.b16 %v3553
        %v3870 = vunpack.c.h.b16 %v3553
        %v3871 = vunpack.c.l.b16 %v3554
        %v3872 = vunpack.c.h.b16 %v3554
        %v3873 = vunpack.c.l.b16 %v3555
        %v3874 = vunpack.c.h.b16 %v3555
        %v3875 = vunpack.c.l.b16 %v3556
        %v3876 = vunpack.c.h.b16 %v3556
        %v3877 = vunpack.c.l.b16 %v3557
        %v3878 = vunpack.c.h.b16 %v3557
        %v3879 = vunpack.c.l.b16 %v3558
        %v3880 = vunpack.c.h.b16 %v3558
        %v3881 = vunpack.c.l.b16 %v3559
        %v3882 = vunpack.c.h.b16 %v3559
        %v3883 = vunpack.c.l.b16 %v3560
        %v3884 = vunpack.c.h.b16 %v3560
        %v3885 = vunpack.c.l.b16 %v3561
        %v3886 = vunpack.c.h.b16 %v3561
        %v3887 = vunpack.c.l.b16 %v3562
        %v3888 = vunpack.c.h.b16 %v3562
        %v3889 = vunpack.c.l.b16 %v3563
        %v3890 = vunpack.c.h.b16 %v3563
        %v3891 = vunpack.c.l.b16 %v3564
        %v3892 = vunpack.c.h.b16 %v3564
        %v3893 = vunpack.c.l.b16 %v3565
        %v3894 = vunpack.c.h.b16 %v3565
        %v3895 = vunpack.c.l.b16 %v3566
        %v3896 = vunpack.c.h.b16 %v3566
        %v3897 = vunpack.c.l.b16 %v3567
        %v3898 = vunpack.c.h.b16 %v3567
        %v3899 = vunpack.c.l.b16 %v3568
        %v3900 = vunpack.c.h.b16 %v3568
        %v3901 = vunpack.c.l.b16 %v3569
        %v3902 = vunpack.c.h.b16 %v3569
        %v3903 = vunpack.c.l.b16 %v3570
        %v3904 = vunpack.c.h.b16 %v3570
        %v3905 = vunpack.c.l.b16 %v3571
        %v3906 = vunpack.c.h.b16 %v3571
        %v3907 = vunpack.c.l.b16 %v3572
        %v3908 = vunpack.c.h.b16 %v3572
        %v3909 = vunpack.c.l.b16 %v3573
        %v3910 = vunpack.c.h.b16 %v3573
        %v3911 = vunpack.c.l.b16 %v3574
        %v3912 = vunpack.c.h.b16 %v3574
        %v3913 = vunpack.c.l.b16 %v3575
        %v3914 = vunpack.c.h.b16 %v3575
        %v3915 = vunpack.c.l.b16 %v3576
        %v3916 = vunpack.c.h.b16 %v3576
        %v3917 = vunpack.c.l.b16 %v3577
        %v3918 = vunpack.c.h.b16 %v3577
        %v3919 = vunpack.c.l.b16 %v3578
        %v3920 = vunpack.c.h.b16 %v3578
        %v3921 = vunpack.c.l.b16 %v3579
        %v3922 = vunpack.c.h.b16 %v3579
        %v3923 = vunpack.c.l.b16 %v3580
        %v3924 = vunpack.c.h.b16 %v3580
        %v3925 = vunpack.c.l.b16 %v3581
        %v3926 = vunpack.c.h.b16 %v3581
        %v3927 = vunpack.c.l.b16 %v3582
        %v3928 = vunpack.c.h.b16 %v3582
        %v3929 = vunpack.c.l.b16 %v3583
        %v3930 = vunpack.c.h.b16 %v3583
        %v3931 = vunpack.c.l.b16 %v3584
        %v3932 = vunpack.c.h.b16 %v3584
        %v3933 = vunpack.c.l.b16 %v3585
        %v3934 = vunpack.c.h.b16 %v3585
        %v3935 = vunpack.c.l.b16 %v3586
        %v3936 = vunpack.c.h.b16 %v3586
        %v3937 = vunpack.c.l.b16 %v3587
        %v3938 = vunpack.c.h.b16 %v3587
        %v3939 = vunpack.c.l.b16 %v3588
        %v3940 = vunpack.c.h.b16 %v3588
        %v3941 = vunpack.c.l.b16 %v3589
        %v3942 = vunpack.c.h.b16 %v3589
        %v3943 = vunpack.c.l.b16 %v3590
        %v3944 = vunpack.c.h.b16 %v3590
        %v3945 = vunpack.c.l.b16 %v3591
        %v3946 = vunpack.c.h.b16 %v3591
        %v3947 = vunpack.c.l.b16 %v3592
        %v3948 = vunpack.c.h.b16 %v3592
        %v3949 = vunpack.c.l.b16 %v3593
        %v3950 = vunpack.c.h.b16 %v3593
        %v3951 = vunpack.c.l.b16 %v3594
        %v3952 = vunpack.c.h.b16 %v3594
        %v3953 = vunpack.c.l.b16 %v3595
        %v3954 = vunpack.c.h.b16 %v3595
        %v3955 = vunpack.c.l.b16 %v3596
        %v3956 = vunpack.c.h.b16 %v3596
        %v3957 = vunpack.c.l.b16 %v3597
        %v3958 = vunpack.c.h.b16 %v3597
        %v3959 = vunpack.c.l.b16 %v3598
        %v3960 = vunpack.c.h.b16 %v3598
        %v3961 = vunpack.c.l.b16 %v3599
        %v3962 = vunpack.c.h.b16 %v3599
        %v3963 = vunpack.c.l.b16 %v3600
        %v3964 = vunpack.c.h.b16 %v3600
        %v3965 = vunpack.c.l.b16 %v3601
        %v3966 = vunpack.c.h.b16 %v3601
        %v3967 = vunpack.c.l.b16 %v3602
        %v3968 = vunpack.c.h.b16 %v3602
        %v3969 = vunpack.c.l.b16 %v3603
        %v3970 = vunpack.c.h.b16 %v3603
        %v3971 = vunpack.c.l.b16 %v3604
        %v3972 = vunpack.c.h.b16 %v3604
        %v3973 = vunpack.c.l.b16 %v3605
        %v3974 = vunpack.c.h.b16 %v3605
        %v3975 = vunpack.c.l.b16 %v3606
        %v3976 = vunpack.c.h.b16 %v3606
        %v3977 = vunpack.c.l.b16 %v3607
        %v3978 = vunpack.c.h.b16 %v3607
        %v3979 = vunpack.c.l.b16 %v3608
        %v3980 = vunpack.c.h.b16 %v3608
        %v3981 = vunpack.c.l.b16 %v3609
        %v3982 = vunpack.c.h.b16 %v3609
        %v3983 = vunpack.c.l.b16 %v3610
        %v3984 = vunpack.c.h.b16 %v3610
        %v3985 = vunpack.c.l.b16 %v3611
        %v3986 = vunpack.c.h.b16 %v3611
        %v3987 = vunpack.c.l.b16 %v3612
        %v3988 = vunpack.c.h.b16 %v3612
        %v3989 = vunpack.c.l.b16 %v3613
        %v3990 = vunpack.c.h.b16 %v3613
        %v3991 = vunpack.c.l.b16 %v3614
        %v3992 = vunpack.c.h.b16 %v3614
        %v3993 = vunpack.c.l.b16 %v3615
        %v3994 = vunpack.c.h.b16 %v3615
        %v3995 = vunpack.c.l.b16 %v3616
        %v3996 = vunpack.c.h.b16 %v3616
        %v3997 = vunpack.c.l.b16 %v3617
        %v3998 = vunpack.c.h.b16 %v3617
        %v3999 = vunpack.c.l.b16 %v3618
        %v4000 = vunpack.c.h.b16 %v3618
        %v4001 = vunpack.c.l.b16 %v3619
        %v4002 = vunpack.c.h.b16 %v3619
        %v4003 = vunpack.c.l.b16 %v3620
        %v4004 = vunpack.c.h.b16 %v3620
        %v4005 = vpack.c.b16 %v3753, %v3749
        %v4006 = vpack.c.b16 %v3754, %v3750
        %v4007 = vpack.c.b16 %v3755, %v3751
        %v4008 = vpack.c.b16 %v3756, %v3752
        %v4009 = vpack.c.b16 %v3761, %v3757
        %v4010 = vpack.c.b16 %v3762, %v3758
        %v4011 = vpack.c.b16 %v3763, %v3759
        %v4012 = vpack.c.b16 %v3764, %v3760
        %v4013 = vpack.c.b16 %v3769, %v3765
        %v4014 = vpack.c.b16 %v3770, %v3766
        %v4015 = vpack.c.b16 %v3771, %v3767
        %v4016 = vpack.c.b16 %v3772, %v3768
        %v4017 = vpack.c.b16 %v3777, %v3773
        %v4018 = vpack.c.b16 %v3778, %v3774
        %v4019 = vpack.c.b16 %v3779, %v3775
        %v4020 = vpack.c.b16 %v3780, %v3776
        %v4021 = vpack.c.b16 %v3785, %v3781
        %v4022 = vpack.c.b16 %v3786, %v3782
        %v4023 = vpack.c.b16 %v3787, %v3783
        %v4024 = vpack.c.b16 %v3788, %v3784
        %v4025 = vpack.c.b16 %v3793, %v3789
        %v4026 = vpack.c.b16 %v3794, %v3790
        %v4027 = vpack.c.b16 %v3795, %v3791
        %v4028 = vpack.c.b16 %v3796, %v3792
        %v4029 = vpack.c.b16 %v3801, %v3797
        %v4030 = vpack.c.b16 %v3802, %v3798
        %v4031 = vpack.c.b16 %v3803, %v3799
        %v4032 = vpack.c.b16 %v3804, %v3800
        %v4033 = vpack.c.b16 %v3809, %v3805
        %v4034 = vpack.c.b16 %v3810, %v3806
        %v4035 = vpack.c.b16 %v3811, %v3807
        %v4036 = vpack.c.b16 %v3812, %v3808
        %v4037 = vpack.c.b16 %v3817, %v3813
        %v4038 = vpack.c.b16 %v3818, %v3814
        %v4039 = vpack.c.b16 %v3819, %v3815
        %v4040 = vpack.c.b16 %v3820, %v3816
        %v4041 = vpack.c.b16 %v3825, %v3821
        %v4042 = vpack.c.b16 %v3826, %v3822
        %v4043 = vpack.c.b16 %v3827, %v3823
        %v4044 = vpack.c.b16 %v3828, %v3824
        %v4045 = vpack.c.b16 %v3833, %v3829
        %v4046 = vpack.c.b16 %v3834, %v3830
        %v4047 = vpack.c.b16 %v3835, %v3831
        %v4048 = vpack.c.b16 %v3836, %v3832
        %v4049 = vpack.c.b16 %v3841, %v3837
        %v4050 = vpack.c.b16 %v3842, %v3838
        %v4051 = vpack.c.b16 %v3843, %v3839
        %v4052 = vpack.c.b16 %v3844, %v3840
        %v4053 = vpack.c.b16 %v3849, %v3845
        %v4054 = vpack.c.b16 %v3850, %v3846
        %v4055 = vpack.c.b16 %v3851, %v3847
        %v4056 = vpack.c.b16 %v3852, %v3848
        %v4057 = vpack.c.b16 %v3857, %v3853
        %v4058 = vpack.c.b16 %v3858, %v3854
        %v4059 = vpack.c.b16 %v3859, %v3855
        %v4060 = vpack.c.b16 %v3860, %v3856
        %v4061 = vpack.c.b16 %v3865, %v3861
        %v4062 = vpack.c.b16 %v3866, %v3862
        %v4063 = vpack.c.b16 %v3867, %v3863
        %v4064 = vpack.c.b16 %v3868, %v3864
        %v4065 = vpack.c.b16 %v3873, %v3869
        %v4066 = vpack.c.b16 %v3874, %v3870
        %v4067 = vpack.c.b16 %v3875, %v3871
        %v4068 = vpack.c.b16 %v3876, %v3872
        %v4069 = vpack.c.b16 %v3881, %v3877
        %v4070 = vpack.c.b16 %v3882, %v3878
        %v4071 = vpack.c.b16 %v3883, %v3879
        %v4072 = vpack.c.b16 %v3884, %v3880
        %v4073 = vpack.c.b16 %v3889, %v3885
        %v4074 = vpack.c.b16 %v3890, %v3886
        %v4075 = vpack.c.b16 %v3891, %v3887
        %v4076 = vpack.c.b16 %v3892, %v3888
        %v4077 = vpack.c.b16 %v3897, %v3893
        %v4078 = vpack.c.b16 %v3898, %v3894
        %v4079 = vpack.c.b16 %v3899, %v3895
        %v4080 = vpack.c.b16 %v3900, %v3896
        %v4081 = vpack.c.b16 %v3905, %v3901
        %v4082 = vpack.c.b16 %v3906, %v3902
        %v4083 = vpack.c.b16 %v3907, %v3903
        %v4084 = vpack.c.b16 %v3908, %v3904
        %v4085 = vpack.c.b16 %v3913, %v3909
        %v4086 = vpack.c.b16 %v3914, %v3910
        %v4087 = vpack.c.b16 %v3915, %v3911
        %v4088 = vpack.c.b16 %v3916, %v3912
        %v4089 = vpack.c.b16 %v3921, %v3917
        %v4090 = vpack.c.b16 %v3922, %v3918
        %v4091 = vpack.c.b16 %v3923, %v3919
        %v4092 = vpack.c.b16 %v3924, %v3920
        %v4093 = vpack.c.b16 %v3929, %v3925
        %v4094 = vpack.c.b16 %v3930, %v3926
        %v4095 = vpack.c.b16 %v3931, %v3927
        %v4096 = vpack.c.b16 %v3932, %v3928
        %v4097 = vpack.c.b16 %v3937, %v3933
        %v4098 = vpack.c.b16 %v3938, %v3934
        %v4099 = vpack.c.b16 %v3939, %v3935
        %v4100 = vpack.c.b16 %v3940, %v3936
        %v4101 = vpack.c.b16 %v3945, %v3941
        %v4102 = vpack.c.b16 %v3946, %v3942
        %v4103 = vpack.c.b16 %v3947, %v3943
        %v4104 = vpack.c.b16 %v3948, %v3944
        %v4105 = vpack.c.b16 %v3953, %v3949
        %v4106 = vpack.c.b16 %v3954, %v3950
        %v4107 = vpack.c.b16 %v3955, %v3951
        %v4108 = vpack.c.b16 %v3956, %v3952
        %v4109 = vpack.c.b16 %v3961, %v3957
        %v4110 = vpack.c.b16 %v3962, %v3958
        %v4111 = vpack.c.b16 %v3963, %v3959
        %v4112 = vpack.c.b16 %v3964, %v3960
        %v4113 = vpack.c.b16 %v3969, %v3965
        %v4114 = vpack.c.b16 %v3970, %v3966
        %v4115 = vpack.c.b16 %v3971, %v3967
        %v4116 = vpack.c.b16 %v3972, %v3968
        %v4117 = vpack.c.b16 %v3977, %v3973
        %v4118 = vpack.c.b16 %v3978, %v3974
        %v4119 = vpack.c.b16 %v3979, %v3975
        %v4120 = vpack.c.b16 %v3980, %v3976
        %v4121 = vpack.c.b16 %v3985, %v3981
        %v4122 = vpack.c.b16 %v3986, %v3982
        %v4123 = vpack.c.b16 %v3987, %v3983
        %v4124 = vpack.c.b16 %v3988, %v3984
        %v4125 = vpack.c.b16 %v3993, %v3989
        %v4126 = vpack.c.b16 %v3994, %v3990
        %v4127 = vpack.c.b16 %v3995, %v3991
        %v4128 = vpack.c.b16 %v3996, %v3992
        %v4129 = vpack.c.b16 %v4001, %v3997
        %v4130 = vpack.c.b16 %v4002, %v3998
        %v4131 = vpack.c.b16 %v4003, %v3999
        %v4132 = vpack.c.b16 %v4004, %v4000
        %4261 = vmatprep.subr.bf16.mxu0 %v4006
        %4262 = vmatpush1.bf16.msra.mxu0 %v4005
        %4263 = vmatprep.subr.bf16.mxu0 %v4010
        %4264 = vmatpush1.bf16.msra.mxu0 %v4009
        %4265 = vmatprep.subr.bf16.mxu0 %v4014
        %4266 = vmatpush1.bf16.msra.mxu0 %v4013
        %4267 = vmatprep.subr.bf16.mxu0 %v4018
        %4268 = vmatpush1.bf16.msra.mxu0 %v4017
        %4269 = vmatprep.subr.bf16.mxu0 %v4022
        %4270 = vmatpush1.bf16.msra.mxu0 %v4021
        %4271 = vmatprep.subr.bf16.mxu0 %v4026
        %4272 = vmatpush1.bf16.msra.mxu0 %v4025
        %4273 = vmatprep.subr.bf16.mxu0 %v4030
        %4274 = vmatpush1.bf16.msra.mxu0 %v4029
        %4275 = vmatprep.subr.bf16.mxu0 %v4034
        %4276 = vmatpush1.bf16.msra.mxu0 %v4033
        %4277 = vmatprep.subr.bf16.mxu0 %v4038
        %4278 = vmatpush1.bf16.msra.mxu0 %v4037
        %4279 = vmatprep.subr.bf16.mxu0 %v4042
        %4280 = vmatpush1.bf16.msra.mxu0 %v4041
        %4281 = vmatprep.subr.bf16.mxu0 %v4046
        %4282 = vmatpush1.bf16.msra.mxu0 %v4045
        %4283 = vmatprep.subr.bf16.mxu0 %v4050
        %4284 = vmatpush1.bf16.msra.mxu0 %v4049
        %4285 = vmatprep.subr.bf16.mxu0 %v4054
        %4286 = vmatpush1.bf16.msra.mxu0 %v4053
        %4287 = vmatprep.subr.bf16.mxu0 %v4058
        %4288 = vmatpush1.bf16.msra.mxu0 %v4057
        %4289 = vmatprep.subr.bf16.mxu0 %v4062
        %4290 = vmatpush1.bf16.msra.mxu0 %v4061
        %4291 = vmatprep.subr.bf16.mxu0 %v4066
        %4292 = vmatpush1.bf16.msra.mxu0 %v4065
        %4293 = vmatprep.mubr.bf16.mxu0 %v3301
        %4294 = vmatmul.mubr.bf16.gmra.mrb[0].mxu0 %v3300
        %v4295 = vpop.f32.mrb[0].mxu0
        %v4296 = vadd.f32 0.0, %v4295
        %v4297 = vpop.f32.mrb[0].mxu0
        %v4298 = vadd.f32 0.0, %v4297
        %v4299 = vpop.f32.mrb[0].mxu0
        %v4300 = vadd.f32 0.0, %v4299
        %v4301 = vpop.f32.mrb[0].mxu0
        %v4302 = vadd.f32 0.0, %v4301
        %4303 = vdwg.mxu0
        %4304 = vmatprep.subr.bf16.mxu0 %v4070
        %4305 = vmatpush1.bf16.msra.mxu0 %v4069
        %4306 = vmatprep.subr.bf16.mxu0 %v4074
        %4307 = vmatpush1.bf16.msra.mxu0 %v4073
        %4308 = vmatprep.subr.bf16.mxu0 %v4078
        %4309 = vmatpush1.bf16.msra.mxu0 %v4077
        %4310 = vmatprep.subr.bf16.mxu0 %v4082
        %4311 = vmatpush1.bf16.msra.mxu0 %v4081
        %4312 = vmatprep.subr.bf16.mxu0 %v4086
        %4313 = vmatpush1.bf16.msra.mxu0 %v4085
        %4314 = vmatprep.subr.bf16.mxu0 %v4090
        %4315 = vmatpush1.bf16.msra.mxu0 %v4089
        %4316 = vmatprep.subr.bf16.mxu0 %v4094
        %4317 = vmatpush1.bf16.msra.mxu0 %v4093
        %4318 = vmatprep.subr.bf16.mxu0 %v4098
        %4319 = vmatpush1.bf16.msra.mxu0 %v4097
        %4320 = vmatprep.subr.bf16.mxu0 %v4102
        %4321 = vmatpush1.bf16.msra.mxu0 %v4101
        %4322 = vmatprep.subr.bf16.mxu0 %v4106
        %4323 = vmatpush1.bf16.msra.mxu0 %v4105
        %4324 = vmatprep.subr.bf16.mxu0 %v4110
        %4325 = vmatpush1.bf16.msra.mxu0 %v4109
        %4326 = vmatprep.subr.bf16.mxu0 %v4114
        %4327 = vmatpush1.bf16.msra.mxu0 %v4113
        %4328 = vmatprep.subr.bf16.mxu0 %v4118
        %4329 = vmatpush1.bf16.msra.mxu0 %v4117
        %4330 = vmatprep.subr.bf16.mxu0 %v4122
        %4331 = vmatpush1.bf16.msra.mxu0 %v4121
        %4332 = vmatprep.subr.bf16.mxu0 %v4126
        %4333 = vmatpush1.bf16.msra.mxu0 %v4125
        %4334 = vmatprep.subr.bf16.mxu0 %v4130
        %4335 = vmatpush1.bf16.msra.mxu0 %v4129
        %4336 = vmatprep.mubr.bf16.mxu0 %v3303
        %4337 = vmatmul.mubr.bf16.gmra.mrb[0].mxu0 %v3302
        %v4338 = vpop.f32.mrb[0].mxu0
        %v4339 = vadd.f32 %v4296, %v4338
        %v4340 = vpop.f32.mrb[0].mxu0
        %v4341 = vadd.f32 %v4298, %v4340
        %v4342 = vpop.f32.mrb[0].mxu0
        %v4343 = vadd.f32 %v4300, %v4342
        %v4344 = vpop.f32.mrb[0].mxu0
        %v4345 = vadd.f32 %v4302, %v4344
        %4346 = vdwg.mxu0
        %4347 = vmatprep.subr.bf16.mxu0 %v4008
        %4348 = vmatpush1.bf16.msra.mxu0 %v4007
        %4349 = vmatprep.subr.bf16.mxu0 %v4012
        %4350 = vmatpush1.bf16.msra.mxu0 %v4011
        %4351 = vmatprep.subr.bf16.mxu0 %v4016
        %4352 = vmatpush1.bf16.msra.mxu0 %v4015
        %4353 = vmatprep.subr.bf16.mxu0 %v4020
        %4354 = vmatpush1.bf16.msra.mxu0 %v4019
        %4355 = vmatprep.subr.bf16.mxu0 %v4024
        %4356 = vmatpush1.bf16.msra.mxu0 %v4023
        %4357 = vmatprep.subr.bf16.mxu0 %v4028
        %4358 = vmatpush1.bf16.msra.mxu0 %v4027
        %4359 = vmatprep.subr.bf16.mxu0 %v4032
        %4360 = vmatpush1.bf16.msra.mxu0 %v4031
        %4361 = vmatprep.subr.bf16.mxu0 %v4036
        %4362 = vmatpush1.bf16.msra.mxu0 %v4035
        %4363 = vmatprep.subr.bf16.mxu0 %v4040
        %4364 = vmatpush1.bf16.msra.mxu0 %v4039
        %4365 = vmatprep.subr.bf16.mxu0 %v4044
        %4366 = vmatpush1.bf16.msra.mxu0 %v4043
        %4367 = vmatprep.subr.bf16.mxu0 %v4048
        %4368 = vmatpush1.bf16.msra.mxu0 %v4047
        %4369 = vmatprep.subr.bf16.mxu0 %v4052
        %4370 = vmatpush1.bf16.msra.mxu0 %v4051
        %4371 = vmatprep.subr.bf16.mxu0 %v4056
        %4372 = vmatpush1.bf16.msra.mxu0 %v4055
        %4373 = vmatprep.subr.bf16.mxu0 %v4060
        %4374 = vmatpush1.bf16.msra.mxu0 %v4059
        %4375 = vmatprep.subr.bf16.mxu0 %v4064
        %4376 = vmatpush1.bf16.msra.mxu0 %v4063
        %4377 = vmatprep.subr.bf16.mxu0 %v4068
        %4378 = vmatpush1.bf16.msra.mxu0 %v4067
        %4379 = vmatprep.mubr.bf16.mxu0 %v3301
        %4380 = vmatmul.mubr.bf16.gmra.mrb[0].mxu0 %v3300
        %v4381 = vpop.f32.mrb[0].mxu0
        %v4382 = vadd.f32 0.0, %v4381
        %v4383 = vpop.f32.mrb[0].mxu0
        %v4384 = vadd.f32 0.0, %v4383
        %v4385 = vpop.f32.mrb[0].mxu0
        %v4386 = vadd.f32 0.0, %v4385
        %v4387 = vpop.f32.mrb[0].mxu0
        %v4388 = vadd.f32 0.0, %v4387
        %4389 = vdwg.mxu0
        %4390 = vmatprep.subr.bf16.mxu0 %v4072
        %4391 = vmatpush1.bf16.msra.mxu0 %v4071
        %4392 = vmatprep.subr.bf16.mxu0 %v4076
        %4393 = vmatpush1.bf16.msra.mxu0 %v4075
        %4394 = vmatprep.subr.bf16.mxu0 %v4080
        %4395 = vmatpush1.bf16.msra.mxu0 %v4079
        %4396 = vmatprep.subr.bf16.mxu0 %v4084
        %4397 = vmatpush1.bf16.msra.mxu0 %v4083
        %4398 = vmatprep.subr.bf16.mxu0 %v4088
        %4399 = vmatpush1.bf16.msra.mxu0 %v4087
        %4400 = vmatprep.subr.bf16.mxu0 %v4092
        %4401 = vmatpush1.bf16.msra.mxu0 %v4091
        %4402 = vmatprep.subr.bf16.mxu0 %v4096
        %4403 = vmatpush1.bf16.msra.mxu0 %v4095
        %4404 = vmatprep.subr.bf16.mxu0 %v4100
        %4405 = vmatpush1.bf16.msra.mxu0 %v4099
        %4406 = vmatprep.subr.bf16.mxu0 %v4104
        %4407 = vmatpush1.bf16.msra.mxu0 %v4103
        %4408 = vmatprep.subr.bf16.mxu0 %v4108
        %4409 = vmatpush1.bf16.msra.mxu0 %v4107
        %4410 = vmatprep.subr.bf16.mxu0 %v4112
        %4411 = vmatpush1.bf16.msra.mxu0 %v4111
        %4412 = vmatprep.subr.bf16.mxu0 %v4116
        %4413 = vmatpush1.bf16.msra.mxu0 %v4115
        %4414 = vmatprep.subr.bf16.mxu0 %v4120
        %4415 = vmatpush1.bf16.msra.mxu0 %v4119
        %4416 = vmatprep.subr.bf16.mxu0 %v4124
        %4417 = vmatpush1.bf16.msra.mxu0 %v4123
        %4418 = vmatprep.subr.bf16.mxu0 %v4128
        %4419 = vmatpush1.bf16.msra.mxu0 %v4127
        %4420 = vmatprep.subr.bf16.mxu0 %v4132
        %4421 = vmatpush1.bf16.msra.mxu0 %v4131
        %4422 = vmatprep.mubr.bf16.mxu0 %v3303
        %4423 = vmatmul.mubr.bf16.gmra.mrb[0].mxu0 %v3302
        %v4424 = vpop.f32.mrb[0].mxu0
        %v4425 = vadd.f32 %v4382, %v4424
        %v4426 = vpop.f32.mrb[0].mxu0
        %v4427 = vadd.f32 %v4384, %v4426
        %v4428 = vpop.f32.mrb[0].mxu0
        %v4429 = vadd.f32 %v4386, %v4428
        %v4430 = vpop.f32.mrb[0].mxu0
        %v4431 = vadd.f32 %v4388, %v4430
        %4432 = vdwg.mxu0
        %v4561 = vunpack.c.l.b16 %v3364
        %v4562 = vunpack.c.h.b16 %v3364
        %v4563 = vunpack.c.l.b16 %v3365
        %v4564 = vunpack.c.h.b16 %v3365
        %v4565 = vunpack.c.l.b16 %v3366
        %v4566 = vunpack.c.h.b16 %v3366
        %v4567 = vunpack.c.l.b16 %v3367
        %v4568 = vunpack.c.h.b16 %v3367
        %v4569 = vunpack.c.l.b16 %v3368
        %v4570 = vunpack.c.h.b16 %v3368
        %v4571 = vunpack.c.l.b16 %v3369
        %v4572 = vunpack.c.h.b16 %v3369
        %v4573 = vunpack.c.l.b16 %v3370
        %v4574 = vunpack.c.h.b16 %v3370
        %v4575 = vunpack.c.l.b16 %v3371
        %v4576 = vunpack.c.h.b16 %v3371
        %v4577 = vunpack.c.l.b16 %v3372
        %v4578 = vunpack.c.h.b16 %v3372
        %v4579 = vunpack.c.l.b16 %v3373
        %v4580 = vunpack.c.h.b16 %v3373
        %v4581 = vunpack.c.l.b16 %v3374
        %v4582 = vunpack.c.h.b16 %v3374
        %v4583 = vunpack.c.l.b16 %v3375
        %v4584 = vunpack.c.h.b16 %v3375
        %v4585 = vunpack.c.l.b16 %v3376
        %v4586 = vunpack.c.h.b16 %v3376
        %v4587 = vunpack.c.l.b16 %v3377
        %v4588 = vunpack.c.h.b16 %v3377
        %v4589 = vunpack.c.l.b16 %v3378
        %v4590 = vunpack.c.h.b16 %v3378
        %v4591 = vunpack.c.l.b16 %v3379
        %v4592 = vunpack.c.h.b16 %v3379
        %v4593 = vunpack.c.l.b16 %v3380
        %v4594 = vunpack.c.h.b16 %v3380
        %v4595 = vunpack.c.l.b16 %v3381
        %v4596 = vunpack.c.h.b16 %v3381
        %v4597 = vunpack.c.l.b16 %v3382
        %v4598 = vunpack.c.h.b16 %v3382
        %v4599 = vunpack.c.l.b16 %v3383
        %v4600 = vunpack.c.h.b16 %v3383
        %v4601 = vunpack.c.l.b16 %v3384
        %v4602 = vunpack.c.h.b16 %v3384
        %v4603 = vunpack.c.l.b16 %v3385
        %v4604 = vunpack.c.h.b16 %v3385
        %v4605 = vunpack.c.l.b16 %v3386
        %v4606 = vunpack.c.h.b16 %v3386
        %v4607 = vunpack.c.l.b16 %v3387
        %v4608 = vunpack.c.h.b16 %v3387
        %v4609 = vunpack.c.l.b16 %v3388
        %v4610 = vunpack.c.h.b16 %v3388
        %v4611 = vunpack.c.l.b16 %v3389
        %v4612 = vunpack.c.h.b16 %v3389
        %v4613 = vunpack.c.l.b16 %v3390
        %v4614 = vunpack.c.h.b16 %v3390
        %v4615 = vunpack.c.l.b16 %v3391
        %v4616 = vunpack.c.h.b16 %v3391
        %v4617 = vunpack.c.l.b16 %v3392
        %v4618 = vunpack.c.h.b16 %v3392
        %v4619 = vunpack.c.l.b16 %v3393
        %v4620 = vunpack.c.h.b16 %v3393
        %v4621 = vunpack.c.l.b16 %v3394
        %v4622 = vunpack.c.h.b16 %v3394
        %v4623 = vunpack.c.l.b16 %v3395
        %v4624 = vunpack.c.h.b16 %v3395
        %v4625 = vunpack.c.l.b16 %v3396
        %v4626 = vunpack.c.h.b16 %v3396
        %v4627 = vunpack.c.l.b16 %v3397
        %v4628 = vunpack.c.h.b16 %v3397
        %v4629 = vunpack.c.l.b16 %v3398
        %v4630 = vunpack.c.h.b16 %v3398
        %v4631 = vunpack.c.l.b16 %v3399
        %v4632 = vunpack.c.h.b16 %v3399
        %v4633 = vunpack.c.l.b16 %v3400
        %v4634 = vunpack.c.h.b16 %v3400
        %v4635 = vunpack.c.l.b16 %v3401
        %v4636 = vunpack.c.h.b16 %v3401
        %v4637 = vunpack.c.l.b16 %v3402
        %v4638 = vunpack.c.h.b16 %v3402
        %v4639 = vunpack.c.l.b16 %v3403
        %v4640 = vunpack.c.h.b16 %v3403
        %v4641 = vunpack.c.l.b16 %v3404
        %v4642 = vunpack.c.h.b16 %v3404
        %v4643 = vunpack.c.l.b16 %v3405
        %v4644 = vunpack.c.h.b16 %v3405
        %v4645 = vunpack.c.l.b16 %v3406
        %v4646 = vunpack.c.h.b16 %v3406
        %v4647 = vunpack.c.l.b16 %v3407
        %v4648 = vunpack.c.h.b16 %v3407
        %v4649 = vunpack.c.l.b16 %v3408
        %v4650 = vunpack.c.h.b16 %v3408
        %v4651 = vunpack.c.l.b16 %v3409
        %v4652 = vunpack.c.h.b16 %v3409
        %v4653 = vunpack.c.l.b16 %v3410
        %v4654 = vunpack.c.h.b16 %v3410
        %v4655 = vunpack.c.l.b16 %v3411
        %v4656 = vunpack.c.h.b16 %v3411
        %v4657 = vunpack.c.l.b16 %v3412
        %v4658 = vunpack.c.h.b16 %v3412
        %v4659 = vunpack.c.l.b16 %v3413
        %v4660 = vunpack.c.h.b16 %v3413
        %v4661 = vunpack.c.l.b16 %v3414
        %v4662 = vunpack.c.h.b16 %v3414
        %v4663 = vunpack.c.l.b16 %v3415
        %v4664 = vunpack.c.h.b16 %v3415
        %v4665 = vunpack.c.l.b16 %v3416
        %v4666 = vunpack.c.h.b16 %v3416
        %v4667 = vunpack.c.l.b16 %v3417
        %v4668 = vunpack.c.h.b16 %v3417
        %v4669 = vunpack.c.l.b16 %v3418
        %v4670 = vunpack.c.h.b16 %v3418
        %v4671 = vunpack.c.l.b16 %v3419
        %v4672 = vunpack.c.h.b16 %v3419
        %v4673 = vunpack.c.l.b16 %v3420
        %v4674 = vunpack.c.h.b16 %v3420
        %v4675 = vunpack.c.l.b16 %v3421
        %v4676 = vunpack.c.h.b16 %v3421
        %v4677 = vunpack.c.l.b16 %v3422
        %v4678 = vunpack.c.h.b16 %v3422
        %v4679 = vunpack.c.l.b16 %v3423
        %v4680 = vunpack.c.h.b16 %v3423
        %v4681 = vunpack.c.l.b16 %v3424
        %v4682 = vunpack.c.h.b16 %v3424
        %v4683 = vunpack.c.l.b16 %v3425
        %v4684 = vunpack.c.h.b16 %v3425
        %v4685 = vunpack.c.l.b16 %v3426
        %v4686 = vunpack.c.h.b16 %v3426
        %v4687 = vunpack.c.l.b16 %v3427
        %v4688 = vunpack.c.h.b16 %v3427
        %v4689 = vunpack.c.l.b16 %v3428
        %v4690 = vunpack.c.h.b16 %v3428
        %v4691 = vunpack.c.l.b16 %v3429
        %v4692 = vunpack.c.h.b16 %v3429
        %v4693 = vunpack.c.l.b16 %v3430
        %v4694 = vunpack.c.h.b16 %v3430
        %v4695 = vunpack.c.l.b16 %v3431
        %v4696 = vunpack.c.h.b16 %v3431
        %v4697 = vunpack.c.l.b16 %v3432
        %v4698 = vunpack.c.h.b16 %v3432
        %v4699 = vunpack.c.l.b16 %v3433
        %v4700 = vunpack.c.h.b16 %v3433
        %v4701 = vunpack.c.l.b16 %v3434
        %v4702 = vunpack.c.h.b16 %v3434
        %v4703 = vunpack.c.l.b16 %v3435
        %v4704 = vunpack.c.h.b16 %v3435
        %v4705 = vunpack.c.l.b16 %v3436
        %v4706 = vunpack.c.h.b16 %v3436
        %v4707 = vunpack.c.l.b16 %v3437
        %v4708 = vunpack.c.h.b16 %v3437
        %v4709 = vunpack.c.l.b16 %v3438
        %v4710 = vunpack.c.h.b16 %v3438
        %v4711 = vunpack.c.l.b16 %v3439
        %v4712 = vunpack.c.h.b16 %v3439
        %v4713 = vunpack.c.l.b16 %v3440
        %v4714 = vunpack.c.h.b16 %v3440
        %v4715 = vunpack.c.l.b16 %v3441
        %v4716 = vunpack.c.h.b16 %v3441
        %v4717 = vunpack.c.l.b16 %v3442
        %v4718 = vunpack.c.h.b16 %v3442
        %v4719 = vunpack.c.l.b16 %v3443
        %v4720 = vunpack.c.h.b16 %v3443
        %v4721 = vunpack.c.l.b16 %v3444
        %v4722 = vunpack.c.h.b16 %v3444
        %v4723 = vunpack.c.l.b16 %v3445
        %v4724 = vunpack.c.h.b16 %v3445
        %v4725 = vunpack.c.l.b16 %v3446
        %v4726 = vunpack.c.h.b16 %v3446
        %v4727 = vunpack.c.l.b16 %v3447
        %v4728 = vunpack.c.h.b16 %v3447
        %v4729 = vunpack.c.l.b16 %v3448
        %v4730 = vunpack.c.h.b16 %v3448
        %v4731 = vunpack.c.l.b16 %v3449
        %v4732 = vunpack.c.h.b16 %v3449
        %v4733 = vunpack.c.l.b16 %v3450
        %v4734 = vunpack.c.h.b16 %v3450
        %v4735 = vunpack.c.l.b16 %v3451
        %v4736 = vunpack.c.h.b16 %v3451
        %v4737 = vunpack.c.l.b16 %v3452
        %v4738 = vunpack.c.h.b16 %v3452
        %v4739 = vunpack.c.l.b16 %v3453
        %v4740 = vunpack.c.h.b16 %v3453
        %v4741 = vunpack.c.l.b16 %v3454
        %v4742 = vunpack.c.h.b16 %v3454
        %v4743 = vunpack.c.l.b16 %v3455
        %v4744 = vunpack.c.h.b16 %v3455
        %v4745 = vunpack.c.l.b16 %v3456
        %v4746 = vunpack.c.h.b16 %v3456
        %v4747 = vunpack.c.l.b16 %v3457
        %v4748 = vunpack.c.h.b16 %v3457
        %v4749 = vunpack.c.l.b16 %v3458
        %v4750 = vunpack.c.h.b16 %v3458
        %v4751 = vunpack.c.l.b16 %v3459
        %v4752 = vunpack.c.h.b16 %v3459
        %v4753 = vunpack.c.l.b16 %v3460
        %v4754 = vunpack.c.h.b16 %v3460
        %v4755 = vunpack.c.l.b16 %v3461
        %v4756 = vunpack.c.h.b16 %v3461
        %v4757 = vunpack.c.l.b16 %v3462
        %v4758 = vunpack.c.h.b16 %v3462
        %v4759 = vunpack.c.l.b16 %v3463
        %v4760 = vunpack.c.h.b16 %v3463
        %v4761 = vunpack.c.l.b16 %v3464
        %v4762 = vunpack.c.h.b16 %v3464
        %v4763 = vunpack.c.l.b16 %v3465
        %v4764 = vunpack.c.h.b16 %v3465
        %v4765 = vunpack.c.l.b16 %v3466
        %v4766 = vunpack.c.h.b16 %v3466
        %v4767 = vunpack.c.l.b16 %v3467
        %v4768 = vunpack.c.h.b16 %v3467
        %v4769 = vunpack.c.l.b16 %v3468
        %v4770 = vunpack.c.h.b16 %v3468
        %v4771 = vunpack.c.l.b16 %v3469
        %v4772 = vunpack.c.h.b16 %v3469
        %v4773 = vunpack.c.l.b16 %v3470
        %v4774 = vunpack.c.h.b16 %v3470
        %v4775 = vunpack.c.l.b16 %v3471
        %v4776 = vunpack.c.h.b16 %v3471
        %v4777 = vunpack.c.l.b16 %v3472
        %v4778 = vunpack.c.h.b16 %v3472
        %v4779 = vunpack.c.l.b16 %v3473
        %v4780 = vunpack.c.h.b16 %v3473
        %v4781 = vunpack.c.l.b16 %v3474
        %v4782 = vunpack.c.h.b16 %v3474
        %v4783 = vunpack.c.l.b16 %v3475
        %v4784 = vunpack.c.h.b16 %v3475
        %v4785 = vunpack.c.l.b16 %v3476
        %v4786 = vunpack.c.h.b16 %v3476
        %v4787 = vunpack.c.l.b16 %v3477
        %v4788 = vunpack.c.h.b16 %v3477
        %v4789 = vunpack.c.l.b16 %v3478
        %v4790 = vunpack.c.h.b16 %v3478
        %v4791 = vunpack.c.l.b16 %v3479
        %v4792 = vunpack.c.h.b16 %v3479
        %v4793 = vunpack.c.l.b16 %v3480
        %v4794 = vunpack.c.h.b16 %v3480
        %v4795 = vunpack.c.l.b16 %v3481
        %v4796 = vunpack.c.h.b16 %v3481
        %v4797 = vunpack.c.l.b16 %v3482
        %v4798 = vunpack.c.h.b16 %v3482
        %v4799 = vunpack.c.l.b16 %v3483
        %v4800 = vunpack.c.h.b16 %v3483
        %v4801 = vunpack.c.l.b16 %v3484
        %v4802 = vunpack.c.h.b16 %v3484
        %v4803 = vunpack.c.l.b16 %v3485
        %v4804 = vunpack.c.h.b16 %v3485
        %v4805 = vunpack.c.l.b16 %v3486
        %v4806 = vunpack.c.h.b16 %v3486
        %v4807 = vunpack.c.l.b16 %v3487
        %v4808 = vunpack.c.h.b16 %v3487
        %v4809 = vunpack.c.l.b16 %v3488
        %v4810 = vunpack.c.h.b16 %v3488
        %v4811 = vunpack.c.l.b16 %v3489
        %v4812 = vunpack.c.h.b16 %v3489
        %v4813 = vunpack.c.l.b16 %v3490
        %v4814 = vunpack.c.h.b16 %v3490
        %v4815 = vunpack.c.l.b16 %v3491
        %v4816 = vunpack.c.h.b16 %v3491
        %v4817 = vpack.c.b16 %v4565, %v4561
        %v4818 = vpack.c.b16 %v4566, %v4562
        %v4819 = vpack.c.b16 %v4567, %v4563
        %v4820 = vpack.c.b16 %v4568, %v4564
        %v4821 = vpack.c.b16 %v4573, %v4569
        %v4822 = vpack.c.b16 %v4574, %v4570
        %v4823 = vpack.c.b16 %v4575, %v4571
        %v4824 = vpack.c.b16 %v4576, %v4572
        %v4825 = vpack.c.b16 %v4581, %v4577
        %v4826 = vpack.c.b16 %v4582, %v4578
        %v4827 = vpack.c.b16 %v4583, %v4579
        %v4828 = vpack.c.b16 %v4584, %v4580
        %v4829 = vpack.c.b16 %v4589, %v4585
        %v4830 = vpack.c.b16 %v4590, %v4586
        %v4831 = vpack.c.b16 %v4591, %v4587
        %v4832 = vpack.c.b16 %v4592, %v4588
        %v4833 = vpack.c.b16 %v4597, %v4593
        %v4834 = vpack.c.b16 %v4598, %v4594
        %v4835 = vpack.c.b16 %v4599, %v4595
        %v4836 = vpack.c.b16 %v4600, %v4596
        %v4837 = vpack.c.b16 %v4605, %v4601
        %v4838 = vpack.c.b16 %v4606, %v4602
        %v4839 = vpack.c.b16 %v4607, %v4603
        %v4840 = vpack.c.b16 %v4608, %v4604
        %v4841 = vpack.c.b16 %v4613, %v4609
        %v4842 = vpack.c.b16 %v4614, %v4610
        %v4843 = vpack.c.b16 %v4615, %v4611
        %v4844 = vpack.c.b16 %v4616, %v4612
        %v4845 = vpack.c.b16 %v4621, %v4617
        %v4846 = vpack.c.b16 %v4622, %v4618
        %v4847 = vpack.c.b16 %v4623, %v4619
        %v4848 = vpack.c.b16 %v4624, %v4620
        %v4849 = vpack.c.b16 %v4629, %v4625
        %v4850 = vpack.c.b16 %v4630, %v4626
        %v4851 = vpack.c.b16 %v4631, %v4627
        %v4852 = vpack.c.b16 %v4632, %v4628
        %v4853 = vpack.c.b16 %v4637, %v4633
        %v4854 = vpack.c.b16 %v4638, %v4634
        %v4855 = vpack.c.b16 %v4639, %v4635
        %v4856 = vpack.c.b16 %v4640, %v4636
        %v4857 = vpack.c.b16 %v4645, %v4641
        %v4858 = vpack.c.b16 %v4646, %v4642
        %v4859 = vpack.c.b16 %v4647, %v4643
        %v4860 = vpack.c.b16 %v4648, %v4644
        %v4861 = vpack.c.b16 %v4653, %v4649
        %v4862 = vpack.c.b16 %v4654, %v4650
        %v4863 = vpack.c.b16 %v4655, %v4651
        %v4864 = vpack.c.b16 %v4656, %v4652
        %v4865 = vpack.c.b16 %v4661, %v4657
        %v4866 = vpack.c.b16 %v4662, %v4658
        %v4867 = vpack.c.b16 %v4663, %v4659
        %v4868 = vpack.c.b16 %v4664, %v4660
        %v4869 = vpack.c.b16 %v4669, %v4665
        %v4870 = vpack.c.b16 %v4670, %v4666
        %v4871 = vpack.c.b16 %v4671, %v4667
        %v4872 = vpack.c.b16 %v4672, %v4668
        %v4873 = vpack.c.b16 %v4677, %v4673
        %v4874 = vpack.c.b16 %v4678, %v4674
        %v4875 = vpack.c.b16 %v4679, %v4675
        %v4876 = vpack.c.b16 %v4680, %v4676
        %v4877 = vpack.c.b16 %v4685, %v4681
        %v4878 = vpack.c.b16 %v4686, %v4682
        %v4879 = vpack.c.b16 %v4687, %v4683
        %v4880 = vpack.c.b16 %v4688, %v4684
        %v4881 = vpack.c.b16 %v4693, %v4689
        %v4882 = vpack.c.b16 %v4694, %v4690
        %v4883 = vpack.c.b16 %v4695, %v4691
        %v4884 = vpack.c.b16 %v4696, %v4692
        %v4885 = vpack.c.b16 %v4701, %v4697
        %v4886 = vpack.c.b16 %v4702, %v4698
        %v4887 = vpack.c.b16 %v4703, %v4699
        %v4888 = vpack.c.b16 %v4704, %v4700
        %v4889 = vpack.c.b16 %v4709, %v4705
        %v4890 = vpack.c.b16 %v4710, %v4706
        %v4891 = vpack.c.b16 %v4711, %v4707
        %v4892 = vpack.c.b16 %v4712, %v4708
        %v4893 = vpack.c.b16 %v4717, %v4713
        %v4894 = vpack.c.b16 %v4718, %v4714
        %v4895 = vpack.c.b16 %v4719, %v4715
        %v4896 = vpack.c.b16 %v4720, %v4716
        %v4897 = vpack.c.b16 %v4725, %v4721
        %v4898 = vpack.c.b16 %v4726, %v4722
        %v4899 = vpack.c.b16 %v4727, %v4723
        %v4900 = vpack.c.b16 %v4728, %v4724
        %v4901 = vpack.c.b16 %v4733, %v4729
        %v4902 = vpack.c.b16 %v4734, %v4730
        %v4903 = vpack.c.b16 %v4735, %v4731
        %v4904 = vpack.c.b16 %v4736, %v4732
        %v4905 = vpack.c.b16 %v4741, %v4737
        %v4906 = vpack.c.b16 %v4742, %v4738
        %v4907 = vpack.c.b16 %v4743, %v4739
        %v4908 = vpack.c.b16 %v4744, %v4740
        %v4909 = vpack.c.b16 %v4749, %v4745
        %v4910 = vpack.c.b16 %v4750, %v4746
        %v4911 = vpack.c.b16 %v4751, %v4747
        %v4912 = vpack.c.b16 %v4752, %v4748
        %v4913 = vpack.c.b16 %v4757, %v4753
        %v4914 = vpack.c.b16 %v4758, %v4754
        %v4915 = vpack.c.b16 %v4759, %v4755
        %v4916 = vpack.c.b16 %v4760, %v4756
        %v4917 = vpack.c.b16 %v4765, %v4761
        %v4918 = vpack.c.b16 %v4766, %v4762
        %v4919 = vpack.c.b16 %v4767, %v4763
        %v4920 = vpack.c.b16 %v4768, %v4764
        %v4921 = vpack.c.b16 %v4773, %v4769
        %v4922 = vpack.c.b16 %v4774, %v4770
        %v4923 = vpack.c.b16 %v4775, %v4771
        %v4924 = vpack.c.b16 %v4776, %v4772
        %v4925 = vpack.c.b16 %v4781, %v4777
        %v4926 = vpack.c.b16 %v4782, %v4778
        %v4927 = vpack.c.b16 %v4783, %v4779
        %v4928 = vpack.c.b16 %v4784, %v4780
        %v4929 = vpack.c.b16 %v4789, %v4785
        %v4930 = vpack.c.b16 %v4790, %v4786
        %v4931 = vpack.c.b16 %v4791, %v4787
        %v4932 = vpack.c.b16 %v4792, %v4788
        %v4933 = vpack.c.b16 %v4797, %v4793
        %v4934 = vpack.c.b16 %v4798, %v4794
        %v4935 = vpack.c.b16 %v4799, %v4795
        %v4936 = vpack.c.b16 %v4800, %v4796
        %v4937 = vpack.c.b16 %v4805, %v4801
        %v4938 = vpack.c.b16 %v4806, %v4802
        %v4939 = vpack.c.b16 %v4807, %v4803
        %v4940 = vpack.c.b16 %v4808, %v4804
        %v4941 = vpack.c.b16 %v4813, %v4809
        %v4942 = vpack.c.b16 %v4814, %v4810
        %v4943 = vpack.c.b16 %v4815, %v4811
        %v4944 = vpack.c.b16 %v4816, %v4812
        %5073 = vmatprep.subr.bf16.mxu0 %v4818
        %5074 = vmatpush1.bf16.msra.mxu0 %v4817
        %5075 = vmatprep.subr.bf16.mxu0 %v4822
        %5076 = vmatpush1.bf16.msra.mxu0 %v4821
        %5077 = vmatprep.subr.bf16.mxu0 %v4826
        %5078 = vmatpush1.bf16.msra.mxu0 %v4825
        %5079 = vmatprep.subr.bf16.mxu0 %v4830
        %5080 = vmatpush1.bf16.msra.mxu0 %v4829
        %5081 = vmatprep.subr.bf16.mxu0 %v4834
        %5082 = vmatpush1.bf16.msra.mxu0 %v4833
        %5083 = vmatprep.subr.bf16.mxu0 %v4838
        %5084 = vmatpush1.bf16.msra.mxu0 %v4837
        %5085 = vmatprep.subr.bf16.mxu0 %v4842
        %5086 = vmatpush1.bf16.msra.mxu0 %v4841
        %5087 = vmatprep.subr.bf16.mxu0 %v4846
        %5088 = vmatpush1.bf16.msra.mxu0 %v4845
        %5089 = vmatprep.subr.bf16.mxu0 %v4850
        %5090 = vmatpush1.bf16.msra.mxu0 %v4849
        %5091 = vmatprep.subr.bf16.mxu0 %v4854
        %5092 = vmatpush1.bf16.msra.mxu0 %v4853
        %5093 = vmatprep.subr.bf16.mxu0 %v4858
        %5094 = vmatpush1.bf16.msra.mxu0 %v4857
        %5095 = vmatprep.subr.bf16.mxu0 %v4862
        %5096 = vmatpush1.bf16.msra.mxu0 %v4861
        %5097 = vmatprep.subr.bf16.mxu0 %v4866
        %5098 = vmatpush1.bf16.msra.mxu0 %v4865
        %5099 = vmatprep.subr.bf16.mxu0 %v4870
        %5100 = vmatpush1.bf16.msra.mxu0 %v4869
        %5101 = vmatprep.subr.bf16.mxu0 %v4874
        %5102 = vmatpush1.bf16.msra.mxu0 %v4873
        %5103 = vmatprep.subr.bf16.mxu0 %v4878
        %5104 = vmatpush1.bf16.msra.mxu0 %v4877
        %5105 = vmatprep.mubr.bf16.mxu0 %v3341
        %5106 = vmatmul.mubr.bf16.gmra.mrb[0].mxu0 %v3340
        %v5107 = vpop.f32.mrb[0].mxu0
        %v5108 = vadd.f32 %v4339, %v5107
        %v5109 = vpop.f32.mrb[0].mxu0
        %v5110 = vadd.f32 %v4341, %v5109
        %v5111 = vpop.f32.mrb[0].mxu0
        %v5112 = vadd.f32 %v4343, %v5111
        %v5113 = vpop.f32.mrb[0].mxu0
        %v5114 = vadd.f32 %v4345, %v5113
        %5115 = vdwg.mxu0
        %5116 = vmatprep.subr.bf16.mxu0 %v4882
        %5117 = vmatpush1.bf16.msra.mxu0 %v4881
        %5118 = vmatprep.subr.bf16.mxu0 %v4886
        %5119 = vmatpush1.bf16.msra.mxu0 %v4885
        %5120 = vmatprep.subr.bf16.mxu0 %v4890
        %5121 = vmatpush1.bf16.msra.mxu0 %v4889
        %5122 = vmatprep.subr.bf16.mxu0 %v4894
        %5123 = vmatpush1.bf16.msra.mxu0 %v4893
        %5124 = vmatprep.subr.bf16.mxu0 %v4898
        %5125 = vmatpush1.bf16.msra.mxu0 %v4897
        %5126 = vmatprep.subr.bf16.mxu0 %v4902
        %5127 = vmatpush1.bf16.msra.mxu0 %v4901
        %5128 = vmatprep.subr.bf16.mxu0 %v4906
        %5129 = vmatpush1.bf16.msra.mxu0 %v4905
        %5130 = vmatprep.subr.bf16.mxu0 %v4910
        %5131 = vmatpush1.bf16.msra.mxu0 %v4909
        %5132 = vmatprep.subr.bf16.mxu0 %v4914
        %5133 = vmatpush1.bf16.msra.mxu0 %v4913
        %5134 = vmatprep.subr.bf16.mxu0 %v4918
        %5135 = vmatpush1.bf16.msra.mxu0 %v4917
        %5136 = vmatprep.subr.bf16.mxu0 %v4922
        %5137 = vmatpush1.bf16.msra.mxu0 %v4921
        %5138 = vmatprep.subr.bf16.mxu0 %v4926
        %5139 = vmatpush1.bf16.msra.mxu0 %v4925
        %5140 = vmatprep.subr.bf16.mxu0 %v4930
        %5141 = vmatpush1.bf16.msra.mxu0 %v4929
        %5142 = vmatprep.subr.bf16.mxu0 %v4934
        %5143 = vmatpush1.bf16.msra.mxu0 %v4933
        %5144 = vmatprep.subr.bf16.mxu0 %v4938
        %5145 = vmatpush1.bf16.msra.mxu0 %v4937
        %5146 = vmatprep.subr.bf16.mxu0 %v4942
        %5147 = vmatpush1.bf16.msra.mxu0 %v4941
        %5148 = vmatprep.mubr.bf16.mxu0 %v3343
        %5149 = vmatmul.mubr.bf16.gmra.mrb[0].mxu0 %v3342
        %v5150 = vpop.f32.mrb[0].mxu0
        %v5151 = vadd.f32 %v5108, %v5150
        %v5152 = vpop.f32.mrb[0].mxu0
        %v5153 = vadd.f32 %v5110, %v5152
        %v5154 = vpop.f32.mrb[0].mxu0
        %v5155 = vadd.f32 %v5112, %v5154
        %v5156 = vpop.f32.mrb[0].mxu0
        %v5157 = vadd.f32 %v5114, %v5156
        %5158 = vdwg.mxu0
        %5159 = vmatprep.subr.bf16.mxu0 %v4820
        %5160 = vmatpush1.bf16.msra.mxu0 %v4819
        %5161 = vmatprep.subr.bf16.mxu0 %v4824
        %5162 = vmatpush1.bf16.msra.mxu0 %v4823
        %5163 = vmatprep.subr.bf16.mxu0 %v4828
        %5164 = vmatpush1.bf16.msra.mxu0 %v4827
        %5165 = vmatprep.subr.bf16.mxu0 %v4832
        %5166 = vmatpush1.bf16.msra.mxu0 %v4831
        %5167 = vmatprep.subr.bf16.mxu0 %v4836
        %5168 = vmatpush1.bf16.msra.mxu0 %v4835
        %5169 = vmatprep.subr.bf16.mxu0 %v4840
        %5170 = vmatpush1.bf16.msra.mxu0 %v4839
        %5171 = vmatprep.subr.bf16.mxu0 %v4844
        %5172 = vmatpush1.bf16.msra.mxu0 %v4843
        %5173 = vmatprep.subr.bf16.mxu0 %v4848
        %5174 = vmatpush1.bf16.msra.mxu0 %v4847
        %5175 = vmatprep.subr.bf16.mxu0 %v4852
        %5176 = vmatpush1.bf16.msra.mxu0 %v4851
        %5177 = vmatprep.subr.bf16.mxu0 %v4856
        %5178 = vmatpush1.bf16.msra.mxu0 %v4855
        %5179 = vmatprep.subr.bf16.mxu0 %v4860
        %5180 = vmatpush1.bf16.msra.mxu0 %v4859
        %5181 = vmatprep.subr.bf16.mxu0 %v4864
        %5182 = vmatpush1.bf16.msra.mxu0 %v4863
        %5183 = vmatprep.subr.bf16.mxu0 %v4868
        %5184 = vmatpush1.bf16.msra.mxu0 %v4867
        %5185 = vmatprep.subr.bf16.mxu0 %v4872
        %5186 = vmatpush1.bf16.msra.mxu0 %v4871
        %5187 = vmatprep.subr.bf16.mxu0 %v4876
        %5188 = vmatpush1.bf16.msra.mxu0 %v4875
        %5189 = vmatprep.subr.bf16.mxu0 %v4880
        %5190 = vmatpush1.bf16.msra.mxu0 %v4879
        %5191 = vmatprep.mubr.bf16.mxu0 %v3341
        %5192 = vmatmul.mubr.bf16.gmra.mrb[0].mxu0 %v3340
        %v5193 = vpop.f32.mrb[0].mxu0
        %v5194 = vadd.f32 %v4425, %v5193
        %v5195 = vpop.f32.mrb[0].mxu0
        %v5196 = vadd.f32 %v4427, %v5195
        %v5197 = vpop.f32.mrb[0].mxu0
        %v5198 = vadd.f32 %v4429, %v5197
        %v5199 = vpop.f32.mrb[0].mxu0
        %v5200 = vadd.f32 %v4431, %v5199
        %5201 = vdwg.mxu0
        %5202 = vmatprep.subr.bf16.mxu0 %v4884
        %5203 = vmatpush1.bf16.msra.mxu0 %v4883
        %5204 = vmatprep.subr.bf16.mxu0 %v4888
        %5205 = vmatpush1.bf16.msra.mxu0 %v4887
        %5206 = vmatprep.subr.bf16.mxu0 %v4892
        %5207 = vmatpush1.bf16.msra.mxu0 %v4891
        %5208 = vmatprep.subr.bf16.mxu0 %v4896
        %5209 = vmatpush1.bf16.msra.mxu0 %v4895
        %5210 = vmatprep.subr.bf16.mxu0 %v4900
        %5211 = vmatpush1.bf16.msra.mxu0 %v4899
        %5212 = vmatprep.subr.bf16.mxu0 %v4904
        %5213 = vmatpush1.bf16.msra.mxu0 %v4903
        %5214 = vmatprep.subr.bf16.mxu0 %v4908
        %5215 = vmatpush1.bf16.msra.mxu0 %v4907
        %5216 = vmatprep.subr.bf16.mxu0 %v4912
        %5217 = vmatpush1.bf16.msra.mxu0 %v4911
        %5218 = vmatprep.subr.bf16.mxu0 %v4916
        %5219 = vmatpush1.bf16.msra.mxu0 %v4915
        %5220 = vmatprep.subr.bf16.mxu0 %v4920
        %5221 = vmatpush1.bf16.msra.mxu0 %v4919
        %5222 = vmatprep.subr.bf16.mxu0 %v4924
        %5223 = vmatpush1.bf16.msra.mxu0 %v4923
        %5224 = vmatprep.subr.bf16.mxu0 %v4928
        %5225 = vmatpush1.bf16.msra.mxu0 %v4927
        %5226 = vmatprep.subr.bf16.mxu0 %v4932
        %5227 = vmatpush1.bf16.msra.mxu0 %v4931
        %5228 = vmatprep.subr.bf16.mxu0 %v4936
        %5229 = vmatpush1.bf16.msra.mxu0 %v4935
        %5230 = vmatprep.subr.bf16.mxu0 %v4940
        %5231 = vmatpush1.bf16.msra.mxu0 %v4939
        %5232 = vmatprep.subr.bf16.mxu0 %v4944
        %5233 = vmatpush1.bf16.msra.mxu0 %v4943
        %5234 = vmatprep.mubr.bf16.mxu0 %v3343
        %5235 = vmatmul.mubr.bf16.gmra.mrb[0].mxu0 %v3342
        %v5236 = vpop.f32.mrb[0].mxu0
        %v5237 = vadd.f32 %v5194, %v5236
        %v5238 = vpop.f32.mrb[0].mxu0
        %v5239 = vadd.f32 %v5196, %v5238
        %v5240 = vpop.f32.mrb[0].mxu0
        %v5241 = vadd.f32 %v5198, %v5240
        %v5242 = vpop.f32.mrb[0].mxu0
        %v5243 = vadd.f32 %v5200, %v5242
        %5244 = vdwg.mxu0
        %s5245 = scalar_lea.vmem [#allocation6], 2048
        %v5246 = vld [vmem:[%s5245] sm:$0xff]
        %v5247 = vld [vmem:[%s5245 + $0x8] sm:$0xff]
        %v5248 = vld [vmem:[%s5245 + $0x10] sm:$0xff]
        %v5249 = vld [vmem:[%s5245 + $0x18] sm:$0xff]
        %v5250 = vld [vmem:[%s5245 + $0x20] sm:$0xff]
        %v5251 = vld [vmem:[%s5245 + $0x28] sm:$0xff]
        %v5252 = vld [vmem:[%s5245 + $0x30] sm:$0xff]
        %v5253 = vld [vmem:[%s5245 + $0x38] sm:$0xff]
        %v5254 = vld [vmem:[%s5245 + $0x40] sm:$0xff]
        %v5255 = vld [vmem:[%s5245 + $0x48] sm:$0xff]
        %v5256 = vld [vmem:[%s5245 + $0x50] sm:$0xff]
        %v5257 = vld [vmem:[%s5245 + $0x58] sm:$0xff]
        %v5258 = vld [vmem:[%s5245 + $0x60] sm:$0xff]
        %v5259 = vld [vmem:[%s5245 + $0x68] sm:$0xff]
        %v5260 = vld [vmem:[%s5245 + $0x70] sm:$0xff]
        %v5261 = vld [vmem:[%s5245 + $0x78] sm:$0xff]
        %v5262 = vld [vmem:[%s5245 + $0x80] sm:$0xff]
        %v5263 = vld [vmem:[%s5245 + $0x88] sm:$0xff]
        %v5264 = vld [vmem:[%s5245 + $0x90] sm:$0xff]
        %v5265 = vld [vmem:[%s5245 + $0x98] sm:$0xff]
        %v5266 = vld [vmem:[%s5245 + $0xa0] sm:$0xff]
        %v5267 = vld [vmem:[%s5245 + $0xa8] sm:$0xff]
        %v5268 = vld [vmem:[%s5245 + $0xb0] sm:$0xff]
        %v5269 = vld [vmem:[%s5245 + $0xb8] sm:$0xff]
        %v5270 = vld [vmem:[%s5245 + $0xc0] sm:$0xff]
        %v5271 = vld [vmem:[%s5245 + $0xc8] sm:$0xff]
        %v5272 = vld [vmem:[%s5245 + $0xd0] sm:$0xff]
        %v5273 = vld [vmem:[%s5245 + $0xd8] sm:$0xff]
        %v5274 = vld [vmem:[%s5245 + $0xe0] sm:$0xff]
        %v5275 = vld [vmem:[%s5245 + $0xe8] sm:$0xff]
        %v5276 = vld [vmem:[%s5245 + $0xf0] sm:$0xff]
        %v5277 = vld [vmem:[%s5245 + $0xf8] sm:$0xff]
        %v5278 = vld [vmem:[%s5245 + $0x100] sm:$0xff]
        %v5279 = vld [vmem:[%s5245 + $0x108] sm:$0xff]
        %v5280 = vld [vmem:[%s5245 + $0x110] sm:$0xff]
        %v5281 = vld [vmem:[%s5245 + $0x118] sm:$0xff]
        %v5282 = vld [vmem:[%s5245 + $0x120] sm:$0xff]
        %v5283 = vld [vmem:[%s5245 + $0x128] sm:$0xff]
        %v5284 = vld [vmem:[%s5245 + $0x130] sm:$0xff]
        %v5285 = vld [vmem:[%s5245 + $0x138] sm:$0xff]
        %v5286 = vld [vmem:[%s5245 + $0x140] sm:$0xff]
        %v5287 = vld [vmem:[%s5245 + $0x148] sm:$0xff]
        %v5288 = vld [vmem:[%s5245 + $0x150] sm:$0xff]
        %v5289 = vld [vmem:[%s5245 + $0x158] sm:$0xff]
        %v5290 = vld [vmem:[%s5245 + $0x160] sm:$0xff]
        %v5291 = vld [vmem:[%s5245 + $0x168] sm:$0xff]
        %v5292 = vld [vmem:[%s5245 + $0x170] sm:$0xff]
        %v5293 = vld [vmem:[%s5245 + $0x178] sm:$0xff]
        %v5294 = vld [vmem:[%s5245 + $0x180] sm:$0xff]
        %v5295 = vld [vmem:[%s5245 + $0x188] sm:$0xff]
        %v5296 = vld [vmem:[%s5245 + $0x190] sm:$0xff]
        %v5297 = vld [vmem:[%s5245 + $0x198] sm:$0xff]
        %v5298 = vld [vmem:[%s5245 + $0x1a0] sm:$0xff]
        %v5299 = vld [vmem:[%s5245 + $0x1a8] sm:$0xff]
        %v5300 = vld [vmem:[%s5245 + $0x1b0] sm:$0xff]
        %v5301 = vld [vmem:[%s5245 + $0x1b8] sm:$0xff]
        %v5302 = vld [vmem:[%s5245 + $0x1c0] sm:$0xff]
        %v5303 = vld [vmem:[%s5245 + $0x1c8] sm:$0xff]
        %v5304 = vld [vmem:[%s5245 + $0x1d0] sm:$0xff]
        %v5305 = vld [vmem:[%s5245 + $0x1d8] sm:$0xff]
        %v5306 = vld [vmem:[%s5245 + $0x1e0] sm:$0xff]
        %v5307 = vld [vmem:[%s5245 + $0x1e8] sm:$0xff]
        %v5308 = vld [vmem:[%s5245 + $0x1f0] sm:$0xff]
        %v5309 = vld [vmem:[%s5245 + $0x1f8] sm:$0xff]
        %v5310 = vld [vmem:[%s5245 + $0x200] sm:$0xff]
        %v5311 = vld [vmem:[%s5245 + $0x208] sm:$0xff]
        %v5312 = vld [vmem:[%s5245 + $0x210] sm:$0xff]
        %v5313 = vld [vmem:[%s5245 + $0x218] sm:$0xff]
        %v5314 = vld [vmem:[%s5245 + $0x220] sm:$0xff]
        %v5315 = vld [vmem:[%s5245 + $0x228] sm:$0xff]
        %v5316 = vld [vmem:[%s5245 + $0x230] sm:$0xff]
        %v5317 = vld [vmem:[%s5245 + $0x238] sm:$0xff]
        %v5318 = vld [vmem:[%s5245 + $0x240] sm:$0xff]
        %v5319 = vld [vmem:[%s5245 + $0x248] sm:$0xff]
        %v5320 = vld [vmem:[%s5245 + $0x250] sm:$0xff]
        %v5321 = vld [vmem:[%s5245 + $0x258] sm:$0xff]
        %v5322 = vld [vmem:[%s5245 + $0x260] sm:$0xff]
        %v5323 = vld [vmem:[%s5245 + $0x268] sm:$0xff]
        %v5324 = vld [vmem:[%s5245 + $0x270] sm:$0xff]
        %v5325 = vld [vmem:[%s5245 + $0x278] sm:$0xff]
        %v5326 = vld [vmem:[%s5245 + $0x280] sm:$0xff]
        %v5327 = vld [vmem:[%s5245 + $0x288] sm:$0xff]
        %v5328 = vld [vmem:[%s5245 + $0x290] sm:$0xff]
        %v5329 = vld [vmem:[%s5245 + $0x298] sm:$0xff]
        %v5330 = vld [vmem:[%s5245 + $0x2a0] sm:$0xff]
        %v5331 = vld [vmem:[%s5245 + $0x2a8] sm:$0xff]
        %v5332 = vld [vmem:[%s5245 + $0x2b0] sm:$0xff]
        %v5333 = vld [vmem:[%s5245 + $0x2b8] sm:$0xff]
        %v5334 = vld [vmem:[%s5245 + $0x2c0] sm:$0xff]
        %v5335 = vld [vmem:[%s5245 + $0x2c8] sm:$0xff]
        %v5336 = vld [vmem:[%s5245 + $0x2d0] sm:$0xff]
        %v5337 = vld [vmem:[%s5245 + $0x2d8] sm:$0xff]
        %v5338 = vld [vmem:[%s5245 + $0x2e0] sm:$0xff]
        %v5339 = vld [vmem:[%s5245 + $0x2e8] sm:$0xff]
        %v5340 = vld [vmem:[%s5245 + $0x2f0] sm:$0xff]
        %v5341 = vld [vmem:[%s5245 + $0x2f8] sm:$0xff]
        %v5342 = vld [vmem:[%s5245 + $0x300] sm:$0xff]
        %v5343 = vld [vmem:[%s5245 + $0x308] sm:$0xff]
        %v5344 = vld [vmem:[%s5245 + $0x310] sm:$0xff]
        %v5345 = vld [vmem:[%s5245 + $0x318] sm:$0xff]
        %v5346 = vld [vmem:[%s5245 + $0x320] sm:$0xff]
        %v5347 = vld [vmem:[%s5245 + $0x328] sm:$0xff]
        %v5348 = vld [vmem:[%s5245 + $0x330] sm:$0xff]
        %v5349 = vld [vmem:[%s5245 + $0x338] sm:$0xff]
        %v5350 = vld [vmem:[%s5245 + $0x340] sm:$0xff]
        %v5351 = vld [vmem:[%s5245 + $0x348] sm:$0xff]
        %v5352 = vld [vmem:[%s5245 + $0x350] sm:$0xff]
        %v5353 = vld [vmem:[%s5245 + $0x358] sm:$0xff]
        %v5354 = vld [vmem:[%s5245 + $0x360] sm:$0xff]
        %v5355 = vld [vmem:[%s5245 + $0x368] sm:$0xff]
        %v5356 = vld [vmem:[%s5245 + $0x370] sm:$0xff]
        %v5357 = vld [vmem:[%s5245 + $0x378] sm:$0xff]
        %v5358 = vld [vmem:[%s5245 + $0x380] sm:$0xff]
        %v5359 = vld [vmem:[%s5245 + $0x388] sm:$0xff]
        %v5360 = vld [vmem:[%s5245 + $0x390] sm:$0xff]
        %v5361 = vld [vmem:[%s5245 + $0x398] sm:$0xff]
        %v5362 = vld [vmem:[%s5245 + $0x3a0] sm:$0xff]
        %v5363 = vld [vmem:[%s5245 + $0x3a8] sm:$0xff]
        %v5364 = vld [vmem:[%s5245 + $0x3b0] sm:$0xff]
        %v5365 = vld [vmem:[%s5245 + $0x3b8] sm:$0xff]
        %v5366 = vld [vmem:[%s5245 + $0x3c0] sm:$0xff]
        %v5367 = vld [vmem:[%s5245 + $0x3c8] sm:$0xff]
        %v5368 = vld [vmem:[%s5245 + $0x3d0] sm:$0xff]
        %v5369 = vld [vmem:[%s5245 + $0x3d8] sm:$0xff]
        %v5370 = vld [vmem:[%s5245 + $0x3e0] sm:$0xff]
        %v5371 = vld [vmem:[%s5245 + $0x3e8] sm:$0xff]
        %v5372 = vld [vmem:[%s5245 + $0x3f0] sm:$0xff]
        %v5373 = vld [vmem:[%s5245 + $0x3f8] sm:$0xff]
        %v5502 = vunpack.c.l.b16 %v5246
        %v5503 = vunpack.c.h.b16 %v5246
        %v5504 = vunpack.c.l.b16 %v5247
        %v5505 = vunpack.c.h.b16 %v5247
        %v5506 = vunpack.c.l.b16 %v5248
        %v5507 = vunpack.c.h.b16 %v5248
        %v5508 = vunpack.c.l.b16 %v5249
        %v5509 = vunpack.c.h.b16 %v5249
        %v5510 = vunpack.c.l.b16 %v5250
        %v5511 = vunpack.c.h.b16 %v5250
        %v5512 = vunpack.c.l.b16 %v5251
        %v5513 = vunpack.c.h.b16 %v5251
        %v5514 = vunpack.c.l.b16 %v5252
        %v5515 = vunpack.c.h.b16 %v5252
        %v5516 = vunpack.c.l.b16 %v5253
        %v5517 = vunpack.c.h.b16 %v5253
        %v5518 = vunpack.c.l.b16 %v5254
        %v5519 = vunpack.c.h.b16 %v5254
        %v5520 = vunpack.c.l.b16 %v5255
        %v5521 = vunpack.c.h.b16 %v5255
        %v5522 = vunpack.c.l.b16 %v5256
        %v5523 = vunpack.c.h.b16 %v5256
        %v5524 = vunpack.c.l.b16 %v5257
        %v5525 = vunpack.c.h.b16 %v5257
        %v5526 = vunpack.c.l.b16 %v5258
        %v5527 = vunpack.c.h.b16 %v5258
        %v5528 = vunpack.c.l.b16 %v5259
        %v5529 = vunpack.c.h.b16 %v5259
        %v5530 = vunpack.c.l.b16 %v5260
        %v5531 = vunpack.c.h.b16 %v5260
        %v5532 = vunpack.c.l.b16 %v5261
        %v5533 = vunpack.c.h.b16 %v5261
        %v5534 = vunpack.c.l.b16 %v5262
        %v5535 = vunpack.c.h.b16 %v5262
        %v5536 = vunpack.c.l.b16 %v5263
        %v5537 = vunpack.c.h.b16 %v5263
        %v5538 = vunpack.c.l.b16 %v5264
        %v5539 = vunpack.c.h.b16 %v5264
        %v5540 = vunpack.c.l.b16 %v5265
        %v5541 = vunpack.c.h.b16 %v5265
        %v5542 = vunpack.c.l.b16 %v5266
        %v5543 = vunpack.c.h.b16 %v5266
        %v5544 = vunpack.c.l.b16 %v5267
        %v5545 = vunpack.c.h.b16 %v5267
        %v5546 = vunpack.c.l.b16 %v5268
        %v5547 = vunpack.c.h.b16 %v5268
        %v5548 = vunpack.c.l.b16 %v5269
        %v5549 = vunpack.c.h.b16 %v5269
        %v5550 = vunpack.c.l.b16 %v5270
        %v5551 = vunpack.c.h.b16 %v5270
        %v5552 = vunpack.c.l.b16 %v5271
        %v5553 = vunpack.c.h.b16 %v5271
        %v5554 = vunpack.c.l.b16 %v5272
        %v5555 = vunpack.c.h.b16 %v5272
        %v5556 = vunpack.c.l.b16 %v5273
        %v5557 = vunpack.c.h.b16 %v5273
        %v5558 = vunpack.c.l.b16 %v5274
        %v5559 = vunpack.c.h.b16 %v5274
        %v5560 = vunpack.c.l.b16 %v5275
        %v5561 = vunpack.c.h.b16 %v5275
        %v5562 = vunpack.c.l.b16 %v5276
        %v5563 = vunpack.c.h.b16 %v5276
        %v5564 = vunpack.c.l.b16 %v5277
        %v5565 = vunpack.c.h.b16 %v5277
        %v5566 = vunpack.c.l.b16 %v5278
        %v5567 = vunpack.c.h.b16 %v5278
        %v5568 = vunpack.c.l.b16 %v5279
        %v5569 = vunpack.c.h.b16 %v5279
        %v5570 = vunpack.c.l.b16 %v5280
        %v5571 = vunpack.c.h.b16 %v5280
        %v5572 = vunpack.c.l.b16 %v5281
        %v5573 = vunpack.c.h.b16 %v5281
        %v5574 = vunpack.c.l.b16 %v5282
        %v5575 = vunpack.c.h.b16 %v5282
        %v5576 = vunpack.c.l.b16 %v5283
        %v5577 = vunpack.c.h.b16 %v5283
        %v5578 = vunpack.c.l.b16 %v5284
        %v5579 = vunpack.c.h.b16 %v5284
        %v5580 = vunpack.c.l.b16 %v5285
        %v5581 = vunpack.c.h.b16 %v5285
        %v5582 = vunpack.c.l.b16 %v5286
        %v5583 = vunpack.c.h.b16 %v5286
        %v5584 = vunpack.c.l.b16 %v5287
        %v5585 = vunpack.c.h.b16 %v5287
        %v5586 = vunpack.c.l.b16 %v5288
        %v5587 = vunpack.c.h.b16 %v5288
        %v5588 = vunpack.c.l.b16 %v5289
        %v5589 = vunpack.c.h.b16 %v5289
        %v5590 = vunpack.c.l.b16 %v5290
        %v5591 = vunpack.c.h.b16 %v5290
        %v5592 = vunpack.c.l.b16 %v5291
        %v5593 = vunpack.c.h.b16 %v5291
        %v5594 = vunpack.c.l.b16 %v5292
        %v5595 = vunpack.c.h.b16 %v5292
        %v5596 = vunpack.c.l.b16 %v5293
        %v5597 = vunpack.c.h.b16 %v5293
        %v5598 = vunpack.c.l.b16 %v5294
        %v5599 = vunpack.c.h.b16 %v5294
        %v5600 = vunpack.c.l.b16 %v5295
        %v5601 = vunpack.c.h.b16 %v5295
        %v5602 = vunpack.c.l.b16 %v5296
        %v5603 = vunpack.c.h.b16 %v5296
        %v5604 = vunpack.c.l.b16 %v5297
        %v5605 = vunpack.c.h.b16 %v5297
        %v5606 = vunpack.c.l.b16 %v5298
        %v5607 = vunpack.c.h.b16 %v5298
        %v5608 = vunpack.c.l.b16 %v5299
        %v5609 = vunpack.c.h.b16 %v5299
        %v5610 = vunpack.c.l.b16 %v5300
        %v5611 = vunpack.c.h.b16 %v5300
        %v5612 = vunpack.c.l.b16 %v5301
        %v5613 = vunpack.c.h.b16 %v5301
        %v5614 = vunpack.c.l.b16 %v5302
        %v5615 = vunpack.c.h.b16 %v5302
        %v5616 = vunpack.c.l.b16 %v5303
        %v5617 = vunpack.c.h.b16 %v5303
        %v5618 = vunpack.c.l.b16 %v5304
        %v5619 = vunpack.c.h.b16 %v5304
        %v5620 = vunpack.c.l.b16 %v5305
        %v5621 = vunpack.c.h.b16 %v5305
        %v5622 = vunpack.c.l.b16 %v5306
        %v5623 = vunpack.c.h.b16 %v5306
        %v5624 = vunpack.c.l.b16 %v5307
        %v5625 = vunpack.c.h.b16 %v5307
        %v5626 = vunpack.c.l.b16 %v5308
        %v5627 = vunpack.c.h.b16 %v5308
        %v5628 = vunpack.c.l.b16 %v5309
        %v5629 = vunpack.c.h.b16 %v5309
        %v5630 = vunpack.c.l.b16 %v5310
        %v5631 = vunpack.c.h.b16 %v5310
        %v5632 = vunpack.c.l.b16 %v5311
        %v5633 = vunpack.c.h.b16 %v5311
        %v5634 = vunpack.c.l.b16 %v5312
        %v5635 = vunpack.c.h.b16 %v5312
        %v5636 = vunpack.c.l.b16 %v5313
        %v5637 = vunpack.c.h.b16 %v5313
        %v5638 = vunpack.c.l.b16 %v5314
        %v5639 = vunpack.c.h.b16 %v5314
        %v5640 = vunpack.c.l.b16 %v5315
        %v5641 = vunpack.c.h.b16 %v5315
        %v5642 = vunpack.c.l.b16 %v5316
        %v5643 = vunpack.c.h.b16 %v5316
        %v5644 = vunpack.c.l.b16 %v5317
        %v5645 = vunpack.c.h.b16 %v5317
        %v5646 = vunpack.c.l.b16 %v5318
        %v5647 = vunpack.c.h.b16 %v5318
        %v5648 = vunpack.c.l.b16 %v5319
        %v5649 = vunpack.c.h.b16 %v5319
        %v5650 = vunpack.c.l.b16 %v5320
        %v5651 = vunpack.c.h.b16 %v5320
        %v5652 = vunpack.c.l.b16 %v5321
        %v5653 = vunpack.c.h.b16 %v5321
        %v5654 = vunpack.c.l.b16 %v5322
        %v5655 = vunpack.c.h.b16 %v5322
        %v5656 = vunpack.c.l.b16 %v5323
        %v5657 = vunpack.c.h.b16 %v5323
        %v5658 = vunpack.c.l.b16 %v5324
        %v5659 = vunpack.c.h.b16 %v5324
        %v5660 = vunpack.c.l.b16 %v5325
        %v5661 = vunpack.c.h.b16 %v5325
        %v5662 = vunpack.c.l.b16 %v5326
        %v5663 = vunpack.c.h.b16 %v5326
        %v5664 = vunpack.c.l.b16 %v5327
        %v5665 = vunpack.c.h.b16 %v5327
        %v5666 = vunpack.c.l.b16 %v5328
        %v5667 = vunpack.c.h.b16 %v5328
        %v5668 = vunpack.c.l.b16 %v5329
        %v5669 = vunpack.c.h.b16 %v5329
        %v5670 = vunpack.c.l.b16 %v5330
        %v5671 = vunpack.c.h.b16 %v5330
        %v5672 = vunpack.c.l.b16 %v5331
        %v5673 = vunpack.c.h.b16 %v5331
        %v5674 = vunpack.c.l.b16 %v5332
        %v5675 = vunpack.c.h.b16 %v5332
        %v5676 = vunpack.c.l.b16 %v5333
        %v5677 = vunpack.c.h.b16 %v5333
        %v5678 = vunpack.c.l.b16 %v5334
        %v5679 = vunpack.c.h.b16 %v5334
        %v5680 = vunpack.c.l.b16 %v5335
        %v5681 = vunpack.c.h.b16 %v5335
        %v5682 = vunpack.c.l.b16 %v5336
        %v5683 = vunpack.c.h.b16 %v5336
        %v5684 = vunpack.c.l.b16 %v5337
        %v5685 = vunpack.c.h.b16 %v5337
        %v5686 = vunpack.c.l.b16 %v5338
        %v5687 = vunpack.c.h.b16 %v5338
        %v5688 = vunpack.c.l.b16 %v5339
        %v5689 = vunpack.c.h.b16 %v5339
        %v5690 = vunpack.c.l.b16 %v5340
        %v5691 = vunpack.c.h.b16 %v5340
        %v5692 = vunpack.c.l.b16 %v5341
        %v5693 = vunpack.c.h.b16 %v5341
        %v5694 = vunpack.c.l.b16 %v5342
        %v5695 = vunpack.c.h.b16 %v5342
        %v5696 = vunpack.c.l.b16 %v5343
        %v5697 = vunpack.c.h.b16 %v5343
        %v5698 = vunpack.c.l.b16 %v5344
        %v5699 = vunpack.c.h.b16 %v5344
        %v5700 = vunpack.c.l.b16 %v5345
        %v5701 = vunpack.c.h.b16 %v5345
        %v5702 = vunpack.c.l.b16 %v5346
        %v5703 = vunpack.c.h.b16 %v5346
        %v5704 = vunpack.c.l.b16 %v5347
        %v5705 = vunpack.c.h.b16 %v5347
        %v5706 = vunpack.c.l.b16 %v5348
        %v5707 = vunpack.c.h.b16 %v5348
        %v5708 = vunpack.c.l.b16 %v5349
        %v5709 = vunpack.c.h.b16 %v5349
        %v5710 = vunpack.c.l.b16 %v5350
        %v5711 = vunpack.c.h.b16 %v5350
        %v5712 = vunpack.c.l.b16 %v5351
        %v5713 = vunpack.c.h.b16 %v5351
        %v5714 = vunpack.c.l.b16 %v5352
        %v5715 = vunpack.c.h.b16 %v5352
        %v5716 = vunpack.c.l.b16 %v5353
        %v5717 = vunpack.c.h.b16 %v5353
        %v5718 = vunpack.c.l.b16 %v5354
        %v5719 = vunpack.c.h.b16 %v5354
        %v5720 = vunpack.c.l.b16 %v5355
        %v5721 = vunpack.c.h.b16 %v5355
        %v5722 = vunpack.c.l.b16 %v5356
        %v5723 = vunpack.c.h.b16 %v5356
        %v5724 = vunpack.c.l.b16 %v5357
        %v5725 = vunpack.c.h.b16 %v5357
        %v5726 = vunpack.c.l.b16 %v5358
        %v5727 = vunpack.c.h.b16 %v5358
        %v5728 = vunpack.c.l.b16 %v5359
        %v5729 = vunpack.c.h.b16 %v5359
        %v5730 = vunpack.c.l.b16 %v5360
        %v5731 = vunpack.c.h.b16 %v5360
        %v5732 = vunpack.c.l.b16 %v5361
        %v5733 = vunpack.c.h.b16 %v5361
        %v5734 = vunpack.c.l.b16 %v5362
        %v5735 = vunpack.c.h.b16 %v5362
        %v5736 = vunpack.c.l.b16 %v5363
        %v5737 = vunpack.c.h.b16 %v5363
        %v5738 = vunpack.c.l.b16 %v5364
        %v5739 = vunpack.c.h.b16 %v5364
        %v5740 = vunpack.c.l.b16 %v5365
        %v5741 = vunpack.c.h.b16 %v5365
        %v5742 = vunpack.c.l.b16 %v5366
        %v5743 = vunpack.c.h.b16 %v5366
        %v5744 = vunpack.c.l.b16 %v5367
        %v5745 = vunpack.c.h.b16 %v5367
        %v5746 = vunpack.c.l.b16 %v5368
        %v5747 = vunpack.c.h.b16 %v5368
        %v5748 = vunpack.c.l.b16 %v5369
        %v5749 = vunpack.c.h.b16 %v5369
        %v5750 = vunpack.c.l.b16 %v5370
        %v5751 = vunpack.c.h.b16 %v5370
        %v5752 = vunpack.c.l.b16 %v5371
        %v5753 = vunpack.c.h.b16 %v5371
        %v5754 = vunpack.c.l.b16 %v5372
        %v5755 = vunpack.c.h.b16 %v5372
        %v5756 = vunpack.c.l.b16 %v5373
        %v5757 = vunpack.c.h.b16 %v5373
        %v5758 = vpack.c.b16 %v5506, %v5502
        %v5759 = vpack.c.b16 %v5507, %v5503
        %v5760 = vpack.c.b16 %v5508, %v5504
        %v5761 = vpack.c.b16 %v5509, %v5505
        %v5762 = vpack.c.b16 %v5514, %v5510
        %v5763 = vpack.c.b16 %v5515, %v5511
        %v5764 = vpack.c.b16 %v5516, %v5512
        %v5765 = vpack.c.b16 %v5517, %v5513
        %v5766 = vpack.c.b16 %v5522, %v5518
        %v5767 = vpack.c.b16 %v5523, %v5519
        %v5768 = vpack.c.b16 %v5524, %v5520
        %v5769 = vpack.c.b16 %v5525, %v5521
        %v5770 = vpack.c.b16 %v5530, %v5526
        %v5771 = vpack.c.b16 %v5531, %v5527
        %v5772 = vpack.c.b16 %v5532, %v5528
        %v5773 = vpack.c.b16 %v5533, %v5529
        %v5774 = vpack.c.b16 %v5538, %v5534
        %v5775 = vpack.c.b16 %v5539, %v5535
        %v5776 = vpack.c.b16 %v5540, %v5536
        %v5777 = vpack.c.b16 %v5541, %v5537
        %v5778 = vpack.c.b16 %v5546, %v5542
        %v5779 = vpack.c.b16 %v5547, %v5543
        %v5780 = vpack.c.b16 %v5548, %v5544
        %v5781 = vpack.c.b16 %v5549, %v5545
        %v5782 = vpack.c.b16 %v5554, %v5550
        %v5783 = vpack.c.b16 %v5555, %v5551
        %v5784 = vpack.c.b16 %v5556, %v5552
        %v5785 = vpack.c.b16 %v5557, %v5553
        %v5786 = vpack.c.b16 %v5562, %v5558
        %v5787 = vpack.c.b16 %v5563, %v5559
        %v5788 = vpack.c.b16 %v5564, %v5560
        %v5789 = vpack.c.b16 %v5565, %v5561
        %v5790 = vpack.c.b16 %v5570, %v5566
        %v5791 = vpack.c.b16 %v5571, %v5567
        %v5792 = vpack.c.b16 %v5572, %v5568
        %v5793 = vpack.c.b16 %v5573, %v5569
        %v5794 = vpack.c.b16 %v5578, %v5574
        %v5795 = vpack.c.b16 %v5579, %v5575
        %v5796 = vpack.c.b16 %v5580, %v5576
        %v5797 = vpack.c.b16 %v5581, %v5577
        %v5798 = vpack.c.b16 %v5586, %v5582
        %v5799 = vpack.c.b16 %v5587, %v5583
        %v5800 = vpack.c.b16 %v5588, %v5584
        %v5801 = vpack.c.b16 %v5589, %v5585
        %v5802 = vpack.c.b16 %v5594, %v5590
        %v5803 = vpack.c.b16 %v5595, %v5591
        %v5804 = vpack.c.b16 %v5596, %v5592
        %v5805 = vpack.c.b16 %v5597, %v5593
        %v5806 = vpack.c.b16 %v5602, %v5598
        %v5807 = vpack.c.b16 %v5603, %v5599
        %v5808 = vpack.c.b16 %v5604, %v5600
        %v5809 = vpack.c.b16 %v5605, %v5601
        %v5810 = vpack.c.b16 %v5610, %v5606
        %v5811 = vpack.c.b16 %v5611, %v5607
        %v5812 = vpack.c.b16 %v5612, %v5608
        %v5813 = vpack.c.b16 %v5613, %v5609
        %v5814 = vpack.c.b16 %v5618, %v5614
        %v5815 = vpack.c.b16 %v5619, %v5615
        %v5816 = vpack.c.b16 %v5620, %v5616
        %v5817 = vpack.c.b16 %v5621, %v5617
        %v5818 = vpack.c.b16 %v5626, %v5622
        %v5819 = vpack.c.b16 %v5627, %v5623
        %v5820 = vpack.c.b16 %v5628, %v5624
        %v5821 = vpack.c.b16 %v5629, %v5625
        %v5822 = vpack.c.b16 %v5634, %v5630
        %v5823 = vpack.c.b16 %v5635, %v5631
        %v5824 = vpack.c.b16 %v5636, %v5632
        %v5825 = vpack.c.b16 %v5637, %v5633
        %v5826 = vpack.c.b16 %v5642, %v5638
        %v5827 = vpack.c.b16 %v5643, %v5639
        %v5828 = vpack.c.b16 %v5644, %v5640
        %v5829 = vpack.c.b16 %v5645, %v5641
        %v5830 = vpack.c.b16 %v5650, %v5646
        %v5831 = vpack.c.b16 %v5651, %v5647
        %v5832 = vpack.c.b16 %v5652, %v5648
        %v5833 = vpack.c.b16 %v5653, %v5649
        %v5834 = vpack.c.b16 %v5658, %v5654
        %v5835 = vpack.c.b16 %v5659, %v5655
        %v5836 = vpack.c.b16 %v5660, %v5656
        %v5837 = vpack.c.b16 %v5661, %v5657
        %v5838 = vpack.c.b16 %v5666, %v5662
        %v5839 = vpack.c.b16 %v5667, %v5663
        %v5840 = vpack.c.b16 %v5668, %v5664
        %v5841 = vpack.c.b16 %v5669, %v5665
        %v5842 = vpack.c.b16 %v5674, %v5670
        %v5843 = vpack.c.b16 %v5675, %v5671
        %v5844 = vpack.c.b16 %v5676, %v5672
        %v5845 = vpack.c.b16 %v5677, %v5673
        %v5846 = vpack.c.b16 %v5682, %v5678
        %v5847 = vpack.c.b16 %v5683, %v5679
        %v5848 = vpack.c.b16 %v5684, %v5680
        %v5849 = vpack.c.b16 %v5685, %v5681
        %v5850 = vpack.c.b16 %v5690, %v5686
        %v5851 = vpack.c.b16 %v5691, %v5687
        %v5852 = vpack.c.b16 %v5692, %v5688
        %v5853 = vpack.c.b16 %v5693, %v5689
        %v5854 = vpack.c.b16 %v5698, %v5694
        %v5855 = vpack.c.b16 %v5699, %v5695
        %v5856 = vpack.c.b16 %v5700, %v5696
        %v5857 = vpack.c.b16 %v5701, %v5697
        %v5858 = vpack.c.b16 %v5706, %v5702
        %v5859 = vpack.c.b16 %v5707, %v5703
        %v5860 = vpack.c.b16 %v5708, %v5704
        %v5861 = vpack.c.b16 %v5709, %v5705
        %v5862 = vpack.c.b16 %v5714, %v5710
        %v5863 = vpack.c.b16 %v5715, %v5711
        %v5864 = vpack.c.b16 %v5716, %v5712
        %v5865 = vpack.c.b16 %v5717, %v5713
        %v5866 = vpack.c.b16 %v5722, %v5718
        %v5867 = vpack.c.b16 %v5723, %v5719
        %v5868 = vpack.c.b16 %v5724, %v5720
        %v5869 = vpack.c.b16 %v5725, %v5721
        %v5870 = vpack.c.b16 %v5730, %v5726
        %v5871 = vpack.c.b16 %v5731, %v5727
        %v5872 = vpack.c.b16 %v5732, %v5728
        %v5873 = vpack.c.b16 %v5733, %v5729
        %v5874 = vpack.c.b16 %v5738, %v5734
        %v5875 = vpack.c.b16 %v5739, %v5735
        %v5876 = vpack.c.b16 %v5740, %v5736
        %v5877 = vpack.c.b16 %v5741, %v5737
        %v5878 = vpack.c.b16 %v5746, %v5742
        %v5879 = vpack.c.b16 %v5747, %v5743
        %v5880 = vpack.c.b16 %v5748, %v5744
        %v5881 = vpack.c.b16 %v5749, %v5745
        %v5882 = vpack.c.b16 %v5754, %v5750
        %v5883 = vpack.c.b16 %v5755, %v5751
        %v5884 = vpack.c.b16 %v5756, %v5752
        %v5885 = vpack.c.b16 %v5757, %v5753
        %6014 = vmatprep.subr.bf16.mxu0 %v5759
        %6015 = vmatpush1.bf16.msra.mxu0 %v5758
        %6016 = vmatprep.subr.bf16.mxu0 %v5763
        %6017 = vmatpush1.bf16.msra.mxu0 %v5762
        %6018 = vmatprep.subr.bf16.mxu0 %v5767
        %6019 = vmatpush1.bf16.msra.mxu0 %v5766
        %6020 = vmatprep.subr.bf16.mxu0 %v5771
        %6021 = vmatpush1.bf16.msra.mxu0 %v5770
        %6022 = vmatprep.subr.bf16.mxu0 %v5775
        %6023 = vmatpush1.bf16.msra.mxu0 %v5774
        %6024 = vmatprep.subr.bf16.mxu0 %v5779
        %6025 = vmatpush1.bf16.msra.mxu0 %v5778
        %6026 = vmatprep.subr.bf16.mxu0 %v5783
        %6027 = vmatpush1.bf16.msra.mxu0 %v5782
        %6028 = vmatprep.subr.bf16.mxu0 %v5787
        %6029 = vmatpush1.bf16.msra.mxu0 %v5786
        %6030 = vmatprep.subr.bf16.mxu0 %v5791
        %6031 = vmatpush1.bf16.msra.mxu0 %v5790
        %6032 = vmatprep.subr.bf16.mxu0 %v5795
        %6033 = vmatpush1.bf16.msra.mxu0 %v5794
        %6034 = vmatprep.subr.bf16.mxu0 %v5799
        %6035 = vmatpush1.bf16.msra.mxu0 %v5798
        %6036 = vmatprep.subr.bf16.mxu0 %v5803
        %6037 = vmatpush1.bf16.msra.mxu0 %v5802
        %6038 = vmatprep.subr.bf16.mxu0 %v5807
        %6039 = vmatpush1.bf16.msra.mxu0 %v5806
        %6040 = vmatprep.subr.bf16.mxu0 %v5811
        %6041 = vmatpush1.bf16.msra.mxu0 %v5810
        %6042 = vmatprep.subr.bf16.mxu0 %v5815
        %6043 = vmatpush1.bf16.msra.mxu0 %v5814
        %6044 = vmatprep.subr.bf16.mxu0 %v5819
        %6045 = vmatpush1.bf16.msra.mxu0 %v5818
        %6046 = vmatprep.mubr.bf16.mxu0 %v3361
        %6047 = vmatmul.mubr.bf16.gmra.mrb[0].mxu0 %v3360
        %v6048 = vpop.f32.mrb[0].mxu0
        %v6049 = vadd.f32 0.0, %v6048
        %v6050 = vpop.f32.mrb[0].mxu0
        %v6051 = vadd.f32 0.0, %v6050
        %v6052 = vpop.f32.mrb[0].mxu0
        %v6053 = vadd.f32 0.0, %v6052
        %v6054 = vpop.f32.mrb[0].mxu0
        %v6055 = vadd.f32 0.0, %v6054
        %6056 = vdwg.mxu0
        %6057 = vmatprep.subr.bf16.mxu0 %v5823
        %6058 = vmatpush1.bf16.msra.mxu0 %v5822
        %6059 = vmatprep.subr.bf16.mxu0 %v5827
        %6060 = vmatpush1.bf16.msra.mxu0 %v5826
        %6061 = vmatprep.subr.bf16.mxu0 %v5831
        %6062 = vmatpush1.bf16.msra.mxu0 %v5830
        %6063 = vmatprep.subr.bf16.mxu0 %v5835
        %6064 = vmatpush1.bf16.msra.mxu0 %v5834
        %6065 = vmatprep.subr.bf16.mxu0 %v5839
        %6066 = vmatpush1.bf16.msra.mxu0 %v5838
        %6067 = vmatprep.subr.bf16.mxu0 %v5843
        %6068 = vmatpush1.bf16.msra.mxu0 %v5842
        %6069 = vmatprep.subr.bf16.mxu0 %v5847
        %6070 = vmatpush1.bf16.msra.mxu0 %v5846
        %6071 = vmatprep.subr.bf16.mxu0 %v5851
        %6072 = vmatpush1.bf16.msra.mxu0 %v5850
        %6073 = vmatprep.subr.bf16.mxu0 %v5855
        %6074 = vmatpush1.bf16.msra.mxu0 %v5854
        %6075 = vmatprep.subr.bf16.mxu0 %v5859
        %6076 = vmatpush1.bf16.msra.mxu0 %v5858
        %6077 = vmatprep.subr.bf16.mxu0 %v5863
        %6078 = vmatpush1.bf16.msra.mxu0 %v5862
        %6079 = vmatprep.subr.bf16.mxu0 %v5867
        %6080 = vmatpush1.bf16.msra.mxu0 %v5866
        %6081 = vmatprep.subr.bf16.mxu0 %v5871
        %6082 = vmatpush1.bf16.msra.mxu0 %v5870
        %6083 = vmatprep.subr.bf16.mxu0 %v5875
        %6084 = vmatpush1.bf16.msra.mxu0 %v5874
        %6085 = vmatprep.subr.bf16.mxu0 %v5879
        %6086 = vmatpush1.bf16.msra.mxu0 %v5878
        %6087 = vmatprep.subr.bf16.mxu0 %v5883
        %6088 = vmatpush1.bf16.msra.mxu0 %v5882
        %6089 = vmatprep.mubr.bf16.mxu0 %v3363
        %6090 = vmatmul.mubr.bf16.gmra.mrb[0].mxu0 %v3362
        %v6091 = vpop.f32.mrb[0].mxu0
        %v6092 = vadd.f32 %v6049, %v6091
        %v6093 = vpop.f32.mrb[0].mxu0
        %v6094 = vadd.f32 %v6051, %v6093
        %v6095 = vpop.f32.mrb[0].mxu0
        %v6096 = vadd.f32 %v6053, %v6095
        %v6097 = vpop.f32.mrb[0].mxu0
        %v6098 = vadd.f32 %v6055, %v6097
        %6099 = vdwg.mxu0
        %6100 = vmatprep.subr.bf16.mxu0 %v5761
        %6101 = vmatpush1.bf16.msra.mxu0 %v5760
        %6102 = vmatprep.subr.bf16.mxu0 %v5765
        %6103 = vmatpush1.bf16.msra.mxu0 %v5764
        %6104 = vmatprep.subr.bf16.mxu0 %v5769
        %6105 = vmatpush1.bf16.msra.mxu0 %v5768
        %6106 = vmatprep.subr.bf16.mxu0 %v5773
        %6107 = vmatpush1.bf16.msra.mxu0 %v5772
        %6108 = vmatprep.subr.bf16.mxu0 %v5777
        %6109 = vmatpush1.bf16.msra.mxu0 %v5776
        %6110 = vmatprep.subr.bf16.mxu0 %v5781
        %6111 = vmatpush1.bf16.msra.mxu0 %v5780
        %6112 = vmatprep.subr.bf16.mxu0 %v5785
        %6113 = vmatpush1.bf16.msra.mxu0 %v5784
        %6114 = vmatprep.subr.bf16.mxu0 %v5789
        %6115 = vmatpush1.bf16.msra.mxu0 %v5788
        %6116 = vmatprep.subr.bf16.mxu0 %v5793
        %6117 = vmatpush1.bf16.msra.mxu0 %v5792
        %6118 = vmatprep.subr.bf16.mxu0 %v5797
        %6119 = vmatpush1.bf16.msra.mxu0 %v5796
        %6120 = vmatprep.subr.bf16.mxu0 %v5801
        %6121 = vmatpush1.bf16.msra.mxu0 %v5800
        %6122 = vmatprep.subr.bf16.mxu0 %v5805
        %6123 = vmatpush1.bf16.msra.mxu0 %v5804
        %6124 = vmatprep.subr.bf16.mxu0 %v5809
        %6125 = vmatpush1.bf16.msra.mxu0 %v5808
        %6126 = vmatprep.subr.bf16.mxu0 %v5813
        %6127 = vmatpush1.bf16.msra.mxu0 %v5812
        %6128 = vmatprep.subr.bf16.mxu0 %v5817
        %6129 = vmatpush1.bf16.msra.mxu0 %v5816
        %6130 = vmatprep.subr.bf16.mxu0 %v5821
        %6131 = vmatpush1.bf16.msra.mxu0 %v5820
        %6132 = vmatprep.mubr.bf16.mxu0 %v3361
        %6133 = vmatmul.mubr.bf16.gmra.mrb[0].mxu0 %v3360
        %v6134 = vpop.f32.mrb[0].mxu0
        %v6135 = vadd.f32 0.0, %v6134
        %v6136 = vpop.f32.mrb[0].mxu0
        %v6137 = vadd.f32 0.0, %v6136
        %v6138 = vpop.f32.mrb[0].mxu0
        %v6139 = vadd.f32 0.0, %v6138
        %v6140 = vpop.f32.mrb[0].mxu0
        %v6141 = vadd.f32 0.0, %v6140
        %6142 = vdwg.mxu0
        %6143 = vmatprep.subr.bf16.mxu0 %v5825
        %6144 = vmatpush1.bf16.msra.mxu0 %v5824
        %6145 = vmatprep.subr.bf16.mxu0 %v5829
        %6146 = vmatpush1.bf16.msra.mxu0 %v5828
        %6147 = vmatprep.subr.bf16.mxu0 %v5833
        %6148 = vmatpush1.bf16.msra.mxu0 %v5832
        %6149 = vmatprep.subr.bf16.mxu0 %v5837
        %6150 = vmatpush1.bf16.msra.mxu0 %v5836
        %6151 = vmatprep.subr.bf16.mxu0 %v5841
        %6152 = vmatpush1.bf16.msra.mxu0 %v5840
        %6153 = vmatprep.subr.bf16.mxu0 %v5845
        %6154 = vmatpush1.bf16.msra.mxu0 %v5844
        %6155 = vmatprep.subr.bf16.mxu0 %v5849
        %6156 = vmatpush1.bf16.msra.mxu0 %v5848
        %6157 = vmatprep.subr.bf16.mxu0 %v5853
        %6158 = vmatpush1.bf16.msra.mxu0 %v5852
        %6159 = vmatprep.subr.bf16.mxu0 %v5857
        %6160 = vmatpush1.bf16.msra.mxu0 %v5856
        %6161 = vmatprep.subr.bf16.mxu0 %v5861
        %6162 = vmatpush1.bf16.msra.mxu0 %v5860
        %6163 = vmatprep.subr.bf16.mxu0 %v5865
        %6164 = vmatpush1.bf16.msra.mxu0 %v5864
        %6165 = vmatprep.subr.bf16.mxu0 %v5869
        %6166 = vmatpush1.bf16.msra.mxu0 %v5868
        %6167 = vmatprep.subr.bf16.mxu0 %v5873
        %6168 = vmatpush1.bf16.msra.mxu0 %v5872
        %6169 = vmatprep.subr.bf16.mxu0 %v5877
        %6170 = vmatpush1.bf16.msra.mxu0 %v5876
        %6171 = vmatprep.subr.bf16.mxu0 %v5881
        %6172 = vmatpush1.bf16.msra.mxu0 %v5880
        %6173 = vmatprep.subr.bf16.mxu0 %v5885
        %6174 = vmatpush1.bf16.msra.mxu0 %v5884
        %6175 = vmatprep.mubr.bf16.mxu0 %v3363
        %6176 = vmatmul.mubr.bf16.gmra.mrb[0].mxu0 %v3362
        %v6177 = vpop.f32.mrb[0].mxu0
        %v6178 = vadd.f32 %v6135, %v6177
        %v6179 = vpop.f32.mrb[0].mxu0
        %v6180 = vadd.f32 %v6137, %v6179
        %v6181 = vpop.f32.mrb[0].mxu0
        %v6182 = vadd.f32 %v6139, %v6181
        %v6183 = vpop.f32.mrb[0].mxu0
        %v6184 = vadd.f32 %v6141, %v6183
        %6185 = vdwg.mxu0
        %v6186 = vadd.f32 %v5151, %v6092
        %v6187 = vadd.f32 %v5153, %v6094
        %v6188 = vadd.f32 %v5237, %v6178
        %v6189 = vadd.f32 %v5239, %v6180
        %v6190 = vadd.f32 %v5155, %v6096
        %v6191 = vadd.f32 %v5157, %v6098
        %v6192 = vadd.f32 %v5241, %v6182
        %v6193 = vadd.f32 %v5243, %v6184
        %v6194 = vld [vmem:[#allocation7] sm:$0xf]
        %v6196 = vlaneseq
        %v6197 = vshrl.u32 %v6196, 7
        %v6198 = vsub.s32 0, %v6197
        %v6199 = vrot.slane %v6194, %v6198
        %v6200 = vlaneseq
        %v6201 = vshrl.u32 %v6200, 7
        %v6202 = vsub.s32 1, %v6201
        %v6203 = vrot.slane %v6194, %v6202
        %v6204 = vlaneseq
        %v6205 = vshrl.u32 %v6204, 7
        %v6206 = vsub.s32 2, %v6205
        %v6207 = vrot.slane %v6194, %v6206
        %v6208 = vlaneseq
        %v6209 = vshrl.u32 %v6208, 7
        %v6210 = vsub.s32 3, %v6209
        %v6211 = vrot.slane %v6194, %v6210
        %v6216 = vadd.f32 %v6186, %v6199
        %v6217 = vadd.f32 %v6187, %v6203
        %v6218 = vadd.f32 %v6188, %v6207
        %v6219 = vadd.f32 %v6189, %v6211
        %v6220 = vadd.f32 %v6190, %v6199
        %v6221 = vadd.f32 %v6191, %v6203
        %v6222 = vadd.f32 %v6192, %v6207
        %v6223 = vadd.f32 %v6193, %v6211
        %6224 = vst [vmem:[%s286] sm:$0xff] %v6216
        %6225 = vst [vmem:[%s286 + $0x8] sm:$0xff] %v6217
        %6226 = vst [vmem:[%s286 + $0x10] sm:$0xff] %v6218
        %6227 = vst [vmem:[%s286 + $0x18] sm:$0xff] %v6219
        %6228 = vst [vmem:[%s286 + $0x20] sm:$0xff] %v6220
        %6229 = vst [vmem:[%s286 + $0x28] sm:$0xff] %v6221
        %6230 = vst [vmem:[%s286 + $0x30] sm:$0xff] %v6222
        %6231 = vst [vmem:[%s286 + $0x38] sm:$0xff] %v6223
        %s6232 = smul.u32 2, %s19
        %p6233 = scmp.lt.s32.totalorder %s6232, 3
        %s6234 = scalar_select %p6233, %s6232, 3
        %s6235 = smul.addr %s6234, 4
        %s6236 = smul.addr %s6235, 8
        %s6237 = scalar_lea.vmem %s5, %s6236
        // Predicated region
        $region57: #{basic_block_forward.1} parent=39 // pred_check
          %p6238 = pneg %p147
        $region58: #{basic_block_forward.1} parent=39 // pred_check_branch
          %6240 = sbr.rel (%p6238) target = $region60
        $region59: #{basic_block_forward.1} parent=39 // pred_region
          %s6241 = smul.u32 2, %s19
        $region60: #{basic_block_forward.1} parent=39 // pred_fallthru
          _
      $region40: #{basic_block_forward.1} parent=5 // pred_fallthru
        _
      %p6242 = scmp.le.s32.totalorder 2, %s14
      // Predicated region
      $region61: #{basic_block_forward.1} parent=5 // pred_check
        %p6243 = pneg %p6242
      $region62: #{basic_block_forward.1} parent=5 // pred_check_branch
        %6245 = sbr.rel (%p6243) target = $region64
      $region63: #{basic_block_forward.1} parent=5 // pred_region
        %s6246 = ssub.s32 %s14, 2
        // Predicated region
        $region65: #{basic_block_forward.1} parent=63 // pred_check
          %p6247 = pneg %p153
        $region66: #{basic_block_forward.1} parent=63 // pred_check_branch
          %6249 = sbr.rel (%p6247) target = $region68
        $region67: #{basic_block_forward.1} parent=63 // pred_region
          %s6250 = smul.u32 2, %s20
          %p6251 = scmp.lt.s32.totalorder %s6250, 3
          %s6252 = scalar_select %p6251, %s6250, 3
          %s6253 = smul.addr %s6252, 4
          %s6254 = smul.addr %s6253, 8
          %s6255 = scalar_lea.vmem %s5, %s6254
        $region68: #{basic_block_forward.1} parent=63 // pred_fallthru
          _
      $region64: #{basic_block_forward.1} parent=5 // pred_fallthru
        _
    $region6: #{basic_block_forward.1} parent=1 // loop_footer
      %s18 = sadd.s32 1, %s14
    $region7: #{basic_block_forward.1} parent=1 // loop_footer_branch
      %13 = sbr.rel target = $region3
    $region8: #{basic_block_forward.1} parent=1 // loop_exit
      _
    %6256 = vsyncpa [#allocation3], 1
    %s6257 = scalar_lea.sflag [#allocation3], 1
    %6258 = vsyncpa %s6257, 1
    %6259 = vsyncpa [#allocation5], 1
    %6260 = vsyncpa [#allocation8], 1

</llo_original>
